<compile_context>
chip_gen: v6e
topology: v6e:2x2x1
jax: 0.10.0
libtpu: 0.0.40
codegen_flags: <defaults>
</compile_context>

<pallas_src>
import math
import functools

import jax
import jax.numpy as jnp
import numpy as np
from jax.experimental import pallas as pl
from jax.experimental.pallas import tpu as pltpu

# bf16 MXU operands, f32 accumulation (full MXU rate on v5e/v6e/v7x, half the
# weight DMA bytes).  Elementwise math stays f32 everywhere.
MATMUL_DTYPE = jnp.bfloat16
LAYER_ARGS = 10   # refs per transformer layer passed to the fused kernel


# ---------------------------------------------------------------------------
# Fused whole-model Pallas kernel (one grid step = one batch element)
# ---------------------------------------------------------------------------

def _rmsnorm(x, w, eps):
    ms = jnp.mean(x * x, axis=-1, keepdims=True)
    return x * jax.lax.rsqrt(ms + eps) * w


def _fused_transformer_kernel(*refs, n_layers, n_heads, head_dim, eps, scale):
    # refs layout:
    #   x, to_latent_w, to_latent_b, cos, sin,
    #   [attn_norm_w, wqkv, bqkv, wo, ffn_norm_w, w1, w3, b3, w2, b2] * L,
    #   out
    x_ref, wlat_ref, blat_ref, cos_ref, sin_ref = refs[:5]
    o_ref = refs[-1]
    layer_refs = refs[5:-1]

    D = n_heads * head_dim
    half = head_dim // 2
    mdt = wlat_ref.dtype

    x = x_ref[0]                                     # (S, in_features) f32
    cos = cos_ref[...]                               # (S, head_dim//2) f32
    sin = sin_ref[...]

    # ---- input projection (to_latent) ----
    h = jnp.dot(x.astype(mdt), wlat_ref[...],
                preferred_element_type=jnp.float32) + blat_ref[...]

    for li in range(n_layers):
        (anw_ref, wqkv_ref, bqkv_ref, wo_ref,
         fnw_ref, w1_ref, w3_ref, b3_ref, w2_ref, b2_ref) = \
            layer_refs[li * LAYER_ARGS:(li + 1) * LAYER_ARGS]

        # ---------------- attention sub-block ----------------
        xn = _rmsnorm(h, anw_ref[...], eps)
        # fused QKV projection: one K=D, N=3D matmul
        qkv = jnp.dot(xn.astype(mdt), wqkv_ref[...],
                      preferred_element_type=jnp.float32) + bqkv_ref[...]
        outs = []
        for hh in range(n_heads):
            base = hh * head_dim
            # q/k columns were de-interleaved at weight-prep time: [even|odd]
            q = qkv[:, base:base + head_dim]
            k = qkv[:, D + base:D + base + head_dim]
            v = qkv[:, 2 * D + base:2 * D + base + head_dim]
            qe, qo = q[:, :half], q[:, half:]
            ke, ko = k[:, :half], k[:, half:]
            # rotated real/imag parts; dot over [re|im] == dot over interleaved
            qrot = jnp.concatenate([qe * cos - qo * sin, qe * sin + qo * cos], -1)
            krot = jnp.concatenate([ke * cos - ko * sin, ke * sin + ko * cos], -1)
            # single K=head_dim contraction (q @ k^T)
            scores = jax.lax.dot_general(
                qrot.astype(mdt), krot.astype(mdt),
                (((1,), (1,)), ((), ())),
                preferred_element_type=jnp.float32) * scale
            m = jnp.max(scores, axis=-1, keepdims=True)
            p = jnp.exp(scores - m)
            p = p * pl.reciprocal(jnp.sum(p, axis=-1, keepdims=True),
                                  approx=True)
            outs.append(jnp.dot(p.astype(mdt), v.astype(mdt),
                                preferred_element_type=jnp.float32))
        attn = jnp.concatenate(outs, axis=-1)        # (S, D), lane-dense
        h = h + jnp.dot(attn.astype(mdt), wo_ref[...],
                        preferred_element_type=jnp.float32)

        # ---------------- FFN sub-block (SwiGLU) ----------------
        hn = _rmsnorm(h, fnw_ref[...], eps).astype(mdt)
        h1 = jnp.dot(hn, w1_ref[...], preferred_element_type=jnp.float32)
        h3 = jnp.dot(hn, w3_ref[...],
                     preferred_element_type=jnp.float32) + b3_ref[...]
        g = (h1 * jax.nn.sigmoid(h1)) * h3           # SiLU(h1) * h3, f32
        h = h + jnp.dot(g.astype(w2_ref.dtype), w2_ref[...],
                        preferred_element_type=jnp.float32) + b2_ref[...]

    o_ref[0] = h


# ---------------------------------------------------------------------------
# pallas_call wrapper: whole forward pass
# ---------------------------------------------------------------------------

def transformer_forward(fused, tokens, cfg):
    B = tokens.shape[0]
    # NCHW-like (B, 150, H, W) -> flatten(2).permute(0, 2, 1) -> (B, S, 150)
    x = jnp.transpose(tokens.reshape(B, tokens.shape[1], -1), (0, 2, 1))
    S, F_in = x.shape[1], x.shape[2]
    dim, H, n_layers = cfg["dim"], cfg["n_heads"], cfg["n_layers"]
    hidden = cfg["hidden"]
    hd = dim // H
    half = hd // 2
    eps = cfg["norm_eps"]
    scale = 1.0 / math.sqrt(hd)

    cos = fused["cos"][:S]
    sin = fused["sin"][:S]

    def cspec(shape):
        # constant index map -> block stays VMEM-resident across grid steps
        return pl.BlockSpec(shape, lambda b, _s=shape: tuple(0 for _ in _s))

    in_specs = [pl.BlockSpec((1, S, F_in), lambda b: (b, 0, 0)),
                cspec((F_in, dim)), cspec((1, dim)),
                cspec((S, half)), cspec((S, half))]
    operands = [x, fused["to_latent_w"], fused["to_latent_b"], cos, sin]
    for lp in fused["layers"]:
        in_specs += [cspec((1, dim)), cspec((dim, 3 * dim)),
                     cspec((1, 3 * dim)), cspec((dim, dim)),
                     cspec((1, dim)), cspec((dim, hidden)),
                     cspec((dim, hidden)), cspec((1, hidden)),
                     cspec((hidden, dim)), cspec((1, dim))]
        operands += [lp["attn_norm_w"], lp["wqkv"], lp["bqkv"], lp["wo"],
                     lp["ffn_norm_w"], lp["w1"], lp["w3"], lp["b3"],
                     lp["w2"], lp["b2"]]

    kern = functools.partial(_fused_transformer_kernel, n_layers=n_layers,
                             n_heads=H, head_dim=hd, eps=eps, scale=scale)
    h = pl.pallas_call(
        kern,
        grid=(B,),
        in_specs=in_specs,
        out_specs=pl.BlockSpec((1, S, dim), lambda b: (b, 0, 0)),
        out_shape=jax.ShapeDtypeStruct((B, S, dim), jnp.float32),
        compiler_params=pltpu.CompilerParams(
            dimension_semantics=("parallel",)),
    )(*operands)

    # mean-pool + 128->2 head: negligible work, 2-lane output -> plain JAX
    return jnp.mean(h, axis=1) @ fused["to_pos_w"] + fused["to_pos_b"]


# ---------------------------------------------------------------------------
# Parameters (PyTorch-equivalent layout) + fused/permuted weights for Pallas
# ---------------------------------------------------------------------------

def precompute_rope(head_dim, end, theta):
    inv = 1.0 / (theta ** (jnp.arange(0, head_dim, 2, dtype=jnp.float32) / head_dim))
    t = jnp.arange(end, dtype=jnp.float32)
    freqs = jnp.outer(t, inv)                        # (end, head_dim//2)
    return jnp.cos(freqs), jnp.sin(freqs)


def init_params(key, cfg):
    dim, hidden, n_layers = cfg["dim"], cfg["hidden"], cfg["n_layers"]
    in_features = cfg["in_features"]

    def linear_init(k, fan_in, fan_out, bias, bf16=True):
        kw, kb = jax.random.split(k)
        bound = 1.0 / math.sqrt(fan_in)
        w = jax.random.uniform(kw, (fan_in, fan_out), jnp.float32, -bound, bound)
        if bf16:
            # round-trip so bf16 kernel path & f32 reference share exact values
            w = w.astype(jnp.bfloat16).astype(jnp.float32)
        b = (jax.random.uniform(kb, (1, fan_out), jnp.float32, -bound, bound)
             if bias else jnp.zeros((1, fan_out), jnp.float32))
        return w, b

    keys = jax.random.split(key, 2 + n_layers)
    params = {}
    params["to_latent_w"], params["to_latent_b"] = linear_init(
        keys[0], in_features, dim, True)
    params["to_pos_w"], params["to_pos_b"] = linear_init(
        keys[1], dim, 2, True, bf16=False)

    layers = []
    for li in range(n_layers):
        lk = jax.random.split(keys[2 + li], 8)
        wq, bq = linear_init(lk[0], dim, dim, True)
        wk, _ = linear_init(lk[1], dim, dim, False)
        wv, _ = linear_init(lk[2], dim, dim, False)
        wo, _ = linear_init(lk[3], dim, dim, False)
        w1, _ = linear_init(lk[4], dim, hidden, False)
        w2, b2 = linear_init(lk[5], hidden, dim, True)
        w3, b3 = linear_init(lk[6], dim, hidden, True)
        layers.append(dict(
            wq=wq, bq=bq, wk=wk, wv=wv, wo=wo,
            w1=w1, w2=w2, b2=b2, w3=w3, b3=b3,
            attn_norm_w=jnp.ones((1, dim), jnp.float32),
            ffn_norm_w=jnp.ones((1, dim), jnp.float32),
        ))
    params["layers"] = layers

    hd = dim // cfg["n_heads"]
    cos, sin = precompute_rope(hd, cfg["max_seq_len"] * 2, cfg["rope_theta"])
    params["cos"], params["sin"] = cos, sin
    return params


def prepare_fused_params(params, cfg):
    """Build fused QKV weights with per-head even/odd de-interleave + bf16 cast."""
    dim, H = cfg["dim"], cfg["n_heads"]
    hd = dim // H
    # within each head, put even feature indices first then odd ones, so RoPE
    # needs no strided slicing inside the kernel.
    perm = np.concatenate([h * hd + np.concatenate([np.arange(0, hd, 2),
                                                    np.arange(1, hd, 2)])
                           for h in range(H)])
    mdt = MATMUL_DTYPE
    fused = dict(
        to_latent_w=params["to_latent_w"].astype(mdt),
        to_latent_b=params["to_latent_b"],
        to_pos_w=params["to_pos_w"], to_pos_b=params["to_pos_b"],
        cos=params["cos"], sin=params["sin"], layers=[])
    for lp in params["layers"]:
        wqkv = jnp.concatenate([lp["wq"][:, perm], lp["wk"][:, perm], lp["wv"]],
                               axis=1).astype(mdt)
        bqkv = jnp.concatenate([lp["bq"][:, perm],
                                jnp.zeros((1, 2 * dim), jnp.float32)], axis=1)
        fused["layers"].append(dict(
            attn_norm_w=lp["attn_norm_w"], ffn_norm_w=lp["ffn_norm_w"],
            wqkv=wqkv, bqkv=bqkv, wo=lp["wo"].astype(mdt),
            w1=lp["w1"].astype(mdt), w3=lp["w3"].astype(mdt), b3=lp["b3"],
            w2=lp["w2"].astype(mdt), b2=lp["b2"]))
    return fused


# ---------------------------------------------------------------------------
# Pure-JAX f32 reference (mirrors the PyTorch forward, un-fused weights)
# ---------------------------------------------------------------------------

def reference_forward(params, tokens, cfg):
    B = tokens.shape[0]
    x = jnp.transpose(tokens.reshape(B, tokens.shape[1], -1), (0, 2, 1))
    S = x.shape[1]
    dim, H = cfg["dim"], cfg["n_heads"]
    hd = dim // H
    eps = cfg["norm_eps"]
    cos = params["cos"][:S][None, None]
    sin = params["sin"][:S][None, None]

    def rms(t, w):
        return t * jax.lax.rsqrt(jnp.mean(t * t, -1, keepdims=True) + eps) * w

    def rope(t):
        te, to = t[..., 0::2], t[..., 1::2]
        return jnp.concatenate([te * cos - to * sin, te * sin + to * cos], -1)

    h = x @ params["to_latent_w"] + params["to_latent_b"]
    for lp in params["layers"]:
        xn = rms(h, lp["attn_norm_w"])
        q = jnp.transpose((xn @ lp["wq"] + lp["bq"]).reshape(B, S, H, hd), (0, 2, 1, 3))
        k = jnp.transpose((xn @ lp["wk"]).reshape(B, S, H, hd), (0, 2, 1, 3))
        v = jnp.transpose((xn @ lp["wv"]).reshape(B, S, H, hd), (0, 2, 1, 3))
        qr, kr = rope(q), rope(k)
        scores = (qr @ jnp.swapaxes(kr, -1, -2)) / math.sqrt(hd)
        p = jax.nn.softmax(scores, -1)
        o = jnp.transpose(p @ v, (0, 2, 1, 3)).reshape(B, S, dim)
        h = h + o @ lp["wo"]
        hn = rms(h, lp["ffn_norm_w"])
        g = jax.nn.silu(hn @ lp["w1"]) * (hn @ lp["w3"] + lp["b3"])
        h = h + g @ lp["w2"] + lp["b2"]
    return jnp.mean(h, axis=1) @ params["to_pos_w"] + params["to_pos_b"]


# ---------------------------------------------------------------------------

if __name__ == "__main__":
    # Small config consistent with the module (to_latent is fixed at 150 inputs).
    cfg = dict(dim=128, n_heads=4, n_layers=2, in_features=150,
               norm_eps=1e-5, rope_theta=500000.0, multiple_of=16,
               max_seq_len=32)
    hidden = int(2 * (4 * cfg["dim"]) / 3)
    hidden = cfg["multiple_of"] * ((hidden + cfg["multiple_of"] - 1)
                                   // cfg["multiple_of"])
    cfg["hidden"] = hidden  # SwiGLU hidden dim (352 for dim=128)

    root = jax.random.PRNGKey(0)
    kp, kx = jax.random.split(root)
    params = init_params(kp, cfg)
    fused = prepare_fused_params(params, cfg)

    # PyTorch-style NCHW input: (batch=2, channels=150, H=4, W=4) -> seq=16
    tokens = jax.random.normal(kx, (2, 150, 4, 4), jnp.float32)

    fwd = jax.jit(functools.partial(transformer_forward, cfg=cfg))
    out = jax.block_until_ready(fwd(fused, tokens))

    ref = reference_forward(params, tokens, cfg)
    assert out.shape == (2, 2)
    # tolerance loosened for bf16 MXU operands (f32 accumulation)
    np.testing.assert_allclose(np.asarray(out), np.asarray(ref),
                               rtol=5e-2, atol=5e-2)
    print("KERNEL_OK")
</pallas_src>

<mosaic_0001>
module attributes {stable_mosaic.version = 11 : i64} {
  func.func @_fused_transformer_kernel(%arg0: i32, %arg1: memref<1x16x150xf32, #tpu.memory_space<vmem>>, %arg2: memref<150x128xbf16, #tpu.memory_space<vmem>>, %arg3: memref<1x128xf32, #tpu.memory_space<vmem>>, %arg4: memref<16x16xf32, #tpu.memory_space<vmem>>, %arg5: memref<16x16xf32, #tpu.memory_space<vmem>>, %arg6: memref<1x128xf32, #tpu.memory_space<vmem>>, %arg7: memref<128x384xbf16, #tpu.memory_space<vmem>>, %arg8: memref<1x384xf32, #tpu.memory_space<vmem>>, %arg9: memref<128x128xbf16, #tpu.memory_space<vmem>>, %arg10: memref<1x128xf32, #tpu.memory_space<vmem>>, %arg11: memref<128x352xbf16, #tpu.memory_space<vmem>>, %arg12: memref<128x352xbf16, #tpu.memory_space<vmem>>, %arg13: memref<1x352xf32, #tpu.memory_space<vmem>>, %arg14: memref<352x128xbf16, #tpu.memory_space<vmem>>, %arg15: memref<1x128xf32, #tpu.memory_space<vmem>>, %arg16: memref<1x128xf32, #tpu.memory_space<vmem>>, %arg17: memref<128x384xbf16, #tpu.memory_space<vmem>>, %arg18: memref<1x384xf32, #tpu.memory_space<vmem>>, %arg19: memref<128x128xbf16, #tpu.memory_space<vmem>>, %arg20: memref<1x128xf32, #tpu.memory_space<vmem>>, %arg21: memref<128x352xbf16, #tpu.memory_space<vmem>>, %arg22: memref<128x352xbf16, #tpu.memory_space<vmem>>, %arg23: memref<1x352xf32, #tpu.memory_space<vmem>>, %arg24: memref<352x128xbf16, #tpu.memory_space<vmem>>, %arg25: memref<1x128xf32, #tpu.memory_space<vmem>>, %arg26: memref<1x16x128xf32, #tpu.memory_space<vmem>>) attributes {dimension_semantics = [#tpu.dimension_semantics<parallel>], iteration_bounds = array<i64: 2>, scalar_prefetch = 0 : i64, scratch_operands = 0 : i64, tpu.core_type = #tpu.core_type<tc>, window_params = [{transform_indices = @transform_0, window_bounds = array<i64: 1, 16, 150>}, {pipeline_mode = #tpu.pipeline_mode<synchronous>, transform_indices = @transform_1, window_bounds = array<i64: 150, 128>}, {pipeline_mode = #tpu.pipeline_mode<synchronous>, transform_indices = @transform_2, window_bounds = array<i64: 1, 128>}, {pipeline_mode = #tpu.pipeline_mode<synchronous>, transform_indices = @transform_3, window_bounds = array<i64: 16, 16>}, {pipeline_mode = #tpu.pipeline_mode<synchronous>, transform_indices = @transform_4, window_bounds = array<i64: 16, 16>}, {pipeline_mode = #tpu.pipeline_mode<synchronous>, transform_indices = @transform_5, window_bounds = array<i64: 1, 128>}, {pipeline_mode = #tpu.pipeline_mode<synchronous>, transform_indices = @transform_6, window_bounds = array<i64: 128, 384>}, {pipeline_mode = #tpu.pipeline_mode<synchronous>, transform_indices = @transform_7, window_bounds = array<i64: 1, 384>}, {pipeline_mode = #tpu.pipeline_mode<synchronous>, transform_indices = @transform_8, window_bounds = array<i64: 128, 128>}, {pipeline_mode = #tpu.pipeline_mode<synchronous>, transform_indices = @transform_9, window_bounds = array<i64: 1, 128>}, {pipeline_mode = #tpu.pipeline_mode<synchronous>, transform_indices = @transform_10, window_bounds = array<i64: 128, 352>}, {pipeline_mode = #tpu.pipeline_mode<synchronous>, transform_indices = @transform_11, window_bounds = array<i64: 128, 352>}, {pipeline_mode = #tpu.pipeline_mode<synchronous>, transform_indices = @transform_12, window_bounds = array<i64: 1, 352>}, {pipeline_mode = #tpu.pipeline_mode<synchronous>, transform_indices = @transform_13, window_bounds = array<i64: 352, 128>}, {pipeline_mode = #tpu.pipeline_mode<synchronous>, transform_indices = @transform_14, window_bounds = array<i64: 1, 128>}, {pipeline_mode = #tpu.pipeline_mode<synchronous>, transform_indices = @transform_15, window_bounds = array<i64: 1, 128>}, {pipeline_mode = #tpu.pipeline_mode<synchronous>, transform_indices = @transform_16, window_bounds = array<i64: 128, 384>}, {pipeline_mode = #tpu.pipeline_mode<synchronous>, transform_indices = @transform_17, window_bounds = array<i64: 1, 384>}, {pipeline_mode = #tpu.pipeline_mode<synchronous>, transform_indices = @transform_18, window_bounds = array<i64: 128, 128>}, {pipeline_mode = #tpu.pipeline_mode<synchronous>, transform_indices = @transform_19, window_bounds = array<i64: 1, 128>}, {pipeline_mode = #tpu.pipeline_mode<synchronous>, transform_indices = @transform_20, window_bounds = array<i64: 128, 352>}, {pipeline_mode = #tpu.pipeline_mode<synchronous>, transform_indices = @transform_21, window_bounds = array<i64: 128, 352>}, {pipeline_mode = #tpu.pipeline_mode<synchronous>, transform_indices = @transform_22, window_bounds = array<i64: 1, 352>}, {pipeline_mode = #tpu.pipeline_mode<synchronous>, transform_indices = @transform_23, window_bounds = array<i64: 352, 128>}, {pipeline_mode = #tpu.pipeline_mode<synchronous>, transform_indices = @transform_24, window_bounds = array<i64: 1, 128>}, {transform_indices = @transform_25, window_bounds = array<i64: 1, 16, 128>}]} {
    %c0 = arith.constant 0 : index
    %c0_0 = arith.constant 0 : index
    %c0_1 = arith.constant 0 : index
    %0 = vector.load %arg1[%c0, %c0_0, %c0_1] : memref<1x16x150xf32, #tpu.memory_space<vmem>>, vector<1x16x150xf32>
    %1 = vector.shape_cast %0 : vector<1x16x150xf32> to vector<16x150xf32>
    %c0_2 = arith.constant 0 : index
    %c0_3 = arith.constant 0 : index
    %2 = vector.load %arg4[%c0_2, %c0_3] : memref<16x16xf32, #tpu.memory_space<vmem>>, vector<16x16xf32>
    %c0_4 = arith.constant 0 : index
    %c0_5 = arith.constant 0 : index
    %3 = vector.load %arg5[%c0_4, %c0_5] : memref<16x16xf32, #tpu.memory_space<vmem>>, vector<16x16xf32>
    %4 = arith.truncf %1 : vector<16x150xf32> to vector<16x150xbf16>
    %c0_6 = arith.constant 0 : index
    %c0_7 = arith.constant 0 : index
    %5 = vector.load %arg2[%c0_6, %c0_7] : memref<150x128xbf16, #tpu.memory_space<vmem>>, vector<150x128xbf16>
    %cst = arith.constant dense<0.000000e+00> : vector<16x128xf32>
    %6 = tpu.matmul %4, %5, %cst {dimension_numbers = #tpu.dot_dimension_numbers<[1], [0], [0], [1], [0, 0, 1, 1], [], []>} : vector<16x150xbf16>, vector<150x128xbf16>, vector<16x128xf32> -> vector<16x128xf32>
    %c0_8 = arith.constant 0 : index
    %c0_9 = arith.constant 0 : index
    %7 = vector.load %arg3[%c0_8, %c0_9] : memref<1x128xf32, #tpu.memory_space<vmem>>, vector<1x128xf32>
    %8 = vector.broadcast %7 : vector<1x128xf32> to vector<16x128xf32>
    %9 = arith.addf %6, %8 : vector<16x128xf32>
    %c0_10 = arith.constant 0 : index
    %c0_11 = arith.constant 0 : index
    %10 = vector.load %arg6[%c0_10, %c0_11] : memref<1x128xf32, #tpu.memory_space<vmem>>, vector<1x128xf32>
    %11 = arith.mulf %9, %9 : vector<16x128xf32>
    %cst_12 = arith.constant dense<0.000000e+00> : vector<16xf32>
    %12 = vector.multi_reduction <add>, %11, %cst_12 [1] : vector<16x128xf32> to vector<16xf32>
    %13 = vector.shape_cast %12 : vector<16xf32> to vector<16x1xf32>
    %cst_13 = arith.constant 1.280000e+02 : f32
    %14 = vector.broadcast %cst_13 : f32 to vector<16x1xf32>
    %15 = arith.divf %13, %14 : vector<16x1xf32>
    %cst_14 = arith.constant 9.99999974E-6 : f32
    %16 = vector.broadcast %cst_14 : f32 to vector<16x1xf32>
    %17 = arith.addf %15, %16 : vector<16x1xf32>
    %18 = math.rsqrt %17 : vector<16x1xf32>
    %19 = vector.broadcast %18 : vector<16x1xf32> to vector<16x128xf32>
    %20 = arith.mulf %9, %19 : vector<16x128xf32>
    %21 = vector.broadcast %10 : vector<1x128xf32> to vector<16x128xf32>
    %22 = arith.mulf %20, %21 : vector<16x128xf32>
    %23 = arith.truncf %22 : vector<16x128xf32> to vector<16x128xbf16>
    %c0_15 = arith.constant 0 : index
    %c0_16 = arith.constant 0 : index
    %24 = vector.load %arg7[%c0_15, %c0_16] : memref<128x384xbf16, #tpu.memory_space<vmem>>, vector<128x384xbf16>
    %cst_17 = arith.constant dense<0.000000e+00> : vector<16x384xf32>
    %25 = tpu.matmul %23, %24, %cst_17 {dimension_numbers = #tpu.dot_dimension_numbers<[1], [0], [0], [1], [0, 0, 1, 1], [], []>} : vector<16x128xbf16>, vector<128x384xbf16>, vector<16x384xf32> -> vector<16x384xf32>
    %c0_18 = arith.constant 0 : index
    %c0_19 = arith.constant 0 : index
    %26 = vector.load %arg8[%c0_18, %c0_19] : memref<1x384xf32, #tpu.memory_space<vmem>>, vector<1x384xf32>
    %27 = vector.broadcast %26 : vector<1x384xf32> to vector<16x384xf32>
    %28 = arith.addf %25, %27 : vector<16x384xf32>
    %29 = vector.extract_strided_slice %28 {offsets = [0, 0], sizes = [16, 32], strides = [1, 1]} : vector<16x384xf32> to vector<16x32xf32>
    %30 = vector.extract_strided_slice %28 {offsets = [0, 128], sizes = [16, 32], strides = [1, 1]} : vector<16x384xf32> to vector<16x32xf32>
    %31 = vector.extract_strided_slice %28 {offsets = [0, 256], sizes = [16, 32], strides = [1, 1]} : vector<16x384xf32> to vector<16x32xf32>
    %32 = vector.extract_strided_slice %29 {offsets = [0, 0], sizes = [16, 16], strides = [1, 1]} : vector<16x32xf32> to vector<16x16xf32>
    %33 = vector.extract_strided_slice %29 {offsets = [0, 16], sizes = [16, 16], strides = [1, 1]} : vector<16x32xf32> to vector<16x16xf32>
    %34 = vector.extract_strided_slice %30 {offsets = [0, 0], sizes = [16, 16], strides = [1, 1]} : vector<16x32xf32> to vector<16x16xf32>
    %35 = vector.extract_strided_slice %30 {offsets = [0, 16], sizes = [16, 16], strides = [1, 1]} : vector<16x32xf32> to vector<16x16xf32>
    %36 = arith.mulf %32, %2 : vector<16x16xf32>
    %37 = arith.mulf %33, %3 : vector<16x16xf32>
    %38 = arith.subf %36, %37 : vector<16x16xf32>
    %39 = arith.mulf %32, %3 : vector<16x16xf32>
    %40 = arith.mulf %33, %2 : vector<16x16xf32>
    %41 = arith.addf %39, %40 : vector<16x16xf32>
    %42 = tpu.concatenate %38, %41 in 1 : vector<16x16xf32>, vector<16x16xf32> -> vector<16x32xf32>
    %43 = arith.mulf %34, %2 : vector<16x16xf32>
    %44 = arith.mulf %35, %3 : vector<16x16xf32>
    %45 = arith.subf %43, %44 : vector<16x16xf32>
    %46 = arith.mulf %34, %3 : vector<16x16xf32>
    %47 = arith.mulf %35, %2 : vector<16x16xf32>
    %48 = arith.addf %46, %47 : vector<16x16xf32>
    %49 = tpu.concatenate %45, %48 in 1 : vector<16x16xf32>, vector<16x16xf32> -> vector<16x32xf32>
    %50 = arith.truncf %42 : vector<16x32xf32> to vector<16x32xbf16>
    %51 = arith.truncf %49 : vector<16x32xf32> to vector<16x32xbf16>
    %cst_20 = arith.constant dense<0.000000e+00> : vector<16x16xf32>
    %52 = tpu.matmul %50, %51, %cst_20 {dimension_numbers = #tpu.dot_dimension_numbers<[1], [1], [0], [0], [0, 0, 1, 0], [], []>} : vector<16x32xbf16>, vector<16x32xbf16>, vector<16x16xf32> -> vector<16x16xf32>
    %cst_21 = arith.constant 0.176776692 : f32
    %53 = vector.broadcast %cst_21 : f32 to vector<16x16xf32>
    %54 = arith.mulf %52, %53 : vector<16x16xf32>
    %cst_22 = arith.constant dense<0xFF800000> : vector<16xf32>
    %55 = vector.multi_reduction <maximumf>, %54, %cst_22 [1] : vector<16x16xf32> to vector<16xf32>
    %56 = vector.shape_cast %55 : vector<16xf32> to vector<16x1xf32>
    %57 = vector.broadcast %56 : vector<16x1xf32> to vector<16x16xf32>
    %58 = arith.subf %54, %57 : vector<16x16xf32>
    %59 = math.exp %58 : vector<16x16xf32>
    %cst_23 = arith.constant dense<0.000000e+00> : vector<16xf32>
    %60 = vector.multi_reduction <add>, %59, %cst_23 [1] : vector<16x16xf32> to vector<16xf32>
    %61 = vector.shape_cast %60 : vector<16xf32> to vector<16x1xf32>
    %62 = tpu.reciprocal %61 {approx = true} : vector<16x1xf32> -> vector<16x1xf32>
    %63 = vector.broadcast %62 : vector<16x1xf32> to vector<16x16xf32>
    %64 = arith.mulf %59, %63 : vector<16x16xf32>
    %65 = arith.truncf %64 : vector<16x16xf32> to vector<16x16xbf16>
    %66 = arith.truncf %31 : vector<16x32xf32> to vector<16x32xbf16>
    %cst_24 = arith.constant dense<0.000000e+00> : vector<16x32xf32>
    %67 = tpu.matmul %65, %66, %cst_24 {dimension_numbers = #tpu.dot_dimension_numbers<[1], [0], [0], [1], [0, 0, 1, 1], [], []>} : vector<16x16xbf16>, vector<16x32xbf16>, vector<16x32xf32> -> vector<16x32xf32>
    %68 = vector.extract_strided_slice %28 {offsets = [0, 32], sizes = [16, 32], strides = [1, 1]} : vector<16x384xf32> to vector<16x32xf32>
    %69 = vector.extract_strided_slice %28 {offsets = [0, 160], sizes = [16, 32], strides = [1, 1]} : vector<16x384xf32> to vector<16x32xf32>
    %70 = vector.extract_strided_slice %28 {offsets = [0, 288], sizes = [16, 32], strides = [1, 1]} : vector<16x384xf32> to vector<16x32xf32>
    %71 = vector.extract_strided_slice %68 {offsets = [0, 0], sizes = [16, 16], strides = [1, 1]} : vector<16x32xf32> to vector<16x16xf32>
    %72 = vector.extract_strided_slice %68 {offsets = [0, 16], sizes = [16, 16], strides = [1, 1]} : vector<16x32xf32> to vector<16x16xf32>
    %73 = vector.extract_strided_slice %69 {offsets = [0, 0], sizes = [16, 16], strides = [1, 1]} : vector<16x32xf32> to vector<16x16xf32>
    %74 = vector.extract_strided_slice %69 {offsets = [0, 16], sizes = [16, 16], strides = [1, 1]} : vector<16x32xf32> to vector<16x16xf32>
    %75 = arith.mulf %71, %2 : vector<16x16xf32>
    %76 = arith.mulf %72, %3 : vector<16x16xf32>
    %77 = arith.subf %75, %76 : vector<16x16xf32>
    %78 = arith.mulf %71, %3 : vector<16x16xf32>
    %79 = arith.mulf %72, %2 : vector<16x16xf32>
    %80 = arith.addf %78, %79 : vector<16x16xf32>
    %81 = tpu.concatenate %77, %80 in 1 : vector<16x16xf32>, vector<16x16xf32> -> vector<16x32xf32>
    %82 = arith.mulf %73, %2 : vector<16x16xf32>
    %83 = arith.mulf %74, %3 : vector<16x16xf32>
    %84 = arith.subf %82, %83 : vector<16x16xf32>
    %85 = arith.mulf %73, %3 : vector<16x16xf32>
    %86 = arith.mulf %74, %2 : vector<16x16xf32>
    %87 = arith.addf %85, %86 : vector<16x16xf32>
    %88 = tpu.concatenate %84, %87 in 1 : vector<16x16xf32>, vector<16x16xf32> -> vector<16x32xf32>
    %89 = arith.truncf %81 : vector<16x32xf32> to vector<16x32xbf16>
    %90 = arith.truncf %88 : vector<16x32xf32> to vector<16x32xbf16>
    %cst_25 = arith.constant dense<0.000000e+00> : vector<16x16xf32>
    %91 = tpu.matmul %89, %90, %cst_25 {dimension_numbers = #tpu.dot_dimension_numbers<[1], [1], [0], [0], [0, 0, 1, 0], [], []>} : vector<16x32xbf16>, vector<16x32xbf16>, vector<16x16xf32> -> vector<16x16xf32>
    %cst_26 = arith.constant 0.176776692 : f32
    %92 = vector.broadcast %cst_26 : f32 to vector<16x16xf32>
    %93 = arith.mulf %91, %92 : vector<16x16xf32>
    %cst_27 = arith.constant dense<0xFF800000> : vector<16xf32>
    %94 = vector.multi_reduction <maximumf>, %93, %cst_27 [1] : vector<16x16xf32> to vector<16xf32>
    %95 = vector.shape_cast %94 : vector<16xf32> to vector<16x1xf32>
    %96 = vector.broadcast %95 : vector<16x1xf32> to vector<16x16xf32>
    %97 = arith.subf %93, %96 : vector<16x16xf32>
    %98 = math.exp %97 : vector<16x16xf32>
    %cst_28 = arith.constant dense<0.000000e+00> : vector<16xf32>
    %99 = vector.multi_reduction <add>, %98, %cst_28 [1] : vector<16x16xf32> to vector<16xf32>
    %100 = vector.shape_cast %99 : vector<16xf32> to vector<16x1xf32>
    %101 = tpu.reciprocal %100 {approx = true} : vector<16x1xf32> -> vector<16x1xf32>
    %102 = vector.broadcast %101 : vector<16x1xf32> to vector<16x16xf32>
    %103 = arith.mulf %98, %102 : vector<16x16xf32>
    %104 = arith.truncf %103 : vector<16x16xf32> to vector<16x16xbf16>
    %105 = arith.truncf %70 : vector<16x32xf32> to vector<16x32xbf16>
    %cst_29 = arith.constant dense<0.000000e+00> : vector<16x32xf32>
    %106 = tpu.matmul %104, %105, %cst_29 {dimension_numbers = #tpu.dot_dimension_numbers<[1], [0], [0], [1], [0, 0, 1, 1], [], []>} : vector<16x16xbf16>, vector<16x32xbf16>, vector<16x32xf32> -> vector<16x32xf32>
    %107 = vector.extract_strided_slice %28 {offsets = [0, 64], sizes = [16, 32], strides = [1, 1]} : vector<16x384xf32> to vector<16x32xf32>
    %108 = vector.extract_strided_slice %28 {offsets = [0, 192], sizes = [16, 32], strides = [1, 1]} : vector<16x384xf32> to vector<16x32xf32>
    %109 = vector.extract_strided_slice %28 {offsets = [0, 320], sizes = [16, 32], strides = [1, 1]} : vector<16x384xf32> to vector<16x32xf32>
    %110 = vector.extract_strided_slice %107 {offsets = [0, 0], sizes = [16, 16], strides = [1, 1]} : vector<16x32xf32> to vector<16x16xf32>
    %111 = vector.extract_strided_slice %107 {offsets = [0, 16], sizes = [16, 16], strides = [1, 1]} : vector<16x32xf32> to vector<16x16xf32>
    %112 = vector.extract_strided_slice %108 {offsets = [0, 0], sizes = [16, 16], strides = [1, 1]} : vector<16x32xf32> to vector<16x16xf32>
    %113 = vector.extract_strided_slice %108 {offsets = [0, 16], sizes = [16, 16], strides = [1, 1]} : vector<16x32xf32> to vector<16x16xf32>
    %114 = arith.mulf %110, %2 : vector<16x16xf32>
    %115 = arith.mulf %111, %3 : vector<16x16xf32>
    %116 = arith.subf %114, %115 : vector<16x16xf32>
    %117 = arith.mulf %110, %3 : vector<16x16xf32>
    %118 = arith.mulf %111, %2 : vector<16x16xf32>
    %119 = arith.addf %117, %118 : vector<16x16xf32>
    %120 = tpu.concatenate %116, %119 in 1 : vector<16x16xf32>, vector<16x16xf32> -> vector<16x32xf32>
    %121 = arith.mulf %112, %2 : vector<16x16xf32>
    %122 = arith.mulf %113, %3 : vector<16x16xf32>
    %123 = arith.subf %121, %122 : vector<16x16xf32>
    %124 = arith.mulf %112, %3 : vector<16x16xf32>
    %125 = arith.mulf %113, %2 : vector<16x16xf32>
    %126 = arith.addf %124, %125 : vector<16x16xf32>
    %127 = tpu.concatenate %123, %126 in 1 : vector<16x16xf32>, vector<16x16xf32> -> vector<16x32xf32>
    %128 = arith.truncf %120 : vector<16x32xf32> to vector<16x32xbf16>
    %129 = arith.truncf %127 : vector<16x32xf32> to vector<16x32xbf16>
    %cst_30 = arith.constant dense<0.000000e+00> : vector<16x16xf32>
    %130 = tpu.matmul %128, %129, %cst_30 {dimension_numbers = #tpu.dot_dimension_numbers<[1], [1], [0], [0], [0, 0, 1, 0], [], []>} : vector<16x32xbf16>, vector<16x32xbf16>, vector<16x16xf32> -> vector<16x16xf32>
    %cst_31 = arith.constant 0.176776692 : f32
    %131 = vector.broadcast %cst_31 : f32 to vector<16x16xf32>
    %132 = arith.mulf %130, %131 : vector<16x16xf32>
    %cst_32 = arith.constant dense<0xFF800000> : vector<16xf32>
    %133 = vector.multi_reduction <maximumf>, %132, %cst_32 [1] : vector<16x16xf32> to vector<16xf32>
    %134 = vector.shape_cast %133 : vector<16xf32> to vector<16x1xf32>
    %135 = vector.broadcast %134 : vector<16x1xf32> to vector<16x16xf32>
    %136 = arith.subf %132, %135 : vector<16x16xf32>
    %137 = math.exp %136 : vector<16x16xf32>
    %cst_33 = arith.constant dense<0.000000e+00> : vector<16xf32>
    %138 = vector.multi_reduction <add>, %137, %cst_33 [1] : vector<16x16xf32> to vector<16xf32>
    %139 = vector.shape_cast %138 : vector<16xf32> to vector<16x1xf32>
    %140 = tpu.reciprocal %139 {approx = true} : vector<16x1xf32> -> vector<16x1xf32>
    %141 = vector.broadcast %140 : vector<16x1xf32> to vector<16x16xf32>
    %142 = arith.mulf %137, %141 : vector<16x16xf32>
    %143 = arith.truncf %142 : vector<16x16xf32> to vector<16x16xbf16>
    %144 = arith.truncf %109 : vector<16x32xf32> to vector<16x32xbf16>
    %cst_34 = arith.constant dense<0.000000e+00> : vector<16x32xf32>
    %145 = tpu.matmul %143, %144, %cst_34 {dimension_numbers = #tpu.dot_dimension_numbers<[1], [0], [0], [1], [0, 0, 1, 1], [], []>} : vector<16x16xbf16>, vector<16x32xbf16>, vector<16x32xf32> -> vector<16x32xf32>
    %146 = vector.extract_strided_slice %28 {offsets = [0, 96], sizes = [16, 32], strides = [1, 1]} : vector<16x384xf32> to vector<16x32xf32>
    %147 = vector.extract_strided_slice %28 {offsets = [0, 224], sizes = [16, 32], strides = [1, 1]} : vector<16x384xf32> to vector<16x32xf32>
    %148 = vector.extract_strided_slice %28 {offsets = [0, 352], sizes = [16, 32], strides = [1, 1]} : vector<16x384xf32> to vector<16x32xf32>
    %149 = vector.extract_strided_slice %146 {offsets = [0, 0], sizes = [16, 16], strides = [1, 1]} : vector<16x32xf32> to vector<16x16xf32>
    %150 = vector.extract_strided_slice %146 {offsets = [0, 16], sizes = [16, 16], strides = [1, 1]} : vector<16x32xf32> to vector<16x16xf32>
    %151 = vector.extract_strided_slice %147 {offsets = [0, 0], sizes = [16, 16], strides = [1, 1]} : vector<16x32xf32> to vector<16x16xf32>
    %152 = vector.extract_strided_slice %147 {offsets = [0, 16], sizes = [16, 16], strides = [1, 1]} : vector<16x32xf32> to vector<16x16xf32>
    %153 = arith.mulf %149, %2 : vector<16x16xf32>
    %154 = arith.mulf %150, %3 : vector<16x16xf32>
    %155 = arith.subf %153, %154 : vector<16x16xf32>
    %156 = arith.mulf %149, %3 : vector<16x16xf32>
    %157 = arith.mulf %150, %2 : vector<16x16xf32>
    %158 = arith.addf %156, %157 : vector<16x16xf32>
    %159 = tpu.concatenate %155, %158 in 1 : vector<16x16xf32>, vector<16x16xf32> -> vector<16x32xf32>
    %160 = arith.mulf %151, %2 : vector<16x16xf32>
    %161 = arith.mulf %152, %3 : vector<16x16xf32>
    %162 = arith.subf %160, %161 : vector<16x16xf32>
    %163 = arith.mulf %151, %3 : vector<16x16xf32>
    %164 = arith.mulf %152, %2 : vector<16x16xf32>
    %165 = arith.addf %163, %164 : vector<16x16xf32>
    %166 = tpu.concatenate %162, %165 in 1 : vector<16x16xf32>, vector<16x16xf32> -> vector<16x32xf32>
    %167 = arith.truncf %159 : vector<16x32xf32> to vector<16x32xbf16>
    %168 = arith.truncf %166 : vector<16x32xf32> to vector<16x32xbf16>
    %cst_35 = arith.constant dense<0.000000e+00> : vector<16x16xf32>
    %169 = tpu.matmul %167, %168, %cst_35 {dimension_numbers = #tpu.dot_dimension_numbers<[1], [1], [0], [0], [0, 0, 1, 0], [], []>} : vector<16x32xbf16>, vector<16x32xbf16>, vector<16x16xf32> -> vector<16x16xf32>
    %cst_36 = arith.constant 0.176776692 : f32
    %170 = vector.broadcast %cst_36 : f32 to vector<16x16xf32>
    %171 = arith.mulf %169, %170 : vector<16x16xf32>
    %cst_37 = arith.constant dense<0xFF800000> : vector<16xf32>
    %172 = vector.multi_reduction <maximumf>, %171, %cst_37 [1] : vector<16x16xf32> to vector<16xf32>
    %173 = vector.shape_cast %172 : vector<16xf32> to vector<16x1xf32>
    %174 = vector.broadcast %173 : vector<16x1xf32> to vector<16x16xf32>
    %175 = arith.subf %171, %174 : vector<16x16xf32>
    %176 = math.exp %175 : vector<16x16xf32>
    %cst_38 = arith.constant dense<0.000000e+00> : vector<16xf32>
    %177 = vector.multi_reduction <add>, %176, %cst_38 [1] : vector<16x16xf32> to vector<16xf32>
    %178 = vector.shape_cast %177 : vector<16xf32> to vector<16x1xf32>
    %179 = tpu.reciprocal %178 {approx = true} : vector<16x1xf32> -> vector<16x1xf32>
    %180 = vector.broadcast %179 : vector<16x1xf32> to vector<16x16xf32>
    %181 = arith.mulf %176, %180 : vector<16x16xf32>
    %182 = arith.truncf %181 : vector<16x16xf32> to vector<16x16xbf16>
    %183 = arith.truncf %148 : vector<16x32xf32> to vector<16x32xbf16>
    %cst_39 = arith.constant dense<0.000000e+00> : vector<16x32xf32>
    %184 = tpu.matmul %182, %183, %cst_39 {dimension_numbers = #tpu.dot_dimension_numbers<[1], [0], [0], [1], [0, 0, 1, 1], [], []>} : vector<16x16xbf16>, vector<16x32xbf16>, vector<16x32xf32> -> vector<16x32xf32>
    %185 = tpu.concatenate %67, %106, %145, %184 in 1 : vector<16x32xf32>, vector<16x32xf32>, vector<16x32xf32>, vector<16x32xf32> -> vector<16x128xf32>
    %186 = arith.truncf %185 : vector<16x128xf32> to vector<16x128xbf16>
    %c0_40 = arith.constant 0 : index
    %c0_41 = arith.constant 0 : index
    %187 = vector.load %arg9[%c0_40, %c0_41] : memref<128x128xbf16, #tpu.memory_space<vmem>>, vector<128x128xbf16>
    %cst_42 = arith.constant dense<0.000000e+00> : vector<16x128xf32>
    %188 = tpu.matmul %186, %187, %cst_42 {dimension_numbers = #tpu.dot_dimension_numbers<[1], [0], [0], [1], [0, 0, 1, 1], [], []>} : vector<16x128xbf16>, vector<128x128xbf16>, vector<16x128xf32> -> vector<16x128xf32>
    %189 = arith.addf %9, %188 : vector<16x128xf32>
    %c0_43 = arith.constant 0 : index
    %c0_44 = arith.constant 0 : index
    %190 = vector.load %arg10[%c0_43, %c0_44] : memref<1x128xf32, #tpu.memory_space<vmem>>, vector<1x128xf32>
    %191 = arith.mulf %189, %189 : vector<16x128xf32>
    %cst_45 = arith.constant dense<0.000000e+00> : vector<16xf32>
    %192 = vector.multi_reduction <add>, %191, %cst_45 [1] : vector<16x128xf32> to vector<16xf32>
    %193 = vector.shape_cast %192 : vector<16xf32> to vector<16x1xf32>
    %cst_46 = arith.constant 1.280000e+02 : f32
    %194 = vector.broadcast %cst_46 : f32 to vector<16x1xf32>
    %195 = arith.divf %193, %194 : vector<16x1xf32>
    %cst_47 = arith.constant 9.99999974E-6 : f32
    %196 = vector.broadcast %cst_47 : f32 to vector<16x1xf32>
    %197 = arith.addf %195, %196 : vector<16x1xf32>
    %198 = math.rsqrt %197 : vector<16x1xf32>
    %199 = vector.broadcast %198 : vector<16x1xf32> to vector<16x128xf32>
    %200 = arith.mulf %189, %199 : vector<16x128xf32>
    %201 = vector.broadcast %190 : vector<1x128xf32> to vector<16x128xf32>
    %202 = arith.mulf %200, %201 : vector<16x128xf32>
    %203 = arith.truncf %202 : vector<16x128xf32> to vector<16x128xbf16>
    %c0_48 = arith.constant 0 : index
    %c0_49 = arith.constant 0 : index
    %204 = vector.load %arg11[%c0_48, %c0_49] : memref<128x352xbf16, #tpu.memory_space<vmem>>, vector<128x352xbf16>
    %cst_50 = arith.constant dense<0.000000e+00> : vector<16x352xf32>
    %205 = tpu.matmul %203, %204, %cst_50 {dimension_numbers = #tpu.dot_dimension_numbers<[1], [0], [0], [1], [0, 0, 1, 1], [], []>} : vector<16x128xbf16>, vector<128x352xbf16>, vector<16x352xf32> -> vector<16x352xf32>
    %c0_51 = arith.constant 0 : index
    %c0_52 = arith.constant 0 : index
    %206 = vector.load %arg12[%c0_51, %c0_52] : memref<128x352xbf16, #tpu.memory_space<vmem>>, vector<128x352xbf16>
    %cst_53 = arith.constant dense<0.000000e+00> : vector<16x352xf32>
    %207 = tpu.matmul %203, %206, %cst_53 {dimension_numbers = #tpu.dot_dimension_numbers<[1], [0], [0], [1], [0, 0, 1, 1], [], []>} : vector<16x128xbf16>, vector<128x352xbf16>, vector<16x352xf32> -> vector<16x352xf32>
    %c0_54 = arith.constant 0 : index
    %c0_55 = arith.constant 0 : index
    %208 = vector.load %arg13[%c0_54, %c0_55] : memref<1x352xf32, #tpu.memory_space<vmem>>, vector<1x352xf32>
    %209 = vector.broadcast %208 : vector<1x352xf32> to vector<16x352xf32>
    %210 = arith.addf %207, %209 : vector<16x352xf32>
    %211 = arith.negf %205 : vector<16x352xf32>
    %212 = math.exp %211 : vector<16x352xf32>
    %cst_56 = arith.constant 1.000000e+00 : f32
    %213 = vector.broadcast %cst_56 : f32 to vector<16x352xf32>
    %214 = arith.addf %213, %212 : vector<16x352xf32>
    %215 = arith.divf %213, %214 : vector<16x352xf32>
    %216 = arith.mulf %205, %215 : vector<16x352xf32>
    %217 = arith.mulf %216, %210 : vector<16x352xf32>
    %218 = arith.truncf %217 : vector<16x352xf32> to vector<16x352xbf16>
    %c0_57 = arith.constant 0 : index
    %c0_58 = arith.constant 0 : index
    %219 = vector.load %arg14[%c0_57, %c0_58] : memref<352x128xbf16, #tpu.memory_space<vmem>>, vector<352x128xbf16>
    %cst_59 = arith.constant dense<0.000000e+00> : vector<16x128xf32>
    %220 = tpu.matmul %218, %219, %cst_59 {dimension_numbers = #tpu.dot_dimension_numbers<[1], [0], [0], [1], [0, 0, 1, 1], [], []>} : vector<16x352xbf16>, vector<352x128xbf16>, vector<16x128xf32> -> vector<16x128xf32>
    %221 = arith.addf %189, %220 : vector<16x128xf32>
    %c0_60 = arith.constant 0 : index
    %c0_61 = arith.constant 0 : index
    %222 = vector.load %arg15[%c0_60, %c0_61] : memref<1x128xf32, #tpu.memory_space<vmem>>, vector<1x128xf32>
    %223 = vector.broadcast %222 : vector<1x128xf32> to vector<16x128xf32>
    %224 = arith.addf %221, %223 : vector<16x128xf32>
    %c0_62 = arith.constant 0 : index
    %c0_63 = arith.constant 0 : index
    %225 = vector.load %arg16[%c0_62, %c0_63] : memref<1x128xf32, #tpu.memory_space<vmem>>, vector<1x128xf32>
    %226 = arith.mulf %224, %224 : vector<16x128xf32>
    %cst_64 = arith.constant dense<0.000000e+00> : vector<16xf32>
    %227 = vector.multi_reduction <add>, %226, %cst_64 [1] : vector<16x128xf32> to vector<16xf32>
    %228 = vector.shape_cast %227 : vector<16xf32> to vector<16x1xf32>
    %cst_65 = arith.constant 1.280000e+02 : f32
    %229 = vector.broadcast %cst_65 : f32 to vector<16x1xf32>
    %230 = arith.divf %228, %229 : vector<16x1xf32>
    %cst_66 = arith.constant 9.99999974E-6 : f32
    %231 = vector.broadcast %cst_66 : f32 to vector<16x1xf32>
    %232 = arith.addf %230, %231 : vector<16x1xf32>
    %233 = math.rsqrt %232 : vector<16x1xf32>
    %234 = vector.broadcast %233 : vector<16x1xf32> to vector<16x128xf32>
    %235 = arith.mulf %224, %234 : vector<16x128xf32>
    %236 = vector.broadcast %225 : vector<1x128xf32> to vector<16x128xf32>
    %237 = arith.mulf %235, %236 : vector<16x128xf32>
    %238 = arith.truncf %237 : vector<16x128xf32> to vector<16x128xbf16>
    %c0_67 = arith.constant 0 : index
    %c0_68 = arith.constant 0 : index
    %239 = vector.load %arg17[%c0_67, %c0_68] : memref<128x384xbf16, #tpu.memory_space<vmem>>, vector<128x384xbf16>
    %cst_69 = arith.constant dense<0.000000e+00> : vector<16x384xf32>
    %240 = tpu.matmul %238, %239, %cst_69 {dimension_numbers = #tpu.dot_dimension_numbers<[1], [0], [0], [1], [0, 0, 1, 1], [], []>} : vector<16x128xbf16>, vector<128x384xbf16>, vector<16x384xf32> -> vector<16x384xf32>
    %c0_70 = arith.constant 0 : index
    %c0_71 = arith.constant 0 : index
    %241 = vector.load %arg18[%c0_70, %c0_71] : memref<1x384xf32, #tpu.memory_space<vmem>>, vector<1x384xf32>
    %242 = vector.broadcast %241 : vector<1x384xf32> to vector<16x384xf32>
    %243 = arith.addf %240, %242 : vector<16x384xf32>
    %244 = vector.extract_strided_slice %243 {offsets = [0, 0], sizes = [16, 32], strides = [1, 1]} : vector<16x384xf32> to vector<16x32xf32>
    %245 = vector.extract_strided_slice %243 {offsets = [0, 128], sizes = [16, 32], strides = [1, 1]} : vector<16x384xf32> to vector<16x32xf32>
    %246 = vector.extract_strided_slice %243 {offsets = [0, 256], sizes = [16, 32], strides = [1, 1]} : vector<16x384xf32> to vector<16x32xf32>
    %247 = vector.extract_strided_slice %244 {offsets = [0, 0], sizes = [16, 16], strides = [1, 1]} : vector<16x32xf32> to vector<16x16xf32>
    %248 = vector.extract_strided_slice %244 {offsets = [0, 16], sizes = [16, 16], strides = [1, 1]} : vector<16x32xf32> to vector<16x16xf32>
    %249 = vector.extract_strided_slice %245 {offsets = [0, 0], sizes = [16, 16], strides = [1, 1]} : vector<16x32xf32> to vector<16x16xf32>
    %250 = vector.extract_strided_slice %245 {offsets = [0, 16], sizes = [16, 16], strides = [1, 1]} : vector<16x32xf32> to vector<16x16xf32>
    %251 = arith.mulf %247, %2 : vector<16x16xf32>
    %252 = arith.mulf %248, %3 : vector<16x16xf32>
    %253 = arith.subf %251, %252 : vector<16x16xf32>
    %254 = arith.mulf %247, %3 : vector<16x16xf32>
    %255 = arith.mulf %248, %2 : vector<16x16xf32>
    %256 = arith.addf %254, %255 : vector<16x16xf32>
    %257 = tpu.concatenate %253, %256 in 1 : vector<16x16xf32>, vector<16x16xf32> -> vector<16x32xf32>
    %258 = arith.mulf %249, %2 : vector<16x16xf32>
    %259 = arith.mulf %250, %3 : vector<16x16xf32>
    %260 = arith.subf %258, %259 : vector<16x16xf32>
    %261 = arith.mulf %249, %3 : vector<16x16xf32>
    %262 = arith.mulf %250, %2 : vector<16x16xf32>
    %263 = arith.addf %261, %262 : vector<16x16xf32>
    %264 = tpu.concatenate %260, %263 in 1 : vector<16x16xf32>, vector<16x16xf32> -> vector<16x32xf32>
    %265 = arith.truncf %257 : vector<16x32xf32> to vector<16x32xbf16>
    %266 = arith.truncf %264 : vector<16x32xf32> to vector<16x32xbf16>
    %cst_72 = arith.constant dense<0.000000e+00> : vector<16x16xf32>
    %267 = tpu.matmul %265, %266, %cst_72 {dimension_numbers = #tpu.dot_dimension_numbers<[1], [1], [0], [0], [0, 0, 1, 0], [], []>} : vector<16x32xbf16>, vector<16x32xbf16>, vector<16x16xf32> -> vector<16x16xf32>
    %cst_73 = arith.constant 0.176776692 : f32
    %268 = vector.broadcast %cst_73 : f32 to vector<16x16xf32>
    %269 = arith.mulf %267, %268 : vector<16x16xf32>
    %cst_74 = arith.constant dense<0xFF800000> : vector<16xf32>
    %270 = vector.multi_reduction <maximumf>, %269, %cst_74 [1] : vector<16x16xf32> to vector<16xf32>
    %271 = vector.shape_cast %270 : vector<16xf32> to vector<16x1xf32>
    %272 = vector.broadcast %271 : vector<16x1xf32> to vector<16x16xf32>
    %273 = arith.subf %269, %272 : vector<16x16xf32>
    %274 = math.exp %273 : vector<16x16xf32>
    %cst_75 = arith.constant dense<0.000000e+00> : vector<16xf32>
    %275 = vector.multi_reduction <add>, %274, %cst_75 [1] : vector<16x16xf32> to vector<16xf32>
    %276 = vector.shape_cast %275 : vector<16xf32> to vector<16x1xf32>
    %277 = tpu.reciprocal %276 {approx = true} : vector<16x1xf32> -> vector<16x1xf32>
    %278 = vector.broadcast %277 : vector<16x1xf32> to vector<16x16xf32>
    %279 = arith.mulf %274, %278 : vector<16x16xf32>
    %280 = arith.truncf %279 : vector<16x16xf32> to vector<16x16xbf16>
    %281 = arith.truncf %246 : vector<16x32xf32> to vector<16x32xbf16>
    %cst_76 = arith.constant dense<0.000000e+00> : vector<16x32xf32>
    %282 = tpu.matmul %280, %281, %cst_76 {dimension_numbers = #tpu.dot_dimension_numbers<[1], [0], [0], [1], [0, 0, 1, 1], [], []>} : vector<16x16xbf16>, vector<16x32xbf16>, vector<16x32xf32> -> vector<16x32xf32>
    %283 = vector.extract_strided_slice %243 {offsets = [0, 32], sizes = [16, 32], strides = [1, 1]} : vector<16x384xf32> to vector<16x32xf32>
    %284 = vector.extract_strided_slice %243 {offsets = [0, 160], sizes = [16, 32], strides = [1, 1]} : vector<16x384xf32> to vector<16x32xf32>
    %285 = vector.extract_strided_slice %243 {offsets = [0, 288], sizes = [16, 32], strides = [1, 1]} : vector<16x384xf32> to vector<16x32xf32>
    %286 = vector.extract_strided_slice %283 {offsets = [0, 0], sizes = [16, 16], strides = [1, 1]} : vector<16x32xf32> to vector<16x16xf32>
    %287 = vector.extract_strided_slice %283 {offsets = [0, 16], sizes = [16, 16], strides = [1, 1]} : vector<16x32xf32> to vector<16x16xf32>
    %288 = vector.extract_strided_slice %284 {offsets = [0, 0], sizes = [16, 16], strides = [1, 1]} : vector<16x32xf32> to vector<16x16xf32>
    %289 = vector.extract_strided_slice %284 {offsets = [0, 16], sizes = [16, 16], strides = [1, 1]} : vector<16x32xf32> to vector<16x16xf32>
    %290 = arith.mulf %286, %2 : vector<16x16xf32>
    %291 = arith.mulf %287, %3 : vector<16x16xf32>
    %292 = arith.subf %290, %291 : vector<16x16xf32>
    %293 = arith.mulf %286, %3 : vector<16x16xf32>
    %294 = arith.mulf %287, %2 : vector<16x16xf32>
    %295 = arith.addf %293, %294 : vector<16x16xf32>
    %296 = tpu.concatenate %292, %295 in 1 : vector<16x16xf32>, vector<16x16xf32> -> vector<16x32xf32>
    %297 = arith.mulf %288, %2 : vector<16x16xf32>
    %298 = arith.mulf %289, %3 : vector<16x16xf32>
    %299 = arith.subf %297, %298 : vector<16x16xf32>
    %300 = arith.mulf %288, %3 : vector<16x16xf32>
    %301 = arith.mulf %289, %2 : vector<16x16xf32>
    %302 = arith.addf %300, %301 : vector<16x16xf32>
    %303 = tpu.concatenate %299, %302 in 1 : vector<16x16xf32>, vector<16x16xf32> -> vector<16x32xf32>
    %304 = arith.truncf %296 : vector<16x32xf32> to vector<16x32xbf16>
    %305 = arith.truncf %303 : vector<16x32xf32> to vector<16x32xbf16>
    %cst_77 = arith.constant dense<0.000000e+00> : vector<16x16xf32>
    %306 = tpu.matmul %304, %305, %cst_77 {dimension_numbers = #tpu.dot_dimension_numbers<[1], [1], [0], [0], [0, 0, 1, 0], [], []>} : vector<16x32xbf16>, vector<16x32xbf16>, vector<16x16xf32> -> vector<16x16xf32>
    %cst_78 = arith.constant 0.176776692 : f32
    %307 = vector.broadcast %cst_78 : f32 to vector<16x16xf32>
    %308 = arith.mulf %306, %307 : vector<16x16xf32>
    %cst_79 = arith.constant dense<0xFF800000> : vector<16xf32>
    %309 = vector.multi_reduction <maximumf>, %308, %cst_79 [1] : vector<16x16xf32> to vector<16xf32>
    %310 = vector.shape_cast %309 : vector<16xf32> to vector<16x1xf32>
    %311 = vector.broadcast %310 : vector<16x1xf32> to vector<16x16xf32>
    %312 = arith.subf %308, %311 : vector<16x16xf32>
    %313 = math.exp %312 : vector<16x16xf32>
    %cst_80 = arith.constant dense<0.000000e+00> : vector<16xf32>
    %314 = vector.multi_reduction <add>, %313, %cst_80 [1] : vector<16x16xf32> to vector<16xf32>
    %315 = vector.shape_cast %314 : vector<16xf32> to vector<16x1xf32>
    %316 = tpu.reciprocal %315 {approx = true} : vector<16x1xf32> -> vector<16x1xf32>
    %317 = vector.broadcast %316 : vector<16x1xf32> to vector<16x16xf32>
    %318 = arith.mulf %313, %317 : vector<16x16xf32>
    %319 = arith.truncf %318 : vector<16x16xf32> to vector<16x16xbf16>
    %320 = arith.truncf %285 : vector<16x32xf32> to vector<16x32xbf16>
    %cst_81 = arith.constant dense<0.000000e+00> : vector<16x32xf32>
    %321 = tpu.matmul %319, %320, %cst_81 {dimension_numbers = #tpu.dot_dimension_numbers<[1], [0], [0], [1], [0, 0, 1, 1], [], []>} : vector<16x16xbf16>, vector<16x32xbf16>, vector<16x32xf32> -> vector<16x32xf32>
    %322 = vector.extract_strided_slice %243 {offsets = [0, 64], sizes = [16, 32], strides = [1, 1]} : vector<16x384xf32> to vector<16x32xf32>
    %323 = vector.extract_strided_slice %243 {offsets = [0, 192], sizes = [16, 32], strides = [1, 1]} : vector<16x384xf32> to vector<16x32xf32>
    %324 = vector.extract_strided_slice %243 {offsets = [0, 320], sizes = [16, 32], strides = [1, 1]} : vector<16x384xf32> to vector<16x32xf32>
    %325 = vector.extract_strided_slice %322 {offsets = [0, 0], sizes = [16, 16], strides = [1, 1]} : vector<16x32xf32> to vector<16x16xf32>
    %326 = vector.extract_strided_slice %322 {offsets = [0, 16], sizes = [16, 16], strides = [1, 1]} : vector<16x32xf32> to vector<16x16xf32>
    %327 = vector.extract_strided_slice %323 {offsets = [0, 0], sizes = [16, 16], strides = [1, 1]} : vector<16x32xf32> to vector<16x16xf32>
    %328 = vector.extract_strided_slice %323 {offsets = [0, 16], sizes = [16, 16], strides = [1, 1]} : vector<16x32xf32> to vector<16x16xf32>
    %329 = arith.mulf %325, %2 : vector<16x16xf32>
    %330 = arith.mulf %326, %3 : vector<16x16xf32>
    %331 = arith.subf %329, %330 : vector<16x16xf32>
    %332 = arith.mulf %325, %3 : vector<16x16xf32>
    %333 = arith.mulf %326, %2 : vector<16x16xf32>
    %334 = arith.addf %332, %333 : vector<16x16xf32>
    %335 = tpu.concatenate %331, %334 in 1 : vector<16x16xf32>, vector<16x16xf32> -> vector<16x32xf32>
    %336 = arith.mulf %327, %2 : vector<16x16xf32>
    %337 = arith.mulf %328, %3 : vector<16x16xf32>
    %338 = arith.subf %336, %337 : vector<16x16xf32>
    %339 = arith.mulf %327, %3 : vector<16x16xf32>
    %340 = arith.mulf %328, %2 : vector<16x16xf32>
    %341 = arith.addf %339, %340 : vector<16x16xf32>
    %342 = tpu.concatenate %338, %341 in 1 : vector<16x16xf32>, vector<16x16xf32> -> vector<16x32xf32>
    %343 = arith.truncf %335 : vector<16x32xf32> to vector<16x32xbf16>
    %344 = arith.truncf %342 : vector<16x32xf32> to vector<16x32xbf16>
    %cst_82 = arith.constant dense<0.000000e+00> : vector<16x16xf32>
    %345 = tpu.matmul %343, %344, %cst_82 {dimension_numbers = #tpu.dot_dimension_numbers<[1], [1], [0], [0], [0, 0, 1, 0], [], []>} : vector<16x32xbf16>, vector<16x32xbf16>, vector<16x16xf32> -> vector<16x16xf32>
    %cst_83 = arith.constant 0.176776692 : f32
    %346 = vector.broadcast %cst_83 : f32 to vector<16x16xf32>
    %347 = arith.mulf %345, %346 : vector<16x16xf32>
    %cst_84 = arith.constant dense<0xFF800000> : vector<16xf32>
    %348 = vector.multi_reduction <maximumf>, %347, %cst_84 [1] : vector<16x16xf32> to vector<16xf32>
    %349 = vector.shape_cast %348 : vector<16xf32> to vector<16x1xf32>
    %350 = vector.broadcast %349 : vector<16x1xf32> to vector<16x16xf32>
    %351 = arith.subf %347, %350 : vector<16x16xf32>
    %352 = math.exp %351 : vector<16x16xf32>
    %cst_85 = arith.constant dense<0.000000e+00> : vector<16xf32>
    %353 = vector.multi_reduction <add>, %352, %cst_85 [1] : vector<16x16xf32> to vector<16xf32>
    %354 = vector.shape_cast %353 : vector<16xf32> to vector<16x1xf32>
    %355 = tpu.reciprocal %354 {approx = true} : vector<16x1xf32> -> vector<16x1xf32>
    %356 = vector.broadcast %355 : vector<16x1xf32> to vector<16x16xf32>
    %357 = arith.mulf %352, %356 : vector<16x16xf32>
    %358 = arith.truncf %357 : vector<16x16xf32> to vector<16x16xbf16>
    %359 = arith.truncf %324 : vector<16x32xf32> to vector<16x32xbf16>
    %cst_86 = arith.constant dense<0.000000e+00> : vector<16x32xf32>
    %360 = tpu.matmul %358, %359, %cst_86 {dimension_numbers = #tpu.dot_dimension_numbers<[1], [0], [0], [1], [0, 0, 1, 1], [], []>} : vector<16x16xbf16>, vector<16x32xbf16>, vector<16x32xf32> -> vector<16x32xf32>
    %361 = vector.extract_strided_slice %243 {offsets = [0, 96], sizes = [16, 32], strides = [1, 1]} : vector<16x384xf32> to vector<16x32xf32>
    %362 = vector.extract_strided_slice %243 {offsets = [0, 224], sizes = [16, 32], strides = [1, 1]} : vector<16x384xf32> to vector<16x32xf32>
    %363 = vector.extract_strided_slice %243 {offsets = [0, 352], sizes = [16, 32], strides = [1, 1]} : vector<16x384xf32> to vector<16x32xf32>
    %364 = vector.extract_strided_slice %361 {offsets = [0, 0], sizes = [16, 16], strides = [1, 1]} : vector<16x32xf32> to vector<16x16xf32>
    %365 = vector.extract_strided_slice %361 {offsets = [0, 16], sizes = [16, 16], strides = [1, 1]} : vector<16x32xf32> to vector<16x16xf32>
    %366 = vector.extract_strided_slice %362 {offsets = [0, 0], sizes = [16, 16], strides = [1, 1]} : vector<16x32xf32> to vector<16x16xf32>
    %367 = vector.extract_strided_slice %362 {offsets = [0, 16], sizes = [16, 16], strides = [1, 1]} : vector<16x32xf32> to vector<16x16xf32>
    %368 = arith.mulf %364, %2 : vector<16x16xf32>
    %369 = arith.mulf %365, %3 : vector<16x16xf32>
    %370 = arith.subf %368, %369 : vector<16x16xf32>
    %371 = arith.mulf %364, %3 : vector<16x16xf32>
    %372 = arith.mulf %365, %2 : vector<16x16xf32>
    %373 = arith.addf %371, %372 : vector<16x16xf32>
    %374 = tpu.concatenate %370, %373 in 1 : vector<16x16xf32>, vector<16x16xf32> -> vector<16x32xf32>
    %375 = arith.mulf %366, %2 : vector<16x16xf32>
    %376 = arith.mulf %367, %3 : vector<16x16xf32>
    %377 = arith.subf %375, %376 : vector<16x16xf32>
    %378 = arith.mulf %366, %3 : vector<16x16xf32>
    %379 = arith.mulf %367, %2 : vector<16x16xf32>
    %380 = arith.addf %378, %379 : vector<16x16xf32>
    %381 = tpu.concatenate %377, %380 in 1 : vector<16x16xf32>, vector<16x16xf32> -> vector<16x32xf32>
    %382 = arith.truncf %374 : vector<16x32xf32> to vector<16x32xbf16>
    %383 = arith.truncf %381 : vector<16x32xf32> to vector<16x32xbf16>
    %cst_87 = arith.constant dense<0.000000e+00> : vector<16x16xf32>
    %384 = tpu.matmul %382, %383, %cst_87 {dimension_numbers = #tpu.dot_dimension_numbers<[1], [1], [0], [0], [0, 0, 1, 0], [], []>} : vector<16x32xbf16>, vector<16x32xbf16>, vector<16x16xf32> -> vector<16x16xf32>
    %cst_88 = arith.constant 0.176776692 : f32
    %385 = vector.broadcast %cst_88 : f32 to vector<16x16xf32>
    %386 = arith.mulf %384, %385 : vector<16x16xf32>
    %cst_89 = arith.constant dense<0xFF800000> : vector<16xf32>
    %387 = vector.multi_reduction <maximumf>, %386, %cst_89 [1] : vector<16x16xf32> to vector<16xf32>
    %388 = vector.shape_cast %387 : vector<16xf32> to vector<16x1xf32>
    %389 = vector.broadcast %388 : vector<16x1xf32> to vector<16x16xf32>
    %390 = arith.subf %386, %389 : vector<16x16xf32>
    %391 = math.exp %390 : vector<16x16xf32>
    %cst_90 = arith.constant dense<0.000000e+00> : vector<16xf32>
    %392 = vector.multi_reduction <add>, %391, %cst_90 [1] : vector<16x16xf32> to vector<16xf32>
    %393 = vector.shape_cast %392 : vector<16xf32> to vector<16x1xf32>
    %394 = tpu.reciprocal %393 {approx = true} : vector<16x1xf32> -> vector<16x1xf32>
    %395 = vector.broadcast %394 : vector<16x1xf32> to vector<16x16xf32>
    %396 = arith.mulf %391, %395 : vector<16x16xf32>
    %397 = arith.truncf %396 : vector<16x16xf32> to vector<16x16xbf16>
    %398 = arith.truncf %363 : vector<16x32xf32> to vector<16x32xbf16>
    %cst_91 = arith.constant dense<0.000000e+00> : vector<16x32xf32>
    %399 = tpu.matmul %397, %398, %cst_91 {dimension_numbers = #tpu.dot_dimension_numbers<[1], [0], [0], [1], [0, 0, 1, 1], [], []>} : vector<16x16xbf16>, vector<16x32xbf16>, vector<16x32xf32> -> vector<16x32xf32>
    %400 = tpu.concatenate %282, %321, %360, %399 in 1 : vector<16x32xf32>, vector<16x32xf32>, vector<16x32xf32>, vector<16x32xf32> -> vector<16x128xf32>
    %401 = arith.truncf %400 : vector<16x128xf32> to vector<16x128xbf16>
    %c0_92 = arith.constant 0 : index
    %c0_93 = arith.constant 0 : index
    %402 = vector.load %arg19[%c0_92, %c0_93] : memref<128x128xbf16, #tpu.memory_space<vmem>>, vector<128x128xbf16>
    %cst_94 = arith.constant dense<0.000000e+00> : vector<16x128xf32>
    %403 = tpu.matmul %401, %402, %cst_94 {dimension_numbers = #tpu.dot_dimension_numbers<[1], [0], [0], [1], [0, 0, 1, 1], [], []>} : vector<16x128xbf16>, vector<128x128xbf16>, vector<16x128xf32> -> vector<16x128xf32>
    %404 = arith.addf %224, %403 : vector<16x128xf32>
    %c0_95 = arith.constant 0 : index
    %c0_96 = arith.constant 0 : index
    %405 = vector.load %arg20[%c0_95, %c0_96] : memref<1x128xf32, #tpu.memory_space<vmem>>, vector<1x128xf32>
    %406 = arith.mulf %404, %404 : vector<16x128xf32>
    %cst_97 = arith.constant dense<0.000000e+00> : vector<16xf32>
    %407 = vector.multi_reduction <add>, %406, %cst_97 [1] : vector<16x128xf32> to vector<16xf32>
    %408 = vector.shape_cast %407 : vector<16xf32> to vector<16x1xf32>
    %cst_98 = arith.constant 1.280000e+02 : f32
    %409 = vector.broadcast %cst_98 : f32 to vector<16x1xf32>
    %410 = arith.divf %408, %409 : vector<16x1xf32>
    %cst_99 = arith.constant 9.99999974E-6 : f32
    %411 = vector.broadcast %cst_99 : f32 to vector<16x1xf32>
    %412 = arith.addf %410, %411 : vector<16x1xf32>
    %413 = math.rsqrt %412 : vector<16x1xf32>
    %414 = vector.broadcast %413 : vector<16x1xf32> to vector<16x128xf32>
    %415 = arith.mulf %404, %414 : vector<16x128xf32>
    %416 = vector.broadcast %405 : vector<1x128xf32> to vector<16x128xf32>
    %417 = arith.mulf %415, %416 : vector<16x128xf32>
    %418 = arith.truncf %417 : vector<16x128xf32> to vector<16x128xbf16>
    %c0_100 = arith.constant 0 : index
    %c0_101 = arith.constant 0 : index
    %419 = vector.load %arg21[%c0_100, %c0_101] : memref<128x352xbf16, #tpu.memory_space<vmem>>, vector<128x352xbf16>
    %cst_102 = arith.constant dense<0.000000e+00> : vector<16x352xf32>
    %420 = tpu.matmul %418, %419, %cst_102 {dimension_numbers = #tpu.dot_dimension_numbers<[1], [0], [0], [1], [0, 0, 1, 1], [], []>} : vector<16x128xbf16>, vector<128x352xbf16>, vector<16x352xf32> -> vector<16x352xf32>
    %c0_103 = arith.constant 0 : index
    %c0_104 = arith.constant 0 : index
    %421 = vector.load %arg22[%c0_103, %c0_104] : memref<128x352xbf16, #tpu.memory_space<vmem>>, vector<128x352xbf16>
    %cst_105 = arith.constant dense<0.000000e+00> : vector<16x352xf32>
    %422 = tpu.matmul %418, %421, %cst_105 {dimension_numbers = #tpu.dot_dimension_numbers<[1], [0], [0], [1], [0, 0, 1, 1], [], []>} : vector<16x128xbf16>, vector<128x352xbf16>, vector<16x352xf32> -> vector<16x352xf32>
    %c0_106 = arith.constant 0 : index
    %c0_107 = arith.constant 0 : index
    %423 = vector.load %arg23[%c0_106, %c0_107] : memref<1x352xf32, #tpu.memory_space<vmem>>, vector<1x352xf32>
    %424 = vector.broadcast %423 : vector<1x352xf32> to vector<16x352xf32>
    %425 = arith.addf %422, %424 : vector<16x352xf32>
    %426 = arith.negf %420 : vector<16x352xf32>
    %427 = math.exp %426 : vector<16x352xf32>
    %cst_108 = arith.constant 1.000000e+00 : f32
    %428 = vector.broadcast %cst_108 : f32 to vector<16x352xf32>
    %429 = arith.addf %428, %427 : vector<16x352xf32>
    %430 = arith.divf %428, %429 : vector<16x352xf32>
    %431 = arith.mulf %420, %430 : vector<16x352xf32>
    %432 = arith.mulf %431, %425 : vector<16x352xf32>
    %433 = arith.truncf %432 : vector<16x352xf32> to vector<16x352xbf16>
    %c0_109 = arith.constant 0 : index
    %c0_110 = arith.constant 0 : index
    %434 = vector.load %arg24[%c0_109, %c0_110] : memref<352x128xbf16, #tpu.memory_space<vmem>>, vector<352x128xbf16>
    %cst_111 = arith.constant dense<0.000000e+00> : vector<16x128xf32>
    %435 = tpu.matmul %433, %434, %cst_111 {dimension_numbers = #tpu.dot_dimension_numbers<[1], [0], [0], [1], [0, 0, 1, 1], [], []>} : vector<16x352xbf16>, vector<352x128xbf16>, vector<16x128xf32> -> vector<16x128xf32>
    %436 = arith.addf %404, %435 : vector<16x128xf32>
    %c0_112 = arith.constant 0 : index
    %c0_113 = arith.constant 0 : index
    %437 = vector.load %arg25[%c0_112, %c0_113] : memref<1x128xf32, #tpu.memory_space<vmem>>, vector<1x128xf32>
    %438 = vector.broadcast %437 : vector<1x128xf32> to vector<16x128xf32>
    %439 = arith.addf %436, %438 : vector<16x128xf32>
    %c0_114 = arith.constant 0 : index
    %c0_115 = arith.constant 0 : index
    %c0_116 = arith.constant 0 : index
    %440 = vector.load %arg26[%c0_114, %c0_115, %c0_116] : memref<1x16x128xf32, #tpu.memory_space<vmem>>, vector<1x16x128xf32>
    %441 = vector.shape_cast %440 : vector<1x16x128xf32> to vector<16x128xf32>
    %442 = vector.shape_cast %439 : vector<16x128xf32> to vector<1x16x128xf32>
    tpu.vector_store %arg26[%c0_114, %c0_115, %c0_116], %442 {strides = array<i32>} : memref<1x16x128xf32, #tpu.memory_space<vmem>>, vector<1x16x128xf32>,
    return
  }
  func.func @transform_0(%arg0: i32) -> (i32, i32, i32) {
    %c0_i32 = arith.constant 0 : i32
    %c0_i32_0 = arith.constant 0 : i32
    %c0_i32_1 = arith.constant 0 : i32
    return %arg0, %c0_i32, %c0_i32_0 : i32, i32, i32
  }
  func.func @transform_1(%arg0: i32) -> (i32, i32) {
    %c0_i32 = arith.constant 0 : i32
    %c0_i32_0 = arith.constant 0 : i32
    %c0_i32_1 = arith.constant 0 : i32
    return %c0_i32, %c0_i32_0 : i32, i32
  }
  func.func @transform_2(%arg0: i32) -> (i32, i32) {
    %c0_i32 = arith.constant 0 : i32
    %c0_i32_0 = arith.constant 0 : i32
    %c0_i32_1 = arith.constant 0 : i32
    return %c0_i32, %c0_i32_0 : i32, i32
  }
  func.func @transform_3(%arg0: i32) -> (i32, i32) {
    %c0_i32 = arith.constant 0 : i32
    %c0_i32_0 = arith.constant 0 : i32
    %c0_i32_1 = arith.constant 0 : i32
    return %c0_i32, %c0_i32_0 : i32, i32
  }
  func.func @transform_4(%arg0: i32) -> (i32, i32) {
    %c0_i32 = arith.constant 0 : i32
    %c0_i32_0 = arith.constant 0 : i32
    %c0_i32_1 = arith.constant 0 : i32
    return %c0_i32, %c0_i32_0 : i32, i32
  }
  func.func @transform_5(%arg0: i32) -> (i32, i32) {
    %c0_i32 = arith.constant 0 : i32
    %c0_i32_0 = arith.constant 0 : i32
    %c0_i32_1 = arith.constant 0 : i32
    return %c0_i32, %c0_i32_0 : i32, i32
  }
  func.func @transform_6(%arg0: i32) -> (i32, i32) {
    %c0_i32 = arith.constant 0 : i32
    %c0_i32_0 = arith.constant 0 : i32
    %c0_i32_1 = arith.constant 0 : i32
    return %c0_i32, %c0_i32_0 : i32, i32
  }
  func.func @transform_7(%arg0: i32) -> (i32, i32) {
    %c0_i32 = arith.constant 0 : i32
    %c0_i32_0 = arith.constant 0 : i32
    %c0_i32_1 = arith.constant 0 : i32
    return %c0_i32, %c0_i32_0 : i32, i32
  }
  func.func @transform_8(%arg0: i32) -> (i32, i32) {
    %c0_i32 = arith.constant 0 : i32
    %c0_i32_0 = arith.constant 0 : i32
    %c0_i32_1 = arith.constant 0 : i32
    return %c0_i32, %c0_i32_0 : i32, i32
  }
  func.func @transform_9(%arg0: i32) -> (i32, i32) {
    %c0_i32 = arith.constant 0 : i32
    %c0_i32_0 = arith.constant 0 : i32
    %c0_i32_1 = arith.constant 0 : i32
    return %c0_i32, %c0_i32_0 : i32, i32
  }
  func.func @transform_10(%arg0: i32) -> (i32, i32) {
    %c0_i32 = arith.constant 0 : i32
    %c0_i32_0 = arith.constant 0 : i32
    %c0_i32_1 = arith.constant 0 : i32
    return %c0_i32, %c0_i32_0 : i32, i32
  }
  func.func @transform_11(%arg0: i32) -> (i32, i32) {
    %c0_i32 = arith.constant 0 : i32
    %c0_i32_0 = arith.constant 0 : i32
    %c0_i32_1 = arith.constant 0 : i32
    return %c0_i32, %c0_i32_0 : i32, i32
  }
  func.func @transform_12(%arg0: i32) -> (i32, i32) {
    %c0_i32 = arith.constant 0 : i32
    %c0_i32_0 = arith.constant 0 : i32
    %c0_i32_1 = arith.constant 0 : i32
    return %c0_i32, %c0_i32_0 : i32, i32
  }
  func.func @transform_13(%arg0: i32) -> (i32, i32) {
    %c0_i32 = arith.constant 0 : i32
    %c0_i32_0 = arith.constant 0 : i32
    %c0_i32_1 = arith.constant 0 : i32
    return %c0_i32, %c0_i32_0 : i32, i32
  }
  func.func @transform_14(%arg0: i32) -> (i32, i32) {
    %c0_i32 = arith.constant 0 : i32
    %c0_i32_0 = arith.constant 0 : i32
    %c0_i32_1 = arith.constant 0 : i32
    return %c0_i32, %c0_i32_0 : i32, i32
  }
  func.func @transform_15(%arg0: i32) -> (i32, i32) {
    %c0_i32 = arith.constant 0 : i32
    %c0_i32_0 = arith.constant 0 : i32
    %c0_i32_1 = arith.constant 0 : i32
    return %c0_i32, %c0_i32_0 : i32, i32
  }
  func.func @transform_16(%arg0: i32) -> (i32, i32) {
    %c0_i32 = arith.constant 0 : i32
    %c0_i32_0 = arith.constant 0 : i32
    %c0_i32_1 = arith.constant 0 : i32
    return %c0_i32, %c0_i32_0 : i32, i32
  }
  func.func @transform_17(%arg0: i32) -> (i32, i32) {
    %c0_i32 = arith.constant 0 : i32
    %c0_i32_0 = arith.constant 0 : i32
    %c0_i32_1 = arith.constant 0 : i32
    return %c0_i32, %c0_i32_0 : i32, i32
  }
  func.func @transform_18(%arg0: i32) -> (i32, i32) {
    %c0_i32 = arith.constant 0 : i32
    %c0_i32_0 = arith.constant 0 : i32
    %c0_i32_1 = arith.constant 0 : i32
    return %c0_i32, %c0_i32_0 : i32, i32
  }
  func.func @transform_19(%arg0: i32) -> (i32, i32) {
    %c0_i32 = arith.constant 0 : i32
    %c0_i32_0 = arith.constant 0 : i32
    %c0_i32_1 = arith.constant 0 : i32
    return %c0_i32, %c0_i32_0 : i32, i32
  }
  func.func @transform_20(%arg0: i32) -> (i32, i32) {
    %c0_i32 = arith.constant 0 : i32
    %c0_i32_0 = arith.constant 0 : i32
    %c0_i32_1 = arith.constant 0 : i32
    return %c0_i32, %c0_i32_0 : i32, i32
  }
  func.func @transform_21(%arg0: i32) -> (i32, i32) {
    %c0_i32 = arith.constant 0 : i32
    %c0_i32_0 = arith.constant 0 : i32
    %c0_i32_1 = arith.constant 0 : i32
    return %c0_i32, %c0_i32_0 : i32, i32
  }
  func.func @transform_22(%arg0: i32) -> (i32, i32) {
    %c0_i32 = arith.constant 0 : i32
    %c0_i32_0 = arith.constant 0 : i32
    %c0_i32_1 = arith.constant 0 : i32
    return %c0_i32, %c0_i32_0 : i32, i32
  }
  func.func @transform_23(%arg0: i32) -> (i32, i32) {
    %c0_i32 = arith.constant 0 : i32
    %c0_i32_0 = arith.constant 0 : i32
    %c0_i32_1 = arith.constant 0 : i32
    return %c0_i32, %c0_i32_0 : i32, i32
  }
  func.func @transform_24(%arg0: i32) -> (i32, i32) {
    %c0_i32 = arith.constant 0 : i32
    %c0_i32_0 = arith.constant 0 : i32
    %c0_i32_1 = arith.constant 0 : i32
    return %c0_i32, %c0_i32_0 : i32, i32
  }
  func.func @transform_25(%arg0: i32) -> (i32, i32, i32) {
    %c0_i32 = arith.constant 0 : i32
    %c0_i32_0 = arith.constant 0 : i32
    %c0_i32_1 = arith.constant 0 : i32
    return %arg0, %c0_i32, %c0_i32_0 : i32, i32, i32
  }
}

</mosaic_0001>

<llo_original>
// kernel: transformer_forward.1
$region0: #{transformer_forward.1}
  #allocation0 [shape = 'u32[]', space=smem, size = 0x4, offset = 0x4, fixed_abs, tag = 'smem constant byte address 0x4 - core index']
  #allocation1 [shape = 'u32[144,128]{1,0:T(1,128)}', space=vmem, size = 0x12000, scoped, tag = 'internal scratch']
  %s0 = inlined_call_operand.vmem [shape: f32[2,16,150], index: 0, kind: input, shape index: {}]
  %s1 = inlined_call_operand.vmem [shape: bf16[150,128], index: 1, kind: input, shape index: {}]
  %s2 = inlined_call_operand.vmem [shape: f32[1,128], index: 2, kind: input, shape index: {}]
  %s3 = inlined_call_operand.vmem [shape: f32[16,16], index: 3, kind: input, shape index: {}]
  %s4 = inlined_call_operand.vmem [shape: f32[16,16], index: 4, kind: input, shape index: {}]
  %s5 = inlined_call_operand.hbm [shape: f32[1,128], index: 5, kind: input, shape index: {}]
  %s6 = inlined_call_operand.vmem [shape: bf16[128,384], index: 6, kind: input, shape index: {}]
  %s7 = inlined_call_operand.vmem [shape: f32[1,384], index: 7, kind: input, shape index: {}]
  %s8 = inlined_call_operand.vmem [shape: bf16[128,128], index: 8, kind: input, shape index: {}]
  %s9 = inlined_call_operand.hbm [shape: f32[1,128], index: 9, kind: input, shape index: {}]
  %s10 = inlined_call_operand.vmem [shape: bf16[128,352], index: 10, kind: input, shape index: {}]
  %s11 = inlined_call_operand.vmem [shape: bf16[128,352], index: 11, kind: input, shape index: {}]
  %s12 = inlined_call_operand.vmem [shape: f32[1,352], index: 12, kind: input, shape index: {}]
  %s13 = inlined_call_operand.vmem [shape: bf16[352,128], index: 13, kind: input, shape index: {}]
  %s14 = inlined_call_operand.hbm [shape: f32[1,128], index: 14, kind: input, shape index: {}]
  %s15 = inlined_call_operand.hbm [shape: f32[1,128], index: 15, kind: input, shape index: {}]
  %s16 = inlined_call_operand.vmem [shape: bf16[128,384], index: 16, kind: input, shape index: {}]
  %s17 = inlined_call_operand.vmem [shape: f32[1,384], index: 17, kind: input, shape index: {}]
  %s18 = inlined_call_operand.vmem [shape: bf16[128,128], index: 18, kind: input, shape index: {}]
  %s19 = inlined_call_operand.hbm [shape: f32[1,128], index: 19, kind: input, shape index: {}]
  %s20 = inlined_call_operand.vmem [shape: bf16[128,352], index: 20, kind: input, shape index: {}]
  %s21 = inlined_call_operand.vmem [shape: bf16[128,352], index: 21, kind: input, shape index: {}]
  %s22 = inlined_call_operand.hbm [shape: f32[1,352], index: 22, kind: input, shape index: {}]
  %s23 = inlined_call_operand.vmem [shape: bf16[352,128], index: 23, kind: input, shape index: {}]
  %s24 = inlined_call_operand.hbm [shape: f32[1,128], index: 24, kind: input, shape index: {}]
  %s25 = inlined_call_operand.vmem [shape: f32[2,16,128], index: 25, kind: output, shape index: {}]
  %s26 = sld [smem:[#allocation0]]
  $region161: #{transformer_forward.1} parent=0
    _
  %s28 = ssub.s32 1, %s26
  %s29 = scalar_select 0, %s28, %s26
  $region1: #{transformer_forward.1} parent=0
    #allocation2 [shape = 'u8[512]{0}', space=vmem, size = 0x400, scoped, tag = 'input window, operand 5, single buffered']
    #allocation3 [shape = 's32[2]{0}', space=sflag, size = 0x8, scoped, tag = 'scoped memory for transformer_forward.1']
    #allocation4 [shape = 'u8[512]{0}', space=vmem, size = 0x400, scoped, tag = 'input window, operand 9, single buffered']
    #allocation5 [shape = 's32[1]{0}', space=sflag, size = 0x4, scoped, tag = 'scoped memory for transformer_forward.1']
    #allocation6 [shape = 'u8[512]{0}', space=vmem, size = 0x400, scoped, tag = 'input window, operand 14, single buffered']
    #allocation7 [shape = 'u8[512]{0}', space=vmem, size = 0x400, scoped, tag = 'input window, operand 15, single buffered']
    #allocation8 [shape = 's32[1]{0}', space=sflag, size = 0x4, scoped, tag = 'scoped memory for transformer_forward.1']
    #allocation9 [shape = 'u8[512]{0}', space=vmem, size = 0x400, scoped, tag = 'input window, operand 19, single buffered']
    #allocation10 [shape = 'u8[1536]{0}', space=vmem, size = 0x800, scoped, tag = 'input window, operand 22, single buffered']
    #allocation11 [shape = 's32[1]{0}', space=sflag, size = 0x4, scoped, tag = 'scoped memory for transformer_forward.1']
    #allocation12 [shape = 'u8[512]{0}', space=vmem, size = 0x400, scoped, tag = 'input window, operand 24, single buffered']
    %30 = vsyncpa [#allocation3], 0
    %31 = vsyncpa [#allocation5], 0
    %32 = vsyncpa [#allocation8], 0
    %33 = vsyncpa [#allocation11], 0
    loop: start=0, step=1, limit=4
    $region2: #{transformer_forward.1} parent=1 // loop_pre_header
      _
    $region3: #{transformer_forward.1} parent=1 // loop_header
      %s35 = sphi 0, %s39
      %p36 = scmp.ge.s32.totalorder %s35, 4
      %s45 = sphi 0, %s47
      %s48 = sphi 0, %s45
      %s49 = sphi 0, %s48
      %s65 = sphi 0, %s49
      %s69 = sphi 0, %s69
      %s71 = sphi 0, %s69
      %s72 = sphi 0, %s71
      %s86 = sphi 0, %s72
      %s90 = sphi 0, %s90
      %s92 = sphi 0, %s90
      %s93 = sphi 0, %s92
      %s107 = sphi 0, %s93
      %s111 = sphi 0, %s111
      %s113 = sphi 0, %s111
      %s114 = sphi 0, %s113
      %s128 = sphi 0, %s114
      %s132 = sphi 0, %s132
      %s134 = sphi 0, %s132
      %s135 = sphi 0, %s134
      %s149 = sphi 0, %s135
      %s153 = sphi 0, %s153
      %s155 = sphi 0, %s153
      %s156 = sphi 0, %s155
      %s170 = sphi 0, %s156
      %s174 = sphi 0, %s174
      %s176 = sphi 0, %s174
      %s177 = sphi 0, %s176
      %s191 = sphi 0, %s177
      %s195 = sphi 0, %s195
      %s197 = sphi 0, %s195
      %s198 = sphi 0, %s197
      %s212 = sphi 0, %s198
      %s216 = sphi 0, %s216
      %s218 = sphi 0, %s216
      %s219 = sphi 0, %s218
      %s233 = sphi 0, %s219
      %s237 = sphi 0, %s237
      %s239 = sphi 0, %s237
      %s240 = sphi 0, %s239
      %s254 = sphi 0, %s240
      %s258 = sphi 0, %s258
      %s260 = sphi 0, %s258
      %s261 = sphi 0, %s260
      %s275 = sphi 0, %s261
      %s279 = sphi 0, %s279
      %s281 = sphi 0, %s279
      %s282 = sphi 0, %s281
      %s296 = sphi 0, %s282
      %s300 = sphi 0, %s300
      %s302 = sphi 0, %s300
      %s303 = sphi 0, %s302
      %s317 = sphi 0, %s303
      %s321 = sphi 0, %s321
      %s323 = sphi 0, %s321
      %s324 = sphi 0, %s323
      %s338 = sphi 0, %s324
      %s342 = sphi 0, %s342
      %s344 = sphi 0, %s342
      %s345 = sphi 0, %s344
      %s359 = sphi 0, %s345
      %s363 = sphi 0, %s363
      %s365 = sphi 0, %s363
      %s366 = sphi 0, %s365
      %s380 = sphi 0, %s366
      %s384 = sphi 0, %s384
      %s386 = sphi 0, %s384
      %s387 = sphi 0, %s386
      %s401 = sphi 0, %s387
      %s405 = sphi 0, %s405
      %s407 = sphi 0, %s405
      %s408 = sphi 0, %s407
      %s422 = sphi 0, %s408
      %s426 = sphi 0, %s426
      %s428 = sphi 0, %s426
      %s429 = sphi 0, %s428
      %s443 = sphi 0, %s429
      %s447 = sphi 0, %s447
      %s449 = sphi 0, %s447
      %s450 = sphi 0, %s449
      %s464 = sphi 0, %s450
      %s468 = sphi 0, %s468
      %s470 = sphi 0, %s468
      %s471 = sphi 0, %s470
      %s485 = sphi 0, %s471
      %s489 = sphi 0, %s489
      %s491 = sphi 0, %s489
      %s492 = sphi 0, %s491
      %s506 = sphi 0, %s492
      %s510 = sphi 0, %s510
      %s512 = sphi 0, %s510
      %s513 = sphi 0, %s512
      %s527 = sphi 0, %s513
      %s531 = sphi 0, %s531
      %s533 = sphi 0, %s531
      %s534 = sphi 0, %s533
      %s548 = sphi 0, %s534
      %s552 = sphi 0, %s552
      %s554 = sphi 0, %s552
      %s555 = sphi 0, %s554
      %s569 = sphi 0, %s555
      %s575 = sphi 0, %s577
      %s578 = sphi 0, %s575
      %s579 = sphi 0, %s578
      %s595 = sphi 0, %s579
    $region4: #{transformer_forward.1} parent=1 // loop_header_branch
      %38 = sbr.rel (%p36) target = $region8
    $region5: #{transformer_forward.1} parent=1 // loop_body
      %s40 = ssub.s32 %s35, 1
      %s41 = ssub.s32 %s35, 2
      %s42 = sadd.s32 %s35, 1
      %s43 = ssub.s32 %s35, %s42
      %p44 = scmp.eq.s32.totalorder %s43, 0
      %s46 = sadd.s32 %s45, 1
      %s47 = scalar_select %p44, %s45, %s46
      %p50 = pneg %p44
      %p51 = scmp.eq.s32.totalorder %s35, 1
      %p52 = por %p50, %p51
      %p53 = scmp.ne.s32.totalorder %s45, %s48
      %p54 = scmp.eq.s32.totalorder %s35, 0
      %p55 = por %p53, %p54
      %p56 = scmp.ne.s32.totalorder %s45, %s48
      %p57 = scmp.eq.s32.totalorder %s40, 1
      %p58 = por %p56, %p57
      %p59 = scmp.ne.s32.totalorder %s48, %s49
      %p60 = scmp.eq.s32.totalorder %s40, 0
      %p61 = por %p59, %p60
      %p62 = scmp.ne.s32.totalorder %s48, %s49
      %p63 = scmp.eq.s32.totalorder %s41, 1
      %p64 = por %p62, %p63
      %p66 = scmp.ne.s32.totalorder %s49, %s65
      %p67 = scmp.eq.s32.totalorder %s41, 0
      %p68 = por %p66, %p67
      %s70 = sadd.s32 %s69, 1
      %p73 = scmp.eq.s32.totalorder %s35, 1
      %p74 = scmp.ne.s32.totalorder %s69, %s71
      %p75 = scmp.eq.s32.totalorder %s35, 0
      %p76 = por %p74, %p75
      %p77 = scmp.ne.s32.totalorder %s69, %s71
      %p78 = scmp.eq.s32.totalorder %s40, 1
      %p79 = por %p77, %p78
      %p80 = scmp.ne.s32.totalorder %s71, %s72
      %p81 = scmp.eq.s32.totalorder %s40, 0
      %p82 = por %p80, %p81
      %p83 = scmp.ne.s32.totalorder %s71, %s72
      %p84 = scmp.eq.s32.totalorder %s41, 1
      %p85 = por %p83, %p84
      %p87 = scmp.ne.s32.totalorder %s72, %s86
      %p88 = scmp.eq.s32.totalorder %s41, 0
      %p89 = por %p87, %p88
      %s91 = sadd.s32 %s90, 1
      %p94 = scmp.eq.s32.totalorder %s35, 1
      %p95 = scmp.ne.s32.totalorder %s90, %s92
      %p96 = scmp.eq.s32.totalorder %s35, 0
      %p97 = por %p95, %p96
      %p98 = scmp.ne.s32.totalorder %s90, %s92
      %p99 = scmp.eq.s32.totalorder %s40, 1
      %p100 = por %p98, %p99
      %p101 = scmp.ne.s32.totalorder %s92, %s93
      %p102 = scmp.eq.s32.totalorder %s40, 0
      %p103 = por %p101, %p102
      %p104 = scmp.ne.s32.totalorder %s92, %s93
      %p105 = scmp.eq.s32.totalorder %s41, 1
      %p106 = por %p104, %p105
      %p108 = scmp.ne.s32.totalorder %s93, %s107
      %p109 = scmp.eq.s32.totalorder %s41, 0
      %p110 = por %p108, %p109
      %s112 = sadd.s32 %s111, 1
      %p115 = scmp.eq.s32.totalorder %s35, 1
      %p116 = scmp.ne.s32.totalorder %s111, %s113
      %p117 = scmp.eq.s32.totalorder %s35, 0
      %p118 = por %p116, %p117
      %p119 = scmp.ne.s32.totalorder %s111, %s113
      %p120 = scmp.eq.s32.totalorder %s40, 1
      %p121 = por %p119, %p120
      %p122 = scmp.ne.s32.totalorder %s113, %s114
      %p123 = scmp.eq.s32.totalorder %s40, 0
      %p124 = por %p122, %p123
      %p125 = scmp.ne.s32.totalorder %s113, %s114
      %p126 = scmp.eq.s32.totalorder %s41, 1
      %p127 = por %p125, %p126
      %p129 = scmp.ne.s32.totalorder %s114, %s128
      %p130 = scmp.eq.s32.totalorder %s41, 0
      %p131 = por %p129, %p130
      %s133 = sadd.s32 %s132, 1
      %p136 = scmp.eq.s32.totalorder %s35, 1
      %p137 = scmp.ne.s32.totalorder %s132, %s134
      %p138 = scmp.eq.s32.totalorder %s35, 0
      %p139 = por %p137, %p138
      %p140 = scmp.ne.s32.totalorder %s132, %s134
      %p141 = scmp.eq.s32.totalorder %s40, 1
      %p142 = por %p140, %p141
      %p143 = scmp.ne.s32.totalorder %s134, %s135
      %p144 = scmp.eq.s32.totalorder %s40, 0
      %p145 = por %p143, %p144
      %p146 = scmp.ne.s32.totalorder %s134, %s135
      %p147 = scmp.eq.s32.totalorder %s41, 1
      %p148 = por %p146, %p147
      %p150 = scmp.ne.s32.totalorder %s135, %s149
      %p151 = scmp.eq.s32.totalorder %s41, 0
      %p152 = por %p150, %p151
      %s154 = sadd.s32 %s153, 1
      %p157 = scmp.eq.s32.totalorder %s35, 1
      %p158 = scmp.ne.s32.totalorder %s153, %s155
      %p159 = scmp.eq.s32.totalorder %s35, 0
      %p160 = por %p158, %p159
      %p161 = scmp.ne.s32.totalorder %s153, %s155
      %p162 = scmp.eq.s32.totalorder %s40, 1
      %p163 = por %p161, %p162
      %p164 = scmp.ne.s32.totalorder %s155, %s156
      %p165 = scmp.eq.s32.totalorder %s40, 0
      %p166 = por %p164, %p165
      %p167 = scmp.ne.s32.totalorder %s155, %s156
      %p168 = scmp.eq.s32.totalorder %s41, 1
      %p169 = por %p167, %p168
      %p171 = scmp.ne.s32.totalorder %s156, %s170
      %p172 = scmp.eq.s32.totalorder %s41, 0
      %p173 = por %p171, %p172
      %s175 = sadd.s32 %s174, 1
      %p178 = scmp.eq.s32.totalorder %s35, 1
      %p179 = scmp.ne.s32.totalorder %s174, %s176
      %p180 = scmp.eq.s32.totalorder %s35, 0
      %p181 = por %p179, %p180
      %p182 = scmp.ne.s32.totalorder %s174, %s176
      %p183 = scmp.eq.s32.totalorder %s40, 1
      %p184 = por %p182, %p183
      %p185 = scmp.ne.s32.totalorder %s176, %s177
      %p186 = scmp.eq.s32.totalorder %s40, 0
      %p187 = por %p185, %p186
      %p188 = scmp.ne.s32.totalorder %s176, %s177
      %p189 = scmp.eq.s32.totalorder %s41, 1
      %p190 = por %p188, %p189
      %p192 = scmp.ne.s32.totalorder %s177, %s191
      %p193 = scmp.eq.s32.totalorder %s41, 0
      %p194 = por %p192, %p193
      %s196 = sadd.s32 %s195, 1
      %p199 = scmp.eq.s32.totalorder %s35, 1
      %p200 = scmp.ne.s32.totalorder %s195, %s197
      %p201 = scmp.eq.s32.totalorder %s35, 0
      %p202 = por %p200, %p201
      %p203 = scmp.ne.s32.totalorder %s195, %s197
      %p204 = scmp.eq.s32.totalorder %s40, 1
      %p205 = por %p203, %p204
      %p206 = scmp.ne.s32.totalorder %s197, %s198
      %p207 = scmp.eq.s32.totalorder %s40, 0
      %p208 = por %p206, %p207
      %p209 = scmp.ne.s32.totalorder %s197, %s198
      %p210 = scmp.eq.s32.totalorder %s41, 1
      %p211 = por %p209, %p210
      %p213 = scmp.ne.s32.totalorder %s198, %s212
      %p214 = scmp.eq.s32.totalorder %s41, 0
      %p215 = por %p213, %p214
      %s217 = sadd.s32 %s216, 1
      %p220 = scmp.eq.s32.totalorder %s35, 1
      %p221 = scmp.ne.s32.totalorder %s216, %s218
      %p222 = scmp.eq.s32.totalorder %s35, 0
      %p223 = por %p221, %p222
      %p224 = scmp.ne.s32.totalorder %s216, %s218
      %p225 = scmp.eq.s32.totalorder %s40, 1
      %p226 = por %p224, %p225
      %p227 = scmp.ne.s32.totalorder %s218, %s219
      %p228 = scmp.eq.s32.totalorder %s40, 0
      %p229 = por %p227, %p228
      %p230 = scmp.ne.s32.totalorder %s218, %s219
      %p231 = scmp.eq.s32.totalorder %s41, 1
      %p232 = por %p230, %p231
      %p234 = scmp.ne.s32.totalorder %s219, %s233
      %p235 = scmp.eq.s32.totalorder %s41, 0
      %p236 = por %p234, %p235
      %s238 = sadd.s32 %s237, 1
      %p241 = scmp.eq.s32.totalorder %s35, 1
      %p242 = scmp.ne.s32.totalorder %s237, %s239
      %p243 = scmp.eq.s32.totalorder %s35, 0
      %p244 = por %p242, %p243
      %p245 = scmp.ne.s32.totalorder %s237, %s239
      %p246 = scmp.eq.s32.totalorder %s40, 1
      %p247 = por %p245, %p246
      %p248 = scmp.ne.s32.totalorder %s239, %s240
      %p249 = scmp.eq.s32.totalorder %s40, 0
      %p250 = por %p248, %p249
      %p251 = scmp.ne.s32.totalorder %s239, %s240
      %p252 = scmp.eq.s32.totalorder %s41, 1
      %p253 = por %p251, %p252
      %p255 = scmp.ne.s32.totalorder %s240, %s254
      %p256 = scmp.eq.s32.totalorder %s41, 0
      %p257 = por %p255, %p256
      %s259 = sadd.s32 %s258, 1
      %p262 = scmp.eq.s32.totalorder %s35, 1
      %p263 = scmp.ne.s32.totalorder %s258, %s260
      %p264 = scmp.eq.s32.totalorder %s35, 0
      %p265 = por %p263, %p264
      %p266 = scmp.ne.s32.totalorder %s258, %s260
      %p267 = scmp.eq.s32.totalorder %s40, 1
      %p268 = por %p266, %p267
      %p269 = scmp.ne.s32.totalorder %s260, %s261
      %p270 = scmp.eq.s32.totalorder %s40, 0
      %p271 = por %p269, %p270
      %p272 = scmp.ne.s32.totalorder %s260, %s261
      %p273 = scmp.eq.s32.totalorder %s41, 1
      %p274 = por %p272, %p273
      %p276 = scmp.ne.s32.totalorder %s261, %s275
      %p277 = scmp.eq.s32.totalorder %s41, 0
      %p278 = por %p276, %p277
      %s280 = sadd.s32 %s279, 1
      %p283 = scmp.eq.s32.totalorder %s35, 1
      %p284 = scmp.ne.s32.totalorder %s279, %s281
      %p285 = scmp.eq.s32.totalorder %s35, 0
      %p286 = por %p284, %p285
      %p287 = scmp.ne.s32.totalorder %s279, %s281
      %p288 = scmp.eq.s32.totalorder %s40, 1
      %p289 = por %p287, %p288
      %p290 = scmp.ne.s32.totalorder %s281, %s282
      %p291 = scmp.eq.s32.totalorder %s40, 0
      %p292 = por %p290, %p291
      %p293 = scmp.ne.s32.totalorder %s281, %s282
      %p294 = scmp.eq.s32.totalorder %s41, 1
      %p295 = por %p293, %p294
      %p297 = scmp.ne.s32.totalorder %s282, %s296
      %p298 = scmp.eq.s32.totalorder %s41, 0
      %p299 = por %p297, %p298
      %s301 = sadd.s32 %s300, 1
      %p304 = scmp.eq.s32.totalorder %s35, 1
      %p305 = scmp.ne.s32.totalorder %s300, %s302
      %p306 = scmp.eq.s32.totalorder %s35, 0
      %p307 = por %p305, %p306
      %p308 = scmp.ne.s32.totalorder %s300, %s302
      %p309 = scmp.eq.s32.totalorder %s40, 1
      %p310 = por %p308, %p309
      %p311 = scmp.ne.s32.totalorder %s302, %s303
      %p312 = scmp.eq.s32.totalorder %s40, 0
      %p313 = por %p311, %p312
      %p314 = scmp.ne.s32.totalorder %s302, %s303
      %p315 = scmp.eq.s32.totalorder %s41, 1
      %p316 = por %p314, %p315
      %p318 = scmp.ne.s32.totalorder %s303, %s317
      %p319 = scmp.eq.s32.totalorder %s41, 0
      %p320 = por %p318, %p319
      %s322 = sadd.s32 %s321, 1
      %p325 = scmp.eq.s32.totalorder %s35, 1
      %p326 = scmp.ne.s32.totalorder %s321, %s323
      %p327 = scmp.eq.s32.totalorder %s35, 0
      %p328 = por %p326, %p327
      %p329 = scmp.ne.s32.totalorder %s321, %s323
      %p330 = scmp.eq.s32.totalorder %s40, 1
      %p331 = por %p329, %p330
      %p332 = scmp.ne.s32.totalorder %s323, %s324
      %p333 = scmp.eq.s32.totalorder %s40, 0
      %p334 = por %p332, %p333
      %p335 = scmp.ne.s32.totalorder %s323, %s324
      %p336 = scmp.eq.s32.totalorder %s41, 1
      %p337 = por %p335, %p336
      %p339 = scmp.ne.s32.totalorder %s324, %s338
      %p340 = scmp.eq.s32.totalorder %s41, 0
      %p341 = por %p339, %p340
      %s343 = sadd.s32 %s342, 1
      %p346 = scmp.eq.s32.totalorder %s35, 1
      %p347 = scmp.ne.s32.totalorder %s342, %s344
      %p348 = scmp.eq.s32.totalorder %s35, 0
      %p349 = por %p347, %p348
      %p350 = scmp.ne.s32.totalorder %s342, %s344
      %p351 = scmp.eq.s32.totalorder %s40, 1
      %p352 = por %p350, %p351
      %p353 = scmp.ne.s32.totalorder %s344, %s345
      %p354 = scmp.eq.s32.totalorder %s40, 0
      %p355 = por %p353, %p354
      %p356 = scmp.ne.s32.totalorder %s344, %s345
      %p357 = scmp.eq.s32.totalorder %s41, 1
      %p358 = por %p356, %p357
      %p360 = scmp.ne.s32.totalorder %s345, %s359
      %p361 = scmp.eq.s32.totalorder %s41, 0
      %p362 = por %p360, %p361
      %s364 = sadd.s32 %s363, 1
      %p367 = scmp.eq.s32.totalorder %s35, 1
      %p368 = scmp.ne.s32.totalorder %s363, %s365
      %p369 = scmp.eq.s32.totalorder %s35, 0
      %p370 = por %p368, %p369
      %p371 = scmp.ne.s32.totalorder %s363, %s365
      %p372 = scmp.eq.s32.totalorder %s40, 1
      %p373 = por %p371, %p372
      %p374 = scmp.ne.s32.totalorder %s365, %s366
      %p375 = scmp.eq.s32.totalorder %s40, 0
      %p376 = por %p374, %p375
      %p377 = scmp.ne.s32.totalorder %s365, %s366
      %p378 = scmp.eq.s32.totalorder %s41, 1
      %p379 = por %p377, %p378
      %p381 = scmp.ne.s32.totalorder %s366, %s380
      %p382 = scmp.eq.s32.totalorder %s41, 0
      %p383 = por %p381, %p382
      %s385 = sadd.s32 %s384, 1
      %p388 = scmp.eq.s32.totalorder %s35, 1
      %p389 = scmp.ne.s32.totalorder %s384, %s386
      %p390 = scmp.eq.s32.totalorder %s35, 0
      %p391 = por %p389, %p390
      %p392 = scmp.ne.s32.totalorder %s384, %s386
      %p393 = scmp.eq.s32.totalorder %s40, 1
      %p394 = por %p392, %p393
      %p395 = scmp.ne.s32.totalorder %s386, %s387
      %p396 = scmp.eq.s32.totalorder %s40, 0
      %p397 = por %p395, %p396
      %p398 = scmp.ne.s32.totalorder %s386, %s387
      %p399 = scmp.eq.s32.totalorder %s41, 1
      %p400 = por %p398, %p399
      %p402 = scmp.ne.s32.totalorder %s387, %s401
      %p403 = scmp.eq.s32.totalorder %s41, 0
      %p404 = por %p402, %p403
      %s406 = sadd.s32 %s405, 1
      %p409 = scmp.eq.s32.totalorder %s35, 1
      %p410 = scmp.ne.s32.totalorder %s405, %s407
      %p411 = scmp.eq.s32.totalorder %s35, 0
      %p412 = por %p410, %p411
      %p413 = scmp.ne.s32.totalorder %s405, %s407
      %p414 = scmp.eq.s32.totalorder %s40, 1
      %p415 = por %p413, %p414
      %p416 = scmp.ne.s32.totalorder %s407, %s408
      %p417 = scmp.eq.s32.totalorder %s40, 0
      %p418 = por %p416, %p417
      %p419 = scmp.ne.s32.totalorder %s407, %s408
      %p420 = scmp.eq.s32.totalorder %s41, 1
      %p421 = por %p419, %p420
      %p423 = scmp.ne.s32.totalorder %s408, %s422
      %p424 = scmp.eq.s32.totalorder %s41, 0
      %p425 = por %p423, %p424
      %s427 = sadd.s32 %s426, 1
      %p430 = scmp.eq.s32.totalorder %s35, 1
      %p431 = scmp.ne.s32.totalorder %s426, %s428
      %p432 = scmp.eq.s32.totalorder %s35, 0
      %p433 = por %p431, %p432
      %p434 = scmp.ne.s32.totalorder %s426, %s428
      %p435 = scmp.eq.s32.totalorder %s40, 1
      %p436 = por %p434, %p435
      %p437 = scmp.ne.s32.totalorder %s428, %s429
      %p438 = scmp.eq.s32.totalorder %s40, 0
      %p439 = por %p437, %p438
      %p440 = scmp.ne.s32.totalorder %s428, %s429
      %p441 = scmp.eq.s32.totalorder %s41, 1
      %p442 = por %p440, %p441
      %p444 = scmp.ne.s32.totalorder %s429, %s443
      %p445 = scmp.eq.s32.totalorder %s41, 0
      %p446 = por %p444, %p445
      %s448 = sadd.s32 %s447, 1
      %p451 = scmp.eq.s32.totalorder %s35, 1
      %p452 = scmp.ne.s32.totalorder %s447, %s449
      %p453 = scmp.eq.s32.totalorder %s35, 0
      %p454 = por %p452, %p453
      %p455 = scmp.ne.s32.totalorder %s447, %s449
      %p456 = scmp.eq.s32.totalorder %s40, 1
      %p457 = por %p455, %p456
      %p458 = scmp.ne.s32.totalorder %s449, %s450
      %p459 = scmp.eq.s32.totalorder %s40, 0
      %p460 = por %p458, %p459
      %p461 = scmp.ne.s32.totalorder %s449, %s450
      %p462 = scmp.eq.s32.totalorder %s41, 1
      %p463 = por %p461, %p462
      %p465 = scmp.ne.s32.totalorder %s450, %s464
      %p466 = scmp.eq.s32.totalorder %s41, 0
      %p467 = por %p465, %p466
      %s469 = sadd.s32 %s468, 1
      %p472 = scmp.eq.s32.totalorder %s35, 1
      %p473 = scmp.ne.s32.totalorder %s468, %s470
      %p474 = scmp.eq.s32.totalorder %s35, 0
      %p475 = por %p473, %p474
      %p476 = scmp.ne.s32.totalorder %s468, %s470
      %p477 = scmp.eq.s32.totalorder %s40, 1
      %p478 = por %p476, %p477
      %p479 = scmp.ne.s32.totalorder %s470, %s471
      %p480 = scmp.eq.s32.totalorder %s40, 0
      %p481 = por %p479, %p480
      %p482 = scmp.ne.s32.totalorder %s470, %s471
      %p483 = scmp.eq.s32.totalorder %s41, 1
      %p484 = por %p482, %p483
      %p486 = scmp.ne.s32.totalorder %s471, %s485
      %p487 = scmp.eq.s32.totalorder %s41, 0
      %p488 = por %p486, %p487
      %s490 = sadd.s32 %s489, 1
      %p493 = scmp.eq.s32.totalorder %s35, 1
      %p494 = scmp.ne.s32.totalorder %s489, %s491
      %p495 = scmp.eq.s32.totalorder %s35, 0
      %p496 = por %p494, %p495
      %p497 = scmp.ne.s32.totalorder %s489, %s491
      %p498 = scmp.eq.s32.totalorder %s40, 1
      %p499 = por %p497, %p498
      %p500 = scmp.ne.s32.totalorder %s491, %s492
      %p501 = scmp.eq.s32.totalorder %s40, 0
      %p502 = por %p500, %p501
      %p503 = scmp.ne.s32.totalorder %s491, %s492
      %p504 = scmp.eq.s32.totalorder %s41, 1
      %p505 = por %p503, %p504
      %p507 = scmp.ne.s32.totalorder %s492, %s506
      %p508 = scmp.eq.s32.totalorder %s41, 0
      %p509 = por %p507, %p508
      %s511 = sadd.s32 %s510, 1
      %p514 = scmp.eq.s32.totalorder %s35, 1
      %p515 = scmp.ne.s32.totalorder %s510, %s512
      %p516 = scmp.eq.s32.totalorder %s35, 0
      %p517 = por %p515, %p516
      %p518 = scmp.ne.s32.totalorder %s510, %s512
      %p519 = scmp.eq.s32.totalorder %s40, 1
      %p520 = por %p518, %p519
      %p521 = scmp.ne.s32.totalorder %s512, %s513
      %p522 = scmp.eq.s32.totalorder %s40, 0
      %p523 = por %p521, %p522
      %p524 = scmp.ne.s32.totalorder %s512, %s513
      %p525 = scmp.eq.s32.totalorder %s41, 1
      %p526 = por %p524, %p525
      %p528 = scmp.ne.s32.totalorder %s513, %s527
      %p529 = scmp.eq.s32.totalorder %s41, 0
      %p530 = por %p528, %p529
      %s532 = sadd.s32 %s531, 1
      %p535 = scmp.eq.s32.totalorder %s35, 1
      %p536 = scmp.ne.s32.totalorder %s531, %s533
      %p537 = scmp.eq.s32.totalorder %s35, 0
      %p538 = por %p536, %p537
      %p539 = scmp.ne.s32.totalorder %s531, %s533
      %p540 = scmp.eq.s32.totalorder %s40, 1
      %p541 = por %p539, %p540
      %p542 = scmp.ne.s32.totalorder %s533, %s534
      %p543 = scmp.eq.s32.totalorder %s40, 0
      %p544 = por %p542, %p543
      %p545 = scmp.ne.s32.totalorder %s533, %s534
      %p546 = scmp.eq.s32.totalorder %s41, 1
      %p547 = por %p545, %p546
      %p549 = scmp.ne.s32.totalorder %s534, %s548
      %p550 = scmp.eq.s32.totalorder %s41, 0
      %p551 = por %p549, %p550
      %s553 = sadd.s32 %s552, 1
      %p556 = scmp.eq.s32.totalorder %s35, 1
      %p557 = scmp.ne.s32.totalorder %s552, %s554
      %p558 = scmp.eq.s32.totalorder %s35, 0
      %p559 = por %p557, %p558
      %p560 = scmp.ne.s32.totalorder %s552, %s554
      %p561 = scmp.eq.s32.totalorder %s40, 1
      %p562 = por %p560, %p561
      %p563 = scmp.ne.s32.totalorder %s554, %s555
      %p564 = scmp.eq.s32.totalorder %s40, 0
      %p565 = por %p563, %p564
      %p566 = scmp.ne.s32.totalorder %s554, %s555
      %p567 = scmp.eq.s32.totalorder %s41, 1
      %p568 = por %p566, %p567
      %p570 = scmp.ne.s32.totalorder %s555, %s569
      %p571 = scmp.eq.s32.totalorder %s41, 0
      %p572 = por %p570, %p571
      %s573 = ssub.s32 %s35, %s42
      %p574 = scmp.eq.s32.totalorder %s573, 0
      %s576 = sadd.s32 %s575, 1
      %s577 = scalar_select %p574, %s575, %s576
      %p580 = pneg %p574
      %p581 = scmp.eq.s32.totalorder %s35, 1
      %p582 = por %p580, %p581
      %p583 = scmp.ne.s32.totalorder %s575, %s578
      %p584 = scmp.eq.s32.totalorder %s35, 0
      %p585 = por %p583, %p584
      %p586 = scmp.ne.s32.totalorder %s575, %s578
      %p587 = scmp.eq.s32.totalorder %s40, 1
      %p588 = por %p586, %p587
      %p589 = scmp.ne.s32.totalorder %s578, %s579
      %p590 = scmp.eq.s32.totalorder %s40, 0
      %p591 = por %p589, %p590
      %p592 = scmp.ne.s32.totalorder %s578, %s579
      %p593 = scmp.eq.s32.totalorder %s41, 1
      %p594 = por %p592, %p593
      %p596 = scmp.ne.s32.totalorder %s579, %s595
      %p597 = scmp.eq.s32.totalorder %s41, 0
      %p598 = por %p596, %p597
      %p599 = scmp.le.s32.totalorder 1, %s35
      %p600 = scmp.lt.s32.totalorder %s35, 3
      %p601 = pnand %p599, %p600
      %p602 = pneg %p601
      // Predicated region
      $region9: #{transformer_forward.1} parent=5 // pred_check
        _
      $region10: #{transformer_forward.1} parent=5 // pred_check_branch
        %604 = sbr.rel (%p601) target = $region12
      $region11: #{transformer_forward.1} parent=5 // pred_region
        %s605 = ssub.s32 %s35, 1
        // Predicated region
        $region13: #{transformer_forward.1} parent=11 // pred_check
          %p606 = pneg %p82
        $region14: #{transformer_forward.1} parent=11 // pred_check_branch
          %608 = sbr.rel (%p606) target = $region16
        $region15: #{transformer_forward.1} parent=11 // pred_region
          _
        $region16: #{transformer_forward.1} parent=11 // pred_fallthru
          _
        // Predicated region
        $region17: #{transformer_forward.1} parent=11 // pred_check
          %p609 = pneg %p103
        $region18: #{transformer_forward.1} parent=11 // pred_check_branch
          %611 = sbr.rel (%p609) target = $region20
        $region19: #{transformer_forward.1} parent=11 // pred_region
          _
        $region20: #{transformer_forward.1} parent=11 // pred_fallthru
          _
        // Predicated region
        $region21: #{transformer_forward.1} parent=11 // pred_check
          %p612 = pneg %p124
        $region22: #{transformer_forward.1} parent=11 // pred_check_branch
          %614 = sbr.rel (%p612) target = $region24
        $region23: #{transformer_forward.1} parent=11 // pred_region
          _
        $region24: #{transformer_forward.1} parent=11 // pred_fallthru
          _
        // Predicated region
        $region25: #{transformer_forward.1} parent=11 // pred_check
          %p615 = pneg %p145
        $region26: #{transformer_forward.1} parent=11 // pred_check_branch
          %617 = sbr.rel (%p615) target = $region28
        $region27: #{transformer_forward.1} parent=11 // pred_region
          _
        $region28: #{transformer_forward.1} parent=11 // pred_fallthru
          _
        // Predicated region
        $region29: #{transformer_forward.1} parent=11 // pred_check
          %p618 = pneg %p166
        $region30: #{transformer_forward.1} parent=11 // pred_check_branch
          %620 = sbr.rel (%p618) target = $region32
        $region31: #{transformer_forward.1} parent=11 // pred_region
          %s622 = ssub.s32 16, 16
          %623 = vsyncadd [#allocation3], %s622
          %s625 = sshll.u32 [#allocation2], 4
          %s626 = int_to_ptr.vmem [resolvable:$true] %s625
          %628 = dma.hbm_to_vmem [thread:$0]  %s5, 16, %s626, [#allocation3]
        $region32: #{transformer_forward.1} parent=11 // pred_fallthru
          _
        // Predicated region
        $region33: #{transformer_forward.1} parent=11 // pred_check
          %p629 = pneg %p187
        $region34: #{transformer_forward.1} parent=11 // pred_check_branch
          %631 = sbr.rel (%p629) target = $region36
        $region35: #{transformer_forward.1} parent=11 // pred_region
          _
        $region36: #{transformer_forward.1} parent=11 // pred_fallthru
          _
        // Predicated region
        $region37: #{transformer_forward.1} parent=11 // pred_check
          %p632 = pneg %p208
        $region38: #{transformer_forward.1} parent=11 // pred_check_branch
          %634 = sbr.rel (%p632) target = $region40
        $region39: #{transformer_forward.1} parent=11 // pred_region
          _
        $region40: #{transformer_forward.1} parent=11 // pred_fallthru
          _
        // Predicated region
        $region41: #{transformer_forward.1} parent=11 // pred_check
          %p635 = pneg %p229
        $region42: #{transformer_forward.1} parent=11 // pred_check_branch
          %637 = sbr.rel (%p635) target = $region44
        $region43: #{transformer_forward.1} parent=11 // pred_region
          _
        $region44: #{transformer_forward.1} parent=11 // pred_fallthru
          _
        // Predicated region
        $region45: #{transformer_forward.1} parent=11 // pred_check
          %p638 = pneg %p250
        $region46: #{transformer_forward.1} parent=11 // pred_check_branch
          %640 = sbr.rel (%p638) target = $region48
        $region47: #{transformer_forward.1} parent=11 // pred_region
          %s642 = ssub.s32 16, 16
          %643 = vsyncadd [#allocation5], %s642
          %s645 = sshll.u32 [#allocation4], 4
          %s646 = int_to_ptr.vmem [resolvable:$true] %s645
          %648 = dma.hbm_to_vmem [thread:$0]  %s9, 16, %s646, [#allocation5]
        $region48: #{transformer_forward.1} parent=11 // pred_fallthru
          _
        // Predicated region
        $region49: #{transformer_forward.1} parent=11 // pred_check
          %p649 = pneg %p271
        $region50: #{transformer_forward.1} parent=11 // pred_check_branch
          %651 = sbr.rel (%p649) target = $region52
        $region51: #{transformer_forward.1} parent=11 // pred_region
          _
        $region52: #{transformer_forward.1} parent=11 // pred_fallthru
          _
        // Predicated region
        $region53: #{transformer_forward.1} parent=11 // pred_check
          %p652 = pneg %p292
        $region54: #{transformer_forward.1} parent=11 // pred_check_branch
          %654 = sbr.rel (%p652) target = $region56
        $region55: #{transformer_forward.1} parent=11 // pred_region
          _
        $region56: #{transformer_forward.1} parent=11 // pred_fallthru
          _
        // Predicated region
        $region57: #{transformer_forward.1} parent=11 // pred_check
          %p655 = pneg %p313
        $region58: #{transformer_forward.1} parent=11 // pred_check_branch
          %657 = sbr.rel (%p655) target = $region60
        $region59: #{transformer_forward.1} parent=11 // pred_region
          _
        $region60: #{transformer_forward.1} parent=11 // pred_fallthru
          _
        // Predicated region
        $region61: #{transformer_forward.1} parent=11 // pred_check
          %p658 = pneg %p334
        $region62: #{transformer_forward.1} parent=11 // pred_check_branch
          %660 = sbr.rel (%p658) target = $region64
        $region63: #{transformer_forward.1} parent=11 // pred_region
          _
        $region64: #{transformer_forward.1} parent=11 // pred_fallthru
          _
        // Predicated region
        $region65: #{transformer_forward.1} parent=11 // pred_check
          %p661 = pneg %p355
        $region66: #{transformer_forward.1} parent=11 // pred_check_branch
          %663 = sbr.rel (%p661) target = $region68
        $region67: #{transformer_forward.1} parent=11 // pred_region
          %s665 = ssub.s32 16, 16
          %666 = vsyncadd [#allocation5], %s665
          %s668 = sshll.u32 [#allocation6], 4
          %s669 = int_to_ptr.vmem [resolvable:$true] %s668
          %671 = dma.hbm_to_vmem [thread:$0]  %s14, 16, %s669, [#allocation5]
        $region68: #{transformer_forward.1} parent=11 // pred_fallthru
          _
        // Predicated region
        $region69: #{transformer_forward.1} parent=11 // pred_check
          %p672 = pneg %p376
        $region70: #{transformer_forward.1} parent=11 // pred_check_branch
          %674 = sbr.rel (%p672) target = $region72
        $region71: #{transformer_forward.1} parent=11 // pred_region
          %s676 = ssub.s32 16, 16
          %677 = vsyncadd [#allocation8], %s676
          %s679 = sshll.u32 [#allocation7], 4
          %s680 = int_to_ptr.vmem [resolvable:$true] %s679
          %682 = dma.hbm_to_vmem [thread:$0]  %s15, 16, %s680, [#allocation8]
        $region72: #{transformer_forward.1} parent=11 // pred_fallthru
          _
        // Predicated region
        $region73: #{transformer_forward.1} parent=11 // pred_check
          %p683 = pneg %p397
        $region74: #{transformer_forward.1} parent=11 // pred_check_branch
          %685 = sbr.rel (%p683) target = $region76
        $region75: #{transformer_forward.1} parent=11 // pred_region
          _
        $region76: #{transformer_forward.1} parent=11 // pred_fallthru
          _
        // Predicated region
        $region77: #{transformer_forward.1} parent=11 // pred_check
          %p686 = pneg %p418
        $region78: #{transformer_forward.1} parent=11 // pred_check_branch
          %688 = sbr.rel (%p686) target = $region80
        $region79: #{transformer_forward.1} parent=11 // pred_region
          _
        $region80: #{transformer_forward.1} parent=11 // pred_fallthru
          _
        // Predicated region
        $region81: #{transformer_forward.1} parent=11 // pred_check
          %p689 = pneg %p439
        $region82: #{transformer_forward.1} parent=11 // pred_check_branch
          %691 = sbr.rel (%p689) target = $region84
        $region83: #{transformer_forward.1} parent=11 // pred_region
          _
        $region84: #{transformer_forward.1} parent=11 // pred_fallthru
          _
        // Predicated region
        $region85: #{transformer_forward.1} parent=11 // pred_check
          %p692 = pneg %p460
        $region86: #{transformer_forward.1} parent=11 // pred_check_branch
          %694 = sbr.rel (%p692) target = $region88
        $region87: #{transformer_forward.1} parent=11 // pred_region
          %s696 = ssub.s32 16, 16
          %697 = vsyncadd [#allocation8], %s696
          %s699 = sshll.u32 [#allocation9], 4
          %s700 = int_to_ptr.vmem [resolvable:$true] %s699
          %702 = dma.hbm_to_vmem [thread:$0]  %s19, 16, %s700, [#allocation8]
        $region88: #{transformer_forward.1} parent=11 // pred_fallthru
          _
        // Predicated region
        $region89: #{transformer_forward.1} parent=11 // pred_check
          %p703 = pneg %p481
        $region90: #{transformer_forward.1} parent=11 // pred_check_branch
          %705 = sbr.rel (%p703) target = $region92
        $region91: #{transformer_forward.1} parent=11 // pred_region
          _
        $region92: #{transformer_forward.1} parent=11 // pred_fallthru
          _
        // Predicated region
        $region93: #{transformer_forward.1} parent=11 // pred_check
          %p706 = pneg %p502
        $region94: #{transformer_forward.1} parent=11 // pred_check_branch
          %708 = sbr.rel (%p706) target = $region96
        $region95: #{transformer_forward.1} parent=11 // pred_region
          _
        $region96: #{transformer_forward.1} parent=11 // pred_fallthru
          _
        // Predicated region
        $region97: #{transformer_forward.1} parent=11 // pred_check
          %p709 = pneg %p523
        $region98: #{transformer_forward.1} parent=11 // pred_check_branch
          %711 = sbr.rel (%p709) target = $region100
        $region99: #{transformer_forward.1} parent=11 // pred_region
          %s713 = ssub.s32 48, 48
          %714 = vsyncadd [#allocation11], %s713
          %s716 = sshll.u32 [#allocation10], 4
          %s717 = int_to_ptr.vmem [resolvable:$true] %s716
          %719 = dma.hbm_to_vmem [thread:$0]  %s22, 48, %s717, [#allocation11]
        $region100: #{transformer_forward.1} parent=11 // pred_fallthru
          _
        // Predicated region
        $region101: #{transformer_forward.1} parent=11 // pred_check
          %p720 = pneg %p544
        $region102: #{transformer_forward.1} parent=11 // pred_check_branch
          %722 = sbr.rel (%p720) target = $region104
        $region103: #{transformer_forward.1} parent=11 // pred_region
          _
        $region104: #{transformer_forward.1} parent=11 // pred_fallthru
          _
        // Predicated region
        $region105: #{transformer_forward.1} parent=11 // pred_check
          %p723 = pneg %p565
        $region106: #{transformer_forward.1} parent=11 // pred_check_branch
          %725 = sbr.rel (%p723) target = $region108
        $region107: #{transformer_forward.1} parent=11 // pred_region
          %s727 = ssub.s32 16, 16
          %728 = vsyncadd [#allocation11], %s727
          %s730 = sshll.u32 [#allocation12], 4
          %s731 = int_to_ptr.vmem [resolvable:$true] %s730
          %733 = dma.hbm_to_vmem [thread:$0]  %s24, 16, %s731, [#allocation11]
        $region108: #{transformer_forward.1} parent=11 // pred_fallthru
          _
      $region12: #{transformer_forward.1} parent=5 // pred_fallthru
        _
      %p734 = scmp.lt.s32.totalorder %s35, 2
      // Predicated region
      $region109: #{transformer_forward.1} parent=5 // pred_check
        %p735 = pneg %p734
      $region110: #{transformer_forward.1} parent=5 // pred_check_branch
        %737 = sbr.rel (%p735) target = $region112
      $region111: #{transformer_forward.1} parent=5 // pred_region
        // Predicated region
        $region113: #{transformer_forward.1} parent=111 // pred_check
          %p738 = pneg %p55
        $region114: #{transformer_forward.1} parent=111 // pred_check_branch
          %740 = sbr.rel (%p738) target = $region116
        $region115: #{transformer_forward.1} parent=111 // pred_region
          %p741 = scmp.lt.s32.totalorder %s35, 1
          %s742 = scalar_select %p741, %s35, 1
          %s743 = smul.addr %s742, 4
          %s744 = smul.addr %s743, 8
          %s745 = scalar_lea.vmem %s0, %s744
        $region116: #{transformer_forward.1} parent=111 // pred_fallthru
          _
      $region112: #{transformer_forward.1} parent=5 // pred_fallthru
        _
      %p746 = scmp.le.s32.totalorder 1, %s35
      %p747 = scmp.lt.s32.totalorder %s35, 3
      %p748 = pnand %p746, %p747
      %p749 = pneg %p748
      // Predicated region
      $region117: #{transformer_forward.1} parent=5 // pred_check
        _
      $region118: #{transformer_forward.1} parent=5 // pred_check_branch
        %751 = sbr.rel (%p748) target = $region120
      $region119: #{transformer_forward.1} parent=5 // pred_region
        %s752 = ssub.s32 %s35, 1
        // Predicated region
        $region121: #{transformer_forward.1} parent=119 // pred_check
          %p753 = pneg %p166
        $region122: #{transformer_forward.1} parent=119 // pred_check_branch
          %755 = sbr.rel (%p753) target = $region124
        $region123: #{transformer_forward.1} parent=119 // pred_region
          %756 = dma.done [#allocation3], 16
        $region124: #{transformer_forward.1} parent=119 // pred_fallthru
          _
        // Predicated region
        $region125: #{transformer_forward.1} parent=119 // pred_check
          %p757 = pneg %p250
        $region126: #{transformer_forward.1} parent=119 // pred_check_branch
          %759 = sbr.rel (%p757) target = $region128
        $region127: #{transformer_forward.1} parent=119 // pred_region
          %760 = dma.done [#allocation5], 16
        $region128: #{transformer_forward.1} parent=119 // pred_fallthru
          _
        // Predicated region
        $region129: #{transformer_forward.1} parent=119 // pred_check
          %p761 = pneg %p355
        $region130: #{transformer_forward.1} parent=119 // pred_check_branch
          %763 = sbr.rel (%p761) target = $region132
        $region131: #{transformer_forward.1} parent=119 // pred_region
          %764 = dma.done [#allocation5], 16
        $region132: #{transformer_forward.1} parent=119 // pred_fallthru
          _
        // Predicated region
        $region133: #{transformer_forward.1} parent=119 // pred_check
          %p765 = pneg %p376
        $region134: #{transformer_forward.1} parent=119 // pred_check_branch
          %767 = sbr.rel (%p765) target = $region136
        $region135: #{transformer_forward.1} parent=119 // pred_region
          %768 = dma.done [#allocation8], 16
        $region136: #{transformer_forward.1} parent=119 // pred_fallthru
          _
        // Predicated region
        $region137: #{transformer_forward.1} parent=119 // pred_check
          %p769 = pneg %p460
        $region138: #{transformer_forward.1} parent=119 // pred_check_branch
          %771 = sbr.rel (%p769) target = $region140
        $region139: #{transformer_forward.1} parent=119 // pred_region
          %772 = dma.done [#allocation8], 16
        $region140: #{transformer_forward.1} parent=119 // pred_fallthru
          _
        // Predicated region
        $region141: #{transformer_forward.1} parent=119 // pred_check
          %p773 = pneg %p523
        $region142: #{transformer_forward.1} parent=119 // pred_check_branch
          %775 = sbr.rel (%p773) target = $region144
        $region143: #{transformer_forward.1} parent=119 // pred_region
          %776 = dma.done [#allocation11], 48
        $region144: #{transformer_forward.1} parent=119 // pred_fallthru
          _
        // Predicated region
        $region145: #{transformer_forward.1} parent=119 // pred_check
          %p777 = pneg %p565
        $region146: #{transformer_forward.1} parent=119 // pred_check_branch
          %779 = sbr.rel (%p777) target = $region148
        $region147: #{transformer_forward.1} parent=119 // pred_region
          %780 = dma.done [#allocation11], 16
        $region148: #{transformer_forward.1} parent=119 // pred_fallthru
          _
        %p781 = scmp.lt.s32.totalorder %s40, 1
        %s782 = scalar_select %p781, %s40, 1
        %s783 = smul.addr %s782, 4
        %s784 = smul.addr %s783, 8
        %s785 = scalar_lea.vmem %s0, %s784
        %p786 = pneg %p61
        %p787 = pneg %p58
        %p788 = pneg %p82
        %p789 = pneg %p79
        %p790 = pneg %p103
        %p791 = pneg %p100
        %p792 = pneg %p124
        %p793 = pneg %p121
        %p794 = pneg %p145
        %p795 = pneg %p142
        %p796 = pneg %p166
        %p797 = pneg %p163
        %p798 = pneg %p187
        %p799 = pneg %p184
        %p800 = pneg %p208
        %p801 = pneg %p205
        %p802 = pneg %p229
        %p803 = pneg %p226
        %p804 = pneg %p250
        %p805 = pneg %p247
        %p806 = pneg %p271
        %p807 = pneg %p268
        %p808 = pneg %p292
        %p809 = pneg %p289
        %p810 = pneg %p313
        %p811 = pneg %p310
        %p812 = pneg %p334
        %p813 = pneg %p331
        %p814 = pneg %p355
        %p815 = pneg %p352
        %p816 = pneg %p376
        %p817 = pneg %p373
        %p818 = pneg %p397
        %p819 = pneg %p394
        %p820 = pneg %p418
        %p821 = pneg %p415
        %p822 = pneg %p439
        %p823 = pneg %p436
        %p824 = pneg %p460
        %p825 = pneg %p457
        %p826 = pneg %p481
        %p827 = pneg %p478
        %p828 = pneg %p502
        %p829 = pneg %p499
        %p830 = pneg %p523
        %p831 = pneg %p520
        %p832 = pneg %p544
        %p833 = pneg %p541
        %p834 = pneg %p565
        %p835 = pneg %p562
        %p836 = pneg %p591
        %p837 = pneg %p588
        %p838 = scmp.lt.s32.totalorder %s40, 1
        %s839 = scalar_select %p838, %s40, 1
        %s840 = smul.addr %s839, 2
        %s841 = smul.addr %s840, 8
        %s842 = scalar_lea.vmem %s25, %s841
        %p843 = scmp.lt.s32.totalorder %s40, 1
        %s844 = scalar_select %p843, %s40, 1
        %s845 = smul.addr %s844, 4
        %s846 = smul.addr %s845, 8
        %s847 = scalar_lea.vmem %s0, %s846
        %p848 = scmp.lt.s32.totalorder %s40, 1
        %s849 = scalar_select %p848, %s40, 1
        %s850 = smul.addr %s849, 2
        %s851 = smul.addr %s850, 8
        %s852 = scalar_lea.vmem %s25, %s851
        %v854 = vld [vmem:[%s847] sm:$0xff]
        %v855 = vld [vmem:[%s847 + $0x8] sm:$0xff]
        %v856 = vld [vmem:[%s847 + $0x10] sm:$0xff]
        %v857 = vld [vmem:[%s847 + $0x18] sm:$0xff]
        %v858 = vld [vmem:[%s3] sm:$0xff]
        %v859 = vld [vmem:[%s3 + $0x8] sm:$0xff]
        %v860 = vld [vmem:[%s4] sm:$0xff]
        %v861 = vld [vmem:[%s4 + $0x8] sm:$0xff]
        %v862 = vpack.c.bf16 %v856, %v854
        %v863 = vpack.c.bf16 %v857, %v855
        %v864 = vld [vmem:[%s1] sm:$0xf]
        %v865 = vld [vmem:[%s1 + $0x4] sm:$0xf]
        %v866 = vld [vmem:[%s1 + $0x8] sm:$0xf]
        %v867 = vld [vmem:[%s1 + $0xc] sm:$0xf]
        %v868 = vld [vmem:[%s1 + $0x10] sm:$0xf]
        %v869 = vld [vmem:[%s1 + $0x14] sm:$0xf]
        %v870 = vld [vmem:[%s1 + $0x18] sm:$0xf]
        %v871 = vld [vmem:[%s1 + $0x1c] sm:$0xf]
        %v872 = vld [vmem:[%s1 + $0x20] sm:$0xf]
        %v873 = vld [vmem:[%s1 + $0x24] sm:$0xf]
        %v874 = vld [vmem:[%s1 + $0x28] sm:$0xf]
        %v875 = vld [vmem:[%s1 + $0x2c] sm:$0xf]
        %v876 = vld [vmem:[%s1 + $0x30] sm:$0xf]
        %v877 = vld [vmem:[%s1 + $0x34] sm:$0xf]
        %v878 = vld [vmem:[%s1 + $0x38] sm:$0xf]
        %v879 = vld [vmem:[%s1 + $0x3c] sm:$0xf]
        %v880 = vld [vmem:[%s1 + $0x40] sm:$0xf]
        %v881 = vld [vmem:[%s1 + $0x44] sm:$0xf]
        %v882 = vld [vmem:[%s1 + $0x48] sm:$0x7]
        %v883 = vld [vmem:[%s2] sm:$0x1]
        %v885 = vlaneseq
        %v886 = vshrl.u32 %v885, 7
        %v887 = vsub.s32 0, %v886
        %v888 = vrot.slane %v883, %v887
        %v909 = vunpack.c.l.b16 %v864
        %v910 = vunpack.c.l.b16 %v865
        %v911 = vunpack.c.l.b16 %v866
        %v912 = vunpack.c.l.b16 %v867
        %v913 = vunpack.c.l.b16 %v868
        %v914 = vunpack.c.l.b16 %v869
        %v915 = vunpack.c.l.b16 %v870
        %v916 = vunpack.c.l.b16 %v871
        %v917 = vunpack.c.l.b16 %v872
        %v918 = vunpack.c.l.b16 %v873
        %v919 = vunpack.c.l.b16 %v874
        %v920 = vunpack.c.l.b16 %v875
        %v921 = vunpack.c.l.b16 %v876
        %v922 = vunpack.c.l.b16 %v877
        %v923 = vunpack.c.l.b16 %v878
        %v924 = vunpack.c.l.b16 %v879
        %v925 = vunpack.c.l.b16 %v880
        %v926 = vunpack.c.l.b16 %v881
        %v927 = vunpack.c.l.b16 %v882
        %v928 = vpack.c.b16 %v910, %v909
        %v929 = vpack.c.b16 %v912, %v911
        %v930 = vpack.c.b16 %v914, %v913
        %v931 = vpack.c.b16 %v916, %v915
        %v932 = vpack.c.b16 %v918, %v917
        %v933 = vpack.c.b16 %v920, %v919
        %v934 = vpack.c.b16 %v922, %v921
        %v935 = vpack.c.b16 %v924, %v923
        %v936 = vpack.c.b16 %v926, %v925
        %v937 = vpack.c.b16 %v927, %v927
        %vm947 = vcmask 179200
        %v949 = vsel %vm947, %v863, 0
        %vm951 = vcmask 1042432
        %v953 = vsel %vm951, %v937, 0
        %955 = vmatprep.subr.bf16.mxu0 0
        %956 = vmatpush1.bf16.msra.mxu0 %v935
        %957 = vmatprep.subr.bf16.mxu0 0
        %958 = vmatpush1.bf16.msra.mxu0 %v934
        %959 = vmatprep.subr.bf16.mxu0 0
        %960 = vmatpush1.bf16.msra.mxu0 %v933
        %961 = vmatprep.subr.bf16.mxu0 0
        %962 = vmatpush1.bf16.msra.mxu0 %v932
        %963 = vmatprep.subr.bf16.mxu0 0
        %964 = vmatpush1.bf16.msra.mxu0 %v931
        %965 = vmatprep.subr.bf16.mxu0 0
        %966 = vmatpush1.bf16.msra.mxu0 %v930
        %967 = vmatprep.subr.bf16.mxu0 0
        %968 = vmatpush1.bf16.msra.mxu0 %v929
        %969 = vmatprep.subr.bf16.mxu0 0
        %970 = vmatpush1.bf16.msra.mxu0 %v928
        %971 = vmatprep.subr.bf16.mxu0 0
        %972 = vmatpush2.bf16.msra.mxu0 0
        %973 = vmatprep.subr.bf16.mxu0 0
        %974 = vmatpush2.bf16.msra.mxu0 0
        %975 = vmatprep.subr.bf16.mxu0 0
        %976 = vmatpush2.bf16.msra.mxu0 0
        %977 = vmatprep.subr.bf16.mxu0 0
        %978 = vmatpush2.bf16.msra.mxu0 0
        %979 = vmatprep.subr.bf16.mxu0 0
        %980 = vmatpush2.bf16.msra.mxu0 0
        %981 = vmatprep.subr.bf16.mxu0 0
        %982 = vmatpush2.bf16.msra.mxu0 0
        %983 = vmatprep.subr.bf16.mxu0 0
        %984 = vmatpush2.bf16.msra.mxu0 %v953
        %985 = vmatprep.subr.bf16.mxu0 0
        %986 = vmatpush2.bf16.msra.mxu0 %v936
        %987 = vmatprep.mubr.bf16.mxu0 %v949
        %988 = vmatmul.mubr.bf16.gmra.mxu0 %v862
        %v989 = vpop.f32.mrf.mxu0
        %v990 = vadd.f32 %v888, %v989
        %v991 = vpop.f32.mrf.mxu0
        %v992 = vpop.f32.mrf.mxu0
        %v993 = vadd.f32 %v888, %v992
        %v994 = vpop.f32.mrf.mxu0
        %995 = vdwg.mxu0
        %v996 = vld [vmem:[#allocation2] sm:$0x1]
        %v997 = vmul.f32 %v990, %v990
        %v998 = vmul.f32 %v993, %v993
        %999 = vadd.xlane.f32.xlu0 %v997
        %v1000 = vpop.xlane.xlu0 %999
        %1001 = vadd.xlane.f32.xlu0 %v998
        %v1002 = vpop.xlane.xlu0 %1001
        %v1003 = vrcp.pop 128.0
        %v1004 = vmul.f32 %v1000, %v1003
        %v1005 = vmul.f32 %v1002, %v1003
        %v1006 = vadd.f32 %v1004, 1e-05
        %v1007 = vadd.f32 %v1005, 1e-05
        %v1008 = vrsqrt.pop %v1006
        %v1009 = vrsqrt.pop %v1007
        %v1010 = vmul.f32 %v990, %v1008
        %v1011 = vmul.f32 %v993, %v1009
        %v1013 = vlaneseq
        %v1014 = vshrl.u32 %v1013, 7
        %v1015 = vsub.s32 0, %v1014
        %v1016 = vrot.slane %v996, %v1015
        %v1018 = vmul.f32 %v1010, %v1016
        %v1019 = vmul.f32 %v1011, %v1016
        %v1020 = vpack.c.bf16 %v1019, %v1018
        %v1021 = vld [vmem:[%s6] sm:$0xff]
        %v1022 = vld [vmem:[%s6 + $0x8] sm:$0xf]
        %v1023 = vld [vmem:[%s6 + $0xc] sm:$0xff]
        %v1024 = vld [vmem:[%s6 + $0x14] sm:$0xf]
        %v1025 = vld [vmem:[%s6 + $0x18] sm:$0xff]
        %v1026 = vld [vmem:[%s6 + $0x20] sm:$0xf]
        %v1027 = vld [vmem:[%s6 + $0x24] sm:$0xff]
        %v1028 = vld [vmem:[%s6 + $0x2c] sm:$0xf]
        %v1029 = vld [vmem:[%s6 + $0x30] sm:$0xff]
        %v1030 = vld [vmem:[%s6 + $0x38] sm:$0xf]
        %v1031 = vld [vmem:[%s6 + $0x3c] sm:$0xff]
        %v1032 = vld [vmem:[%s6 + $0x44] sm:$0xf]
        %v1033 = vld [vmem:[%s6 + $0x48] sm:$0xff]
        %v1034 = vld [vmem:[%s6 + $0x50] sm:$0xf]
        %v1035 = vld [vmem:[%s6 + $0x54] sm:$0xff]
        %v1036 = vld [vmem:[%s6 + $0x5c] sm:$0xf]
        %v1037 = vld [vmem:[%s6 + $0x60] sm:$0xff]
        %v1038 = vld [vmem:[%s6 + $0x68] sm:$0xf]
        %v1039 = vld [vmem:[%s6 + $0x6c] sm:$0xff]
        %v1040 = vld [vmem:[%s6 + $0x74] sm:$0xf]
        %v1041 = vld [vmem:[%s6 + $0x78] sm:$0xff]
        %v1042 = vld [vmem:[%s6 + $0x80] sm:$0xf]
        %v1043 = vld [vmem:[%s6 + $0x84] sm:$0xff]
        %v1044 = vld [vmem:[%s6 + $0x8c] sm:$0xf]
        %v1045 = vld [vmem:[%s6 + $0x90] sm:$0xff]
        %v1046 = vld [vmem:[%s6 + $0x98] sm:$0xf]
        %v1047 = vld [vmem:[%s6 + $0x9c] sm:$0xff]
        %v1048 = vld [vmem:[%s6 + $0xa4] sm:$0xf]
        %v1049 = vld [vmem:[%s6 + $0xa8] sm:$0xff]
        %v1050 = vld [vmem:[%s6 + $0xb0] sm:$0xf]
        %v1051 = vld [vmem:[%s6 + $0xb4] sm:$0xff]
        %v1052 = vld [vmem:[%s6 + $0xbc] sm:$0xf]
        %v1053 = vld [vmem:[%s7] sm:$0x7]
        %v1055 = vlaneseq
        %v1056 = vshrl.u32 %v1055, 7
        %v1057 = vsub.s32 0, %v1056
        %v1058 = vrot.slane %v1053, %v1057
        %v1059 = vlaneseq
        %v1060 = vshrl.u32 %v1059, 7
        %v1061 = vsub.s32 1, %v1060
        %v1062 = vrot.slane %v1053, %v1061
        %v1063 = vlaneseq
        %v1064 = vshrl.u32 %v1063, 7
        %v1065 = vsub.s32 2, %v1064
        %v1066 = vrot.slane %v1053, %v1065
        %v1102 = vunpack.c.l.b16 %v1021
        %v1103 = vunpack.c.h.b16 %v1021
        %v1104 = vunpack.c.l.b16 %v1022
        %v1105 = vunpack.c.l.b16 %v1023
        %v1106 = vunpack.c.h.b16 %v1023
        %v1107 = vunpack.c.l.b16 %v1024
        %v1108 = vunpack.c.l.b16 %v1025
        %v1109 = vunpack.c.h.b16 %v1025
        %v1110 = vunpack.c.l.b16 %v1026
        %v1111 = vunpack.c.l.b16 %v1027
        %v1112 = vunpack.c.h.b16 %v1027
        %v1113 = vunpack.c.l.b16 %v1028
        %v1114 = vunpack.c.l.b16 %v1029
        %v1115 = vunpack.c.h.b16 %v1029
        %v1116 = vunpack.c.l.b16 %v1030
        %v1117 = vunpack.c.l.b16 %v1031
        %v1118 = vunpack.c.h.b16 %v1031
        %v1119 = vunpack.c.l.b16 %v1032
        %v1120 = vunpack.c.l.b16 %v1033
        %v1121 = vunpack.c.h.b16 %v1033
        %v1122 = vunpack.c.l.b16 %v1034
        %v1123 = vunpack.c.l.b16 %v1035
        %v1124 = vunpack.c.h.b16 %v1035
        %v1125 = vunpack.c.l.b16 %v1036
        %v1126 = vunpack.c.l.b16 %v1037
        %v1127 = vunpack.c.h.b16 %v1037
        %v1128 = vunpack.c.l.b16 %v1038
        %v1129 = vunpack.c.l.b16 %v1039
        %v1130 = vunpack.c.h.b16 %v1039
        %v1131 = vunpack.c.l.b16 %v1040
        %v1132 = vunpack.c.l.b16 %v1041
        %v1133 = vunpack.c.h.b16 %v1041
        %v1134 = vunpack.c.l.b16 %v1042
        %v1135 = vunpack.c.l.b16 %v1043
        %v1136 = vunpack.c.h.b16 %v1043
        %v1137 = vunpack.c.l.b16 %v1044
        %v1138 = vunpack.c.l.b16 %v1045
        %v1139 = vunpack.c.h.b16 %v1045
        %v1140 = vunpack.c.l.b16 %v1046
        %v1141 = vunpack.c.l.b16 %v1047
        %v1142 = vunpack.c.h.b16 %v1047
        %v1143 = vunpack.c.l.b16 %v1048
        %v1144 = vunpack.c.l.b16 %v1049
        %v1145 = vunpack.c.h.b16 %v1049
        %v1146 = vunpack.c.l.b16 %v1050
        %v1147 = vunpack.c.l.b16 %v1051
        %v1148 = vunpack.c.h.b16 %v1051
        %v1149 = vunpack.c.l.b16 %v1052
        %v1150 = vpack.c.b16 %v1105, %v1102
        %v1151 = vpack.c.b16 %v1106, %v1103
        %v1152 = vpack.c.b16 %v1107, %v1104
        %v1153 = vpack.c.b16 %v1111, %v1108
        %v1154 = vpack.c.b16 %v1112, %v1109
        %v1155 = vpack.c.b16 %v1113, %v1110
        %v1156 = vpack.c.b16 %v1117, %v1114
        %v1157 = vpack.c.b16 %v1118, %v1115
        %v1158 = vpack.c.b16 %v1119, %v1116
        %v1159 = vpack.c.b16 %v1123, %v1120
        %v1160 = vpack.c.b16 %v1124, %v1121
        %v1161 = vpack.c.b16 %v1125, %v1122
        %v1162 = vpack.c.b16 %v1129, %v1126
        %v1163 = vpack.c.b16 %v1130, %v1127
        %v1164 = vpack.c.b16 %v1131, %v1128
        %v1165 = vpack.c.b16 %v1135, %v1132
        %v1166 = vpack.c.b16 %v1136, %v1133
        %v1167 = vpack.c.b16 %v1137, %v1134
        %v1168 = vpack.c.b16 %v1141, %v1138
        %v1169 = vpack.c.b16 %v1142, %v1139
        %v1170 = vpack.c.b16 %v1143, %v1140
        %v1171 = vpack.c.b16 %v1147, %v1144
        %v1172 = vpack.c.b16 %v1148, %v1145
        %v1173 = vpack.c.b16 %v1149, %v1146
        %1198 = vmatprep.subr.bf16.mxu0 %v1172
        %1199 = vmatpush1.bf16.msra.mxu0 %v1171
        %1200 = vmatprep.subr.bf16.mxu0 %v1169
        %1201 = vmatpush1.bf16.msra.mxu0 %v1168
        %1202 = vmatprep.subr.bf16.mxu0 %v1166
        %1203 = vmatpush1.bf16.msra.mxu0 %v1165
        %1204 = vmatprep.subr.bf16.mxu0 %v1163
        %1205 = vmatpush1.bf16.msra.mxu0 %v1162
        %1206 = vmatprep.subr.bf16.mxu0 %v1160
        %1207 = vmatpush1.bf16.msra.mxu0 %v1159
        %1208 = vmatprep.subr.bf16.mxu0 %v1157
        %1209 = vmatpush1.bf16.msra.mxu0 %v1156
        %1210 = vmatprep.subr.bf16.mxu0 %v1154
        %1211 = vmatpush1.bf16.msra.mxu0 %v1153
        %1212 = vmatprep.subr.bf16.mxu0 %v1151
        %1213 = vmatpush1.bf16.msra.mxu0 %v1150
        %1214 = vmatprep.subr.bf16.mxu0 0
        %1215 = vmatpush2.bf16.msra.mxu0 0
        %1216 = vmatprep.subr.bf16.mxu0 0
        %1217 = vmatpush2.bf16.msra.mxu0 0
        %1218 = vmatprep.subr.bf16.mxu0 0
        %1219 = vmatpush2.bf16.msra.mxu0 0
        %1220 = vmatprep.subr.bf16.mxu0 0
        %1221 = vmatpush2.bf16.msra.mxu0 0
        %1222 = vmatprep.subr.bf16.mxu0 0
        %1223 = vmatpush2.bf16.msra.mxu0 0
        %1224 = vmatprep.subr.bf16.mxu0 0
        %1225 = vmatpush2.bf16.msra.mxu0 0
        %1226 = vmatprep.subr.bf16.mxu0 0
        %1227 = vmatpush2.bf16.msra.mxu0 0
        %1228 = vmatprep.subr.bf16.mxu0 0
        %1229 = vmatpush2.bf16.msra.mxu0 0
        %1230 = vmatprep.mubr.bf16.mxu0 0
        %1231 = vmatmul.mubr.bf16.gmra.mxu0 %v1020
        %v1232 = vpop.f32.mrf.mxu0
        %v1233 = vadd.f32 %v1058, %v1232
        %v1234 = vpop.f32.mrf.mxu0
        %v1235 = vadd.f32 %v1062, %v1234
        %v1236 = vpop.f32.mrf.mxu0
        %v1237 = vadd.f32 %v1058, %v1236
        %v1238 = vpop.f32.mrf.mxu0
        %v1239 = vadd.f32 %v1062, %v1238
        %1240 = vdwg.mxu0
        %1241 = vmatprep.subr.bf16.mxu0 0
        %1242 = vmatpush1.bf16.msra.mxu0 %v1173
        %1243 = vmatprep.subr.bf16.mxu0 0
        %1244 = vmatpush1.bf16.msra.mxu0 %v1170
        %1245 = vmatprep.subr.bf16.mxu0 0
        %1246 = vmatpush1.bf16.msra.mxu0 %v1167
        %1247 = vmatprep.subr.bf16.mxu0 0
        %1248 = vmatpush1.bf16.msra.mxu0 %v1164
        %1249 = vmatprep.subr.bf16.mxu0 0
        %1250 = vmatpush1.bf16.msra.mxu0 %v1161
        %1251 = vmatprep.subr.bf16.mxu0 0
        %1252 = vmatpush1.bf16.msra.mxu0 %v1158
        %1253 = vmatprep.subr.bf16.mxu0 0
        %1254 = vmatpush1.bf16.msra.mxu0 %v1155
        %1255 = vmatprep.subr.bf16.mxu0 0
        %1256 = vmatpush1.bf16.msra.mxu0 %v1152
        %1257 = vmatprep.subr.bf16.mxu0 0
        %1258 = vmatpush2.bf16.msra.mxu0 0
        %1259 = vmatprep.subr.bf16.mxu0 0
        %1260 = vmatpush2.bf16.msra.mxu0 0
        %1261 = vmatprep.subr.bf16.mxu0 0
        %1262 = vmatpush2.bf16.msra.mxu0 0
        %1263 = vmatprep.subr.bf16.mxu0 0
        %1264 = vmatpush2.bf16.msra.mxu0 0
        %1265 = vmatprep.subr.bf16.mxu0 0
        %1266 = vmatpush2.bf16.msra.mxu0 0
        %1267 = vmatprep.subr.bf16.mxu0 0
        %1268 = vmatpush2.bf16.msra.mxu0 0
        %1269 = vmatprep.subr.bf16.mxu0 0
        %1270 = vmatpush2.bf16.msra.mxu0 0
        %1271 = vmatprep.subr.bf16.mxu0 0
        %1272 = vmatpush2.bf16.msra.mxu0 0
        %1273 = vmatprep.mubr.bf16.mxu0 0
        %1274 = vmatmul.mubr.bf16.gmra.mxu0 %v1020
        %v1275 = vpop.f32.mrf.mxu0
        %v1276 = vadd.f32 %v1066, %v1275
        %v1277 = vpop.f32.mrf.mxu0
        %v1278 = vpop.f32.mrf.mxu0
        %v1279 = vadd.f32 %v1066, %v1278
        %v1280 = vpop.f32.mrf.mxu0
        %1281 = vdwg.mxu0
        %v1282 = vmul.f32 %v1233, %v858
        %v1283 = vmul.f32 %v1237, %v859
        %1286 = vrot.lane.b32.xlu0 %v860, 16
        %v1287 = vpop.permute.xlu0 %1286
        %1288 = vrot.lane.b32.xlu0 %v861, 16
        %v1289 = vpop.permute.xlu0 %1288
        %v1292 = vmul.f32 %v1233, %v1287
        %v1293 = vmul.f32 %v1237, %v1289
        %1296 = vrot.lane.b32.xlu0 %v1292, 112
        %v1297 = vpop.permute.xlu0 %1296
        %1298 = vrot.lane.b32.xlu0 %v1293, 112
        %v1299 = vpop.permute.xlu0 %1298
        %v1302 = vsub.f32 %v1282, %v1297
        %v1303 = vsub.f32 %v1283, %v1299
        %v1304 = vmul.f32 %v1233, %v860
        %v1305 = vmul.f32 %v1237, %v861
        %1308 = vrot.lane.b32.xlu0 %v858, 16
        %v1309 = vpop.permute.xlu0 %1308
        %1310 = vrot.lane.b32.xlu0 %v859, 16
        %v1311 = vpop.permute.xlu0 %1310
        %v1314 = vmul.f32 %v1233, %v1309
        %v1315 = vmul.f32 %v1237, %v1311
        %1318 = vrot.lane.b32.xlu0 %v1314, 112
        %v1319 = vpop.permute.xlu0 %1318
        %1320 = vrot.lane.b32.xlu0 %v1315, 112
        %v1321 = vpop.permute.xlu0 %1320
        %v1324 = vadd.f32 %v1304, %v1319
        %v1325 = vadd.f32 %v1305, %v1321
        %1328 = vrot.lane.b32.xlu0 %v1324, 16
        %v1329 = vpop.permute.xlu0 %1328
        %1330 = vrot.lane.b32.xlu0 %v1325, 16
        %v1331 = vpop.permute.xlu0 %1330
        %vm1334 = vcmask 130048
        %v1335 = vsel %vm1334, %v1302, %v1329
        %v1336 = vsel %vm1334, %v1303, %v1331
        %v1337 = vmul.f32 %v1235, %v858
        %v1338 = vmul.f32 %v1239, %v859
        %v1339 = vmul.f32 %v1235, %v1287
        %v1340 = vmul.f32 %v1239, %v1289
        %1343 = vrot.lane.b32.xlu0 %v1339, 112
        %v1344 = vpop.permute.xlu0 %1343
        %1345 = vrot.lane.b32.xlu0 %v1340, 112
        %v1346 = vpop.permute.xlu0 %1345
        %v1349 = vsub.f32 %v1337, %v1344
        %v1350 = vsub.f32 %v1338, %v1346
        %v1351 = vmul.f32 %v1235, %v860
        %v1352 = vmul.f32 %v1239, %v861
        %v1353 = vmul.f32 %v1235, %v1309
        %v1354 = vmul.f32 %v1239, %v1311
        %1357 = vrot.lane.b32.xlu0 %v1353, 112
        %v1358 = vpop.permute.xlu0 %1357
        %1359 = vrot.lane.b32.xlu0 %v1354, 112
        %v1360 = vpop.permute.xlu0 %1359
        %v1363 = vadd.f32 %v1351, %v1358
        %v1364 = vadd.f32 %v1352, %v1360
        %1367 = vrot.lane.b32.xlu0 %v1363, 16
        %v1368 = vpop.permute.xlu0 %1367
        %1369 = vrot.lane.b32.xlu0 %v1364, 16
        %v1370 = vpop.permute.xlu0 %1369
        %v1373 = vsel %vm1334, %v1349, %v1368
        %v1374 = vsel %vm1334, %v1350, %v1370
        %v1375 = vpack.c.bf16 %v1336, %v1335
        %v1376 = vpack.c.bf16 %v1374, %v1373
        %vm1377 = vcmask 261120
        %v1379 = vsel %vm1377, %v1375, 0
        %v1382 = vsel %vm1377, %v1376, 0
        %1384 = vmatprep.subr.bf16.mxu0 0
        %1385 = vmatpush1.bf16.xpose.msra.mxu0 0
        %1386 = vmatprep.subr.bf16.mxu0 0
        %1387 = vmatpush1.bf16.xpose.msra.mxu0 0
        %1388 = vmatprep.subr.bf16.mxu0 0
        %1389 = vmatpush1.bf16.xpose.msra.mxu0 0
        %1390 = vmatprep.subr.bf16.mxu0 0
        %1391 = vmatpush1.bf16.xpose.msra.mxu0 0
        %1392 = vmatprep.subr.bf16.mxu0 0
        %1393 = vmatpush1.bf16.xpose.msra.mxu0 0
        %1394 = vmatprep.subr.bf16.mxu0 0
        %1395 = vmatpush1.bf16.xpose.msra.mxu0 0
        %1396 = vmatprep.subr.bf16.mxu0 0
        %1397 = vmatpush1.bf16.xpose.msra.mxu0 0
        %1398 = vmatprep.subr.bf16.mxu0 0
        %1399 = vmatpush1.bf16.xpose.msra.mxu0 %v1382
        %1400 = vmatprep.subr.bf16.mxu0 0
        %1401 = vmatpush2.bf16.xpose.msra.mxu0 0
        %1402 = vmatprep.subr.bf16.mxu0 0
        %1403 = vmatpush2.bf16.xpose.msra.mxu0 0
        %1404 = vmatprep.subr.bf16.mxu0 0
        %1405 = vmatpush2.bf16.xpose.msra.mxu0 0
        %1406 = vmatprep.subr.bf16.mxu0 0
        %1407 = vmatpush2.bf16.xpose.msra.mxu0 0
        %1408 = vmatprep.subr.bf16.mxu0 0
        %1409 = vmatpush2.bf16.xpose.msra.mxu0 0
        %1410 = vmatprep.subr.bf16.mxu0 0
        %1411 = vmatpush2.bf16.xpose.msra.mxu0 0
        %1412 = vmatprep.subr.bf16.mxu0 0
        %1413 = vmatpush2.bf16.xpose.msra.mxu0 0
        %1414 = vmatprep.subr.bf16.mxu0 0
        %1415 = vmatpush2.bf16.xpose.msra.mxu0 0
        %1416 = vmatprep.mubr.bf16.mxu0 0
        %1417 = vmatmul.mubr.bf16.gmra.mxu0 %v1379
        %v1418 = vpop.f32.mrf.mxu0
        %v1419 = vadd.f32 0.0, %v1418
        %v1420 = vpop.f32.mrf.mxu0
        %v1421 = vpop.f32.mrf.mxu0
        %v1422 = vadd.f32 0.0, %v1421
        %v1423 = vpop.f32.mrf.mxu0
        %1424 = vdwg.mxu0
        %v1425 = vmul.f32 %v1419, 0.17677669
        %v1426 = vmul.f32 %v1422, 0.17677669
        %v1427 = vsel %vm1334, %v1425, -inf
        %1428 = vmax.xlane.f32.xlu0 %v1427
        %v1429 = vpop.xlane.xlu0 %1428
        %v1430 = vsel %vm1334, %v1426, -inf
        %1431 = vmax.xlane.f32.xlu0 %v1430
        %v1432 = vpop.xlane.xlu0 %1431
        %v1433 = vsub.f32 %v1425, %v1429
        %v1434 = vsub.f32 %v1426, %v1432
        %v1435 = vmul.f32 %v1433, 1.442695
        %v1436 = vpow.pop %v1435
        %v1437 = vmul.f32 %v1434, 1.442695
        %v1438 = vpow.pop %v1437
        %v1439 = vsel %vm1334, %v1436, 0.0
        %1440 = vadd.xlane.f32.xlu0 %v1439
        %v1441 = vpop.xlane.xlu0 %1440
        %v1442 = vsel %vm1334, %v1438, 0.0
        %1443 = vadd.xlane.f32.xlu0 %v1442
        %v1444 = vpop.xlane.xlu0 %1443
        %v1445 = vrcp.pop %v1441
        %v1446 = vrcp.pop %v1444
        %v1447 = vmul.f32 %v1436, %v1445
        %v1448 = vmul.f32 %v1438, %v1446
        %v1449 = vpack.c.bf16 %v1448, %v1447
        %v1450 = vpack.c.bf16 %v1279, %v1276
        %v1452 = vsel %vm1334, %v1449, 0
        %1454 = vmatprep.subr.bf16.mxu0 0
        %1455 = vmatpush1.bf16.msra.mxu0 0
        %1456 = vmatprep.subr.bf16.mxu0 0
        %1457 = vmatpush1.bf16.msra.mxu0 0
        %1458 = vmatprep.subr.bf16.mxu0 0
        %1459 = vmatpush1.bf16.msra.mxu0 0
        %1460 = vmatprep.subr.bf16.mxu0 0
        %1461 = vmatpush1.bf16.msra.mxu0 0
        %1462 = vmatprep.subr.bf16.mxu0 0
        %1463 = vmatpush1.bf16.msra.mxu0 0
        %1464 = vmatprep.subr.bf16.mxu0 0
        %1465 = vmatpush1.bf16.msra.mxu0 0
        %1466 = vmatprep.subr.bf16.mxu0 0
        %1467 = vmatpush1.bf16.msra.mxu0 0
        %1468 = vmatprep.subr.bf16.mxu0 0
        %1469 = vmatpush1.bf16.msra.mxu0 %v1450
        %1470 = vmatprep.subr.bf16.mxu0 0
        %1471 = vmatpush2.bf16.msra.mxu0 0
        %1472 = vmatprep.subr.bf16.mxu0 0
        %1473 = vmatpush2.bf16.msra.mxu0 0
        %1474 = vmatprep.subr.bf16.mxu0 0
        %1475 = vmatpush2.bf16.msra.mxu0 0
        %1476 = vmatprep.subr.bf16.mxu0 0
        %1477 = vmatpush2.bf16.msra.mxu0 0
        %1478 = vmatprep.subr.bf16.mxu0 0
        %1479 = vmatpush2.bf16.msra.mxu0 0
        %1480 = vmatprep.subr.bf16.mxu0 0
        %1481 = vmatpush2.bf16.msra.mxu0 0
        %1482 = vmatprep.subr.bf16.mxu0 0
        %1483 = vmatpush2.bf16.msra.mxu0 0
        %1484 = vmatprep.subr.bf16.mxu0 0
        %1485 = vmatpush2.bf16.msra.mxu0 0
        %1486 = vmatprep.mubr.bf16.mxu0 0
        %1487 = vmatmul.mubr.bf16.gmra.mxu0 %v1452
        %v1488 = vpop.f32.mrf.mxu0
        %v1489 = vadd.f32 0.0, %v1488
        %v1490 = vpop.f32.mrf.mxu0
        %v1491 = vpop.f32.mrf.mxu0
        %v1492 = vadd.f32 0.0, %v1491
        %v1493 = vpop.f32.mrf.mxu0
        %1494 = vdwg.mxu0
        %1495 = vrot.lane.b32.xlu0 %v858, 32
        %v1496 = vpop.permute.xlu0 %1495
        %1497 = vrot.lane.b32.xlu0 %v859, 32
        %v1498 = vpop.permute.xlu0 %1497
        %v1501 = vmul.f32 %v1233, %v1496
        %v1502 = vmul.f32 %v1237, %v1498
        %1503 = vrot.lane.b32.xlu0 %v860, 48
        %v1504 = vpop.permute.xlu0 %1503
        %1505 = vrot.lane.b32.xlu0 %v861, 48
        %v1506 = vpop.permute.xlu0 %1505
        %v1509 = vmul.f32 %v1233, %v1504
        %v1510 = vmul.f32 %v1237, %v1506
        %1513 = vrot.lane.b32.xlu0 %v1509, 112
        %v1514 = vpop.permute.xlu0 %1513
        %1515 = vrot.lane.b32.xlu0 %v1510, 112
        %v1516 = vpop.permute.xlu0 %1515
        %v1519 = vsub.f32 %v1501, %v1514
        %v1520 = vsub.f32 %v1502, %v1516
        %1521 = vrot.lane.b32.xlu0 %v860, 32
        %v1522 = vpop.permute.xlu0 %1521
        %1523 = vrot.lane.b32.xlu0 %v861, 32
        %v1524 = vpop.permute.xlu0 %1523
        %v1527 = vmul.f32 %v1233, %v1522
        %v1528 = vmul.f32 %v1237, %v1524
        %1529 = vrot.lane.b32.xlu0 %v858, 48
        %v1530 = vpop.permute.xlu0 %1529
        %1531 = vrot.lane.b32.xlu0 %v859, 48
        %v1532 = vpop.permute.xlu0 %1531
        %v1535 = vmul.f32 %v1233, %v1530
        %v1536 = vmul.f32 %v1237, %v1532
        %1539 = vrot.lane.b32.xlu0 %v1535, 112
        %v1540 = vpop.permute.xlu0 %1539
        %1541 = vrot.lane.b32.xlu0 %v1536, 112
        %v1542 = vpop.permute.xlu0 %1541
        %v1545 = vadd.f32 %v1527, %v1540
        %v1546 = vadd.f32 %v1528, %v1542
        %1549 = vrot.lane.b32.xlu0 %v1519, 96
        %v1550 = vpop.permute.xlu0 %1549
        %1551 = vrot.lane.b32.xlu0 %v1520, 96
        %v1552 = vpop.permute.xlu0 %1551
        %1557 = vrot.lane.b32.xlu0 %v1545, 112
        %v1558 = vpop.permute.xlu0 %1557
        %1559 = vrot.lane.b32.xlu0 %v1546, 112
        %v1560 = vpop.permute.xlu0 %1559
        %v1563 = vsel %vm1334, %v1550, %v1558
        %v1564 = vsel %vm1334, %v1552, %v1560
        %v1565 = vmul.f32 %v1235, %v1496
        %v1566 = vmul.f32 %v1239, %v1498
        %v1567 = vmul.f32 %v1235, %v1504
        %v1568 = vmul.f32 %v1239, %v1506
        %1571 = vrot.lane.b32.xlu0 %v1567, 112
        %v1572 = vpop.permute.xlu0 %1571
        %1573 = vrot.lane.b32.xlu0 %v1568, 112
        %v1574 = vpop.permute.xlu0 %1573
        %v1577 = vsub.f32 %v1565, %v1572
        %v1578 = vsub.f32 %v1566, %v1574
        %v1579 = vmul.f32 %v1235, %v1522
        %v1580 = vmul.f32 %v1239, %v1524
        %v1581 = vmul.f32 %v1235, %v1530
        %v1582 = vmul.f32 %v1239, %v1532
        %1585 = vrot.lane.b32.xlu0 %v1581, 112
        %v1586 = vpop.permute.xlu0 %1585
        %1587 = vrot.lane.b32.xlu0 %v1582, 112
        %v1588 = vpop.permute.xlu0 %1587
        %v1591 = vadd.f32 %v1579, %v1586
        %v1592 = vadd.f32 %v1580, %v1588
        %1595 = vrot.lane.b32.xlu0 %v1577, 96
        %v1596 = vpop.permute.xlu0 %1595
        %1597 = vrot.lane.b32.xlu0 %v1578, 96
        %v1598 = vpop.permute.xlu0 %1597
        %1603 = vrot.lane.b32.xlu0 %v1591, 112
        %v1604 = vpop.permute.xlu0 %1603
        %1605 = vrot.lane.b32.xlu0 %v1592, 112
        %v1606 = vpop.permute.xlu0 %1605
        %v1609 = vsel %vm1334, %v1596, %v1604
        %v1610 = vsel %vm1334, %v1598, %v1606
        %v1611 = vpack.c.bf16 %v1564, %v1563
        %v1612 = vpack.c.bf16 %v1610, %v1609
        %v1614 = vsel %vm1377, %v1611, 0
        %v1617 = vsel %vm1377, %v1612, 0
        %1619 = vmatprep.subr.bf16.mxu0 0
        %1620 = vmatpush1.bf16.xpose.msra.mxu0 0
        %1621 = vmatprep.subr.bf16.mxu0 0
        %1622 = vmatpush1.bf16.xpose.msra.mxu0 0
        %1623 = vmatprep.subr.bf16.mxu0 0
        %1624 = vmatpush1.bf16.xpose.msra.mxu0 0
        %1625 = vmatprep.subr.bf16.mxu0 0
        %1626 = vmatpush1.bf16.xpose.msra.mxu0 0
        %1627 = vmatprep.subr.bf16.mxu0 0
        %1628 = vmatpush1.bf16.xpose.msra.mxu0 0
        %1629 = vmatprep.subr.bf16.mxu0 0
        %1630 = vmatpush1.bf16.xpose.msra.mxu0 0
        %1631 = vmatprep.subr.bf16.mxu0 0
        %1632 = vmatpush1.bf16.xpose.msra.mxu0 0
        %1633 = vmatprep.subr.bf16.mxu0 0
        %1634 = vmatpush1.bf16.xpose.msra.mxu0 %v1617
        %1635 = vmatprep.subr.bf16.mxu0 0
        %1636 = vmatpush2.bf16.xpose.msra.mxu0 0
        %1637 = vmatprep.subr.bf16.mxu0 0
        %1638 = vmatpush2.bf16.xpose.msra.mxu0 0
        %1639 = vmatprep.subr.bf16.mxu0 0
        %1640 = vmatpush2.bf16.xpose.msra.mxu0 0
        %1641 = vmatprep.subr.bf16.mxu0 0
        %1642 = vmatpush2.bf16.xpose.msra.mxu0 0
        %1643 = vmatprep.subr.bf16.mxu0 0
        %1644 = vmatpush2.bf16.xpose.msra.mxu0 0
        %1645 = vmatprep.subr.bf16.mxu0 0
        %1646 = vmatpush2.bf16.xpose.msra.mxu0 0
        %1647 = vmatprep.subr.bf16.mxu0 0
        %1648 = vmatpush2.bf16.xpose.msra.mxu0 0
        %1649 = vmatprep.subr.bf16.mxu0 0
        %1650 = vmatpush2.bf16.xpose.msra.mxu0 0
        %1651 = vmatprep.mubr.bf16.mxu0 0
        %1652 = vmatmul.mubr.bf16.gmra.mxu0 %v1614
        %v1653 = vpop.f32.mrf.mxu0
        %v1654 = vadd.f32 0.0, %v1653
        %v1655 = vpop.f32.mrf.mxu0
        %v1656 = vpop.f32.mrf.mxu0
        %v1657 = vadd.f32 0.0, %v1656
        %v1658 = vpop.f32.mrf.mxu0
        %1659 = vdwg.mxu0
        %v1660 = vmul.f32 %v1654, 0.17677669
        %v1661 = vmul.f32 %v1657, 0.17677669
        %v1662 = vsel %vm1334, %v1660, -inf
        %1663 = vmax.xlane.f32.xlu0 %v1662
        %v1664 = vpop.xlane.xlu0 %1663
        %v1665 = vsel %vm1334, %v1661, -inf
        %1666 = vmax.xlane.f32.xlu0 %v1665
        %v1667 = vpop.xlane.xlu0 %1666
        %v1668 = vsub.f32 %v1660, %v1664
        %v1669 = vsub.f32 %v1661, %v1667
        %v1670 = vmul.f32 %v1668, 1.442695
        %v1671 = vpow.pop %v1670
        %v1672 = vmul.f32 %v1669, 1.442695
        %v1673 = vpow.pop %v1672
        %v1674 = vsel %vm1334, %v1671, 0.0
        %1675 = vadd.xlane.f32.xlu0 %v1674
        %v1676 = vpop.xlane.xlu0 %1675
        %v1677 = vsel %vm1334, %v1673, 0.0
        %1678 = vadd.xlane.f32.xlu0 %v1677
        %v1679 = vpop.xlane.xlu0 %1678
        %v1680 = vrcp.pop %v1676
        %v1681 = vrcp.pop %v1679
        %v1682 = vmul.f32 %v1671, %v1680
        %v1683 = vmul.f32 %v1673, %v1681
        %v1684 = vpack.c.bf16 %v1683, %v1682
        %1686 = vrot.lane.b32.xlu0 %v1450, 96
        %v1687 = vpop.permute.xlu0 %1686
        %v1690 = vsel %vm1334, %v1684, 0
        %1692 = vmatprep.subr.bf16.mxu0 0
        %1693 = vmatpush1.bf16.msra.mxu0 0
        %1694 = vmatprep.subr.bf16.mxu0 0
        %1695 = vmatpush1.bf16.msra.mxu0 0
        %1696 = vmatprep.subr.bf16.mxu0 0
        %1697 = vmatpush1.bf16.msra.mxu0 0
        %1698 = vmatprep.subr.bf16.mxu0 0
        %1699 = vmatpush1.bf16.msra.mxu0 0
        %1700 = vmatprep.subr.bf16.mxu0 0
        %1701 = vmatpush1.bf16.msra.mxu0 0
        %1702 = vmatprep.subr.bf16.mxu0 0
        %1703 = vmatpush1.bf16.msra.mxu0 0
        %1704 = vmatprep.subr.bf16.mxu0 0
        %1705 = vmatpush1.bf16.msra.mxu0 0
        %1706 = vmatprep.subr.bf16.mxu0 0
        %1707 = vmatpush1.bf16.msra.mxu0 %v1687
        %1708 = vmatprep.subr.bf16.mxu0 0
        %1709 = vmatpush2.bf16.msra.mxu0 0
        %1710 = vmatprep.subr.bf16.mxu0 0
        %1711 = vmatpush2.bf16.msra.mxu0 0
        %1712 = vmatprep.subr.bf16.mxu0 0
        %1713 = vmatpush2.bf16.msra.mxu0 0
        %1714 = vmatprep.subr.bf16.mxu0 0
        %1715 = vmatpush2.bf16.msra.mxu0 0
        %1716 = vmatprep.subr.bf16.mxu0 0
        %1717 = vmatpush2.bf16.msra.mxu0 0
        %1718 = vmatprep.subr.bf16.mxu0 0
        %1719 = vmatpush2.bf16.msra.mxu0 0
        %1720 = vmatprep.subr.bf16.mxu0 0
        %1721 = vmatpush2.bf16.msra.mxu0 0
        %1722 = vmatprep.subr.bf16.mxu0 0
        %1723 = vmatpush2.bf16.msra.mxu0 0
        %1724 = vmatprep.mubr.bf16.mxu0 0
        %1725 = vmatmul.mubr.bf16.gmra.mxu0 %v1690
        %v1726 = vpop.f32.mrf.mxu0
        %v1727 = vadd.f32 0.0, %v1726
        %v1728 = vpop.f32.mrf.mxu0
        %v1729 = vpop.f32.mrf.mxu0
        %v1730 = vadd.f32 0.0, %v1729
        %v1731 = vpop.f32.mrf.mxu0
        %1732 = vdwg.mxu0
        %1733 = vrot.lane.b32.xlu0 %v858, 64
        %v1734 = vpop.permute.xlu0 %1733
        %1735 = vrot.lane.b32.xlu0 %v859, 64
        %v1736 = vpop.permute.xlu0 %1735
        %v1739 = vmul.f32 %v1233, %v1734
        %v1740 = vmul.f32 %v1237, %v1736
        %1741 = vrot.lane.b32.xlu0 %v860, 80
        %v1742 = vpop.permute.xlu0 %1741
        %1743 = vrot.lane.b32.xlu0 %v861, 80
        %v1744 = vpop.permute.xlu0 %1743
        %v1747 = vmul.f32 %v1233, %v1742
        %v1748 = vmul.f32 %v1237, %v1744
        %1751 = vrot.lane.b32.xlu0 %v1747, 112
        %v1752 = vpop.permute.xlu0 %1751
        %1753 = vrot.lane.b32.xlu0 %v1748, 112
        %v1754 = vpop.permute.xlu0 %1753
        %v1757 = vsub.f32 %v1739, %v1752
        %v1758 = vsub.f32 %v1740, %v1754
        %1759 = vrot.lane.b32.xlu0 %v860, 64
        %v1760 = vpop.permute.xlu0 %1759
        %1761 = vrot.lane.b32.xlu0 %v861, 64
        %v1762 = vpop.permute.xlu0 %1761
        %v1765 = vmul.f32 %v1233, %v1760
        %v1766 = vmul.f32 %v1237, %v1762
        %1767 = vrot.lane.b32.xlu0 %v858, 80
        %v1768 = vpop.permute.xlu0 %1767
        %1769 = vrot.lane.b32.xlu0 %v859, 80
        %v1770 = vpop.permute.xlu0 %1769
        %v1773 = vmul.f32 %v1233, %v1768
        %v1774 = vmul.f32 %v1237, %v1770
        %1777 = vrot.lane.b32.xlu0 %v1773, 112
        %v1778 = vpop.permute.xlu0 %1777
        %1779 = vrot.lane.b32.xlu0 %v1774, 112
        %v1780 = vpop.permute.xlu0 %1779
        %v1783 = vadd.f32 %v1765, %v1778
        %v1784 = vadd.f32 %v1766, %v1780
        %1787 = vrot.lane.b32.xlu0 %v1757, 64
        %v1788 = vpop.permute.xlu0 %1787
        %1789 = vrot.lane.b32.xlu0 %v1758, 64
        %v1790 = vpop.permute.xlu0 %1789
        %1795 = vrot.lane.b32.xlu0 %v1783, 80
        %v1796 = vpop.permute.xlu0 %1795
        %1797 = vrot.lane.b32.xlu0 %v1784, 80
        %v1798 = vpop.permute.xlu0 %1797
        %v1801 = vsel %vm1334, %v1788, %v1796
        %v1802 = vsel %vm1334, %v1790, %v1798
        %v1803 = vmul.f32 %v1235, %v1734
        %v1804 = vmul.f32 %v1239, %v1736
        %v1805 = vmul.f32 %v1235, %v1742
        %v1806 = vmul.f32 %v1239, %v1744
        %1809 = vrot.lane.b32.xlu0 %v1805, 112
        %v1810 = vpop.permute.xlu0 %1809
        %1811 = vrot.lane.b32.xlu0 %v1806, 112
        %v1812 = vpop.permute.xlu0 %1811
        %v1815 = vsub.f32 %v1803, %v1810
        %v1816 = vsub.f32 %v1804, %v1812
        %v1817 = vmul.f32 %v1235, %v1760
        %v1818 = vmul.f32 %v1239, %v1762
        %v1819 = vmul.f32 %v1235, %v1768
        %v1820 = vmul.f32 %v1239, %v1770
        %1823 = vrot.lane.b32.xlu0 %v1819, 112
        %v1824 = vpop.permute.xlu0 %1823
        %1825 = vrot.lane.b32.xlu0 %v1820, 112
        %v1826 = vpop.permute.xlu0 %1825
        %v1829 = vadd.f32 %v1817, %v1824
        %v1830 = vadd.f32 %v1818, %v1826
        %1833 = vrot.lane.b32.xlu0 %v1815, 64
        %v1834 = vpop.permute.xlu0 %1833
        %1835 = vrot.lane.b32.xlu0 %v1816, 64
        %v1836 = vpop.permute.xlu0 %1835
        %1841 = vrot.lane.b32.xlu0 %v1829, 80
        %v1842 = vpop.permute.xlu0 %1841
        %1843 = vrot.lane.b32.xlu0 %v1830, 80
        %v1844 = vpop.permute.xlu0 %1843
        %v1847 = vsel %vm1334, %v1834, %v1842
        %v1848 = vsel %vm1334, %v1836, %v1844
        %v1849 = vpack.c.bf16 %v1802, %v1801
        %v1850 = vpack.c.bf16 %v1848, %v1847
        %v1852 = vsel %vm1377, %v1849, 0
        %v1855 = vsel %vm1377, %v1850, 0
        %1857 = vmatprep.subr.bf16.mxu0 0
        %1858 = vmatpush1.bf16.xpose.msra.mxu0 0
        %1859 = vmatprep.subr.bf16.mxu0 0
        %1860 = vmatpush1.bf16.xpose.msra.mxu0 0
        %1861 = vmatprep.subr.bf16.mxu0 0
        %1862 = vmatpush1.bf16.xpose.msra.mxu0 0
        %1863 = vmatprep.subr.bf16.mxu0 0
        %1864 = vmatpush1.bf16.xpose.msra.mxu0 0
        %1865 = vmatprep.subr.bf16.mxu0 0
        %1866 = vmatpush1.bf16.xpose.msra.mxu0 0
        %1867 = vmatprep.subr.bf16.mxu0 0
        %1868 = vmatpush1.bf16.xpose.msra.mxu0 0
        %1869 = vmatprep.subr.bf16.mxu0 0
        %1870 = vmatpush1.bf16.xpose.msra.mxu0 0
        %1871 = vmatprep.subr.bf16.mxu0 0
        %1872 = vmatpush1.bf16.xpose.msra.mxu0 %v1855
        %1873 = vmatprep.subr.bf16.mxu0 0
        %1874 = vmatpush2.bf16.xpose.msra.mxu0 0
        %1875 = vmatprep.subr.bf16.mxu0 0
        %1876 = vmatpush2.bf16.xpose.msra.mxu0 0
        %1877 = vmatprep.subr.bf16.mxu0 0
        %1878 = vmatpush2.bf16.xpose.msra.mxu0 0
        %1879 = vmatprep.subr.bf16.mxu0 0
        %1880 = vmatpush2.bf16.xpose.msra.mxu0 0
        %1881 = vmatprep.subr.bf16.mxu0 0
        %1882 = vmatpush2.bf16.xpose.msra.mxu0 0
        %1883 = vmatprep.subr.bf16.mxu0 0
        %1884 = vmatpush2.bf16.xpose.msra.mxu0 0
        %1885 = vmatprep.subr.bf16.mxu0 0
        %1886 = vmatpush2.bf16.xpose.msra.mxu0 0
        %1887 = vmatprep.subr.bf16.mxu0 0
        %1888 = vmatpush2.bf16.xpose.msra.mxu0 0
        %1889 = vmatprep.mubr.bf16.mxu0 0
        %1890 = vmatmul.mubr.bf16.gmra.mxu0 %v1852
        %v1891 = vpop.f32.mrf.mxu0
        %v1892 = vadd.f32 0.0, %v1891
        %v1893 = vpop.f32.mrf.mxu0
        %v1894 = vpop.f32.mrf.mxu0
        %v1895 = vadd.f32 0.0, %v1894
        %v1896 = vpop.f32.mrf.mxu0
        %1897 = vdwg.mxu0
        %v1898 = vmul.f32 %v1892, 0.17677669
        %v1899 = vmul.f32 %v1895, 0.17677669
        %v1900 = vsel %vm1334, %v1898, -inf
        %1901 = vmax.xlane.f32.xlu0 %v1900
        %v1902 = vpop.xlane.xlu0 %1901
        %v1903 = vsel %vm1334, %v1899, -inf
        %1904 = vmax.xlane.f32.xlu0 %v1903
        %v1905 = vpop.xlane.xlu0 %1904
        %v1906 = vsub.f32 %v1898, %v1902
        %v1907 = vsub.f32 %v1899, %v1905
        %v1908 = vmul.f32 %v1906, 1.442695
        %v1909 = vpow.pop %v1908
        %v1910 = vmul.f32 %v1907, 1.442695
        %v1911 = vpow.pop %v1910
        %v1912 = vsel %vm1334, %v1909, 0.0
        %1913 = vadd.xlane.f32.xlu0 %v1912
        %v1914 = vpop.xlane.xlu0 %1913
        %v1915 = vsel %vm1334, %v1911, 0.0
        %1916 = vadd.xlane.f32.xlu0 %v1915
        %v1917 = vpop.xlane.xlu0 %1916
        %v1918 = vrcp.pop %v1914
        %v1919 = vrcp.pop %v1917
        %v1920 = vmul.f32 %v1909, %v1918
        %v1921 = vmul.f32 %v1911, %v1919
        %v1922 = vpack.c.bf16 %v1921, %v1920
        %1923 = vrot.lane.b32.xlu0 %v1450, 64
        %v1924 = vpop.permute.xlu0 %1923
        %v1927 = vsel %vm1334, %v1922, 0
        %1929 = vmatprep.subr.bf16.mxu0 0
        %1930 = vmatpush1.bf16.msra.mxu0 0
        %1931 = vmatprep.subr.bf16.mxu0 0
        %1932 = vmatpush1.bf16.msra.mxu0 0
        %1933 = vmatprep.subr.bf16.mxu0 0
        %1934 = vmatpush1.bf16.msra.mxu0 0
        %1935 = vmatprep.subr.bf16.mxu0 0
        %1936 = vmatpush1.bf16.msra.mxu0 0
        %1937 = vmatprep.subr.bf16.mxu0 0
        %1938 = vmatpush1.bf16.msra.mxu0 0
        %1939 = vmatprep.subr.bf16.mxu0 0
        %1940 = vmatpush1.bf16.msra.mxu0 0
        %1941 = vmatprep.subr.bf16.mxu0 0
        %1942 = vmatpush1.bf16.msra.mxu0 0
        %1943 = vmatprep.subr.bf16.mxu0 0
        %1944 = vmatpush1.bf16.msra.mxu0 %v1924
        %1945 = vmatprep.subr.bf16.mxu0 0
        %1946 = vmatpush2.bf16.msra.mxu0 0
        %1947 = vmatprep.subr.bf16.mxu0 0
        %1948 = vmatpush2.bf16.msra.mxu0 0
        %1949 = vmatprep.subr.bf16.mxu0 0
        %1950 = vmatpush2.bf16.msra.mxu0 0
        %1951 = vmatprep.subr.bf16.mxu0 0
        %1952 = vmatpush2.bf16.msra.mxu0 0
        %1953 = vmatprep.subr.bf16.mxu0 0
        %1954 = vmatpush2.bf16.msra.mxu0 0
        %1955 = vmatprep.subr.bf16.mxu0 0
        %1956 = vmatpush2.bf16.msra.mxu0 0
        %1957 = vmatprep.subr.bf16.mxu0 0
        %1958 = vmatpush2.bf16.msra.mxu0 0
        %1959 = vmatprep.subr.bf16.mxu0 0
        %1960 = vmatpush2.bf16.msra.mxu0 0
        %1961 = vmatprep.mubr.bf16.mxu0 0
        %1962 = vmatmul.mubr.bf16.gmra.mxu0 %v1927
        %v1963 = vpop.f32.mrf.mxu0
        %v1964 = vadd.f32 0.0, %v1963
        %v1965 = vpop.f32.mrf.mxu0
        %v1966 = vpop.f32.mrf.mxu0
        %v1967 = vadd.f32 0.0, %v1966
        %v1968 = vpop.f32.mrf.mxu0
        %1969 = vdwg.mxu0
        %1970 = vrot.lane.b32.xlu0 %v858, 96
        %v1971 = vpop.permute.xlu0 %1970
        %1972 = vrot.lane.b32.xlu0 %v859, 96
        %v1973 = vpop.permute.xlu0 %1972
        %v1976 = vmul.f32 %v1233, %v1971
        %v1977 = vmul.f32 %v1237, %v1973
        %1978 = vrot.lane.b32.xlu0 %v860, 112
        %v1979 = vpop.permute.xlu0 %1978
        %1980 = vrot.lane.b32.xlu0 %v861, 112
        %v1981 = vpop.permute.xlu0 %1980
        %v1984 = vmul.f32 %v1233, %v1979
        %v1985 = vmul.f32 %v1237, %v1981
        %1988 = vrot.lane.b32.xlu0 %v1984, 112
        %v1989 = vpop.permute.xlu0 %1988
        %1990 = vrot.lane.b32.xlu0 %v1985, 112
        %v1991 = vpop.permute.xlu0 %1990
        %v1994 = vsub.f32 %v1976, %v1989
        %v1995 = vsub.f32 %v1977, %v1991
        %1996 = vrot.lane.b32.xlu0 %v860, 96
        %v1997 = vpop.permute.xlu0 %1996
        %1998 = vrot.lane.b32.xlu0 %v861, 96
        %v1999 = vpop.permute.xlu0 %1998
        %v2002 = vmul.f32 %v1233, %v1997
        %v2003 = vmul.f32 %v1237, %v1999
        %2004 = vrot.lane.b32.xlu0 %v858, 112
        %v2005 = vpop.permute.xlu0 %2004
        %2006 = vrot.lane.b32.xlu0 %v859, 112
        %v2007 = vpop.permute.xlu0 %2006
        %v2010 = vmul.f32 %v1233, %v2005
        %v2011 = vmul.f32 %v1237, %v2007
        %2014 = vrot.lane.b32.xlu0 %v2010, 112
        %v2015 = vpop.permute.xlu0 %2014
        %2016 = vrot.lane.b32.xlu0 %v2011, 112
        %v2017 = vpop.permute.xlu0 %2016
        %v2020 = vadd.f32 %v2002, %v2015
        %v2021 = vadd.f32 %v2003, %v2017
        %2024 = vrot.lane.b32.xlu0 %v1994, 32
        %v2025 = vpop.permute.xlu0 %2024
        %2026 = vrot.lane.b32.xlu0 %v1995, 32
        %v2027 = vpop.permute.xlu0 %2026
        %2032 = vrot.lane.b32.xlu0 %v2020, 48
        %v2033 = vpop.permute.xlu0 %2032
        %2034 = vrot.lane.b32.xlu0 %v2021, 48
        %v2035 = vpop.permute.xlu0 %2034
        %v2038 = vsel %vm1334, %v2025, %v2033
        %v2039 = vsel %vm1334, %v2027, %v2035
        %v2040 = vmul.f32 %v1235, %v1971
        %v2041 = vmul.f32 %v1239, %v1973
        %v2042 = vmul.f32 %v1235, %v1979
        %v2043 = vmul.f32 %v1239, %v1981
        %2046 = vrot.lane.b32.xlu0 %v2042, 112
        %v2047 = vpop.permute.xlu0 %2046
        %2048 = vrot.lane.b32.xlu0 %v2043, 112
        %v2049 = vpop.permute.xlu0 %2048
        %v2052 = vsub.f32 %v2040, %v2047
        %v2053 = vsub.f32 %v2041, %v2049
        %v2054 = vmul.f32 %v1235, %v1997
        %v2055 = vmul.f32 %v1239, %v1999
        %v2056 = vmul.f32 %v1235, %v2005
        %v2057 = vmul.f32 %v1239, %v2007
        %2060 = vrot.lane.b32.xlu0 %v2056, 112
        %v2061 = vpop.permute.xlu0 %2060
        %2062 = vrot.lane.b32.xlu0 %v2057, 112
        %v2063 = vpop.permute.xlu0 %2062
        %v2066 = vadd.f32 %v2054, %v2061
        %v2067 = vadd.f32 %v2055, %v2063
        %2070 = vrot.lane.b32.xlu0 %v2052, 32
        %v2071 = vpop.permute.xlu0 %2070
        %2072 = vrot.lane.b32.xlu0 %v2053, 32
        %v2073 = vpop.permute.xlu0 %2072
        %2078 = vrot.lane.b32.xlu0 %v2066, 48
        %v2079 = vpop.permute.xlu0 %2078
        %2080 = vrot.lane.b32.xlu0 %v2067, 48
        %v2081 = vpop.permute.xlu0 %2080
        %v2084 = vsel %vm1334, %v2071, %v2079
        %v2085 = vsel %vm1334, %v2073, %v2081
        %v2086 = vpack.c.bf16 %v2039, %v2038
        %v2087 = vpack.c.bf16 %v2085, %v2084
        %v2089 = vsel %vm1377, %v2086, 0
        %v2092 = vsel %vm1377, %v2087, 0
        %2094 = vmatprep.subr.bf16.mxu0 0
        %2095 = vmatpush1.bf16.xpose.msra.mxu0 0
        %2096 = vmatprep.subr.bf16.mxu0 0
        %2097 = vmatpush1.bf16.xpose.msra.mxu0 0
        %2098 = vmatprep.subr.bf16.mxu0 0
        %2099 = vmatpush1.bf16.xpose.msra.mxu0 0
        %2100 = vmatprep.subr.bf16.mxu0 0
        %2101 = vmatpush1.bf16.xpose.msra.mxu0 0
        %2102 = vmatprep.subr.bf16.mxu0 0
        %2103 = vmatpush1.bf16.xpose.msra.mxu0 0
        %2104 = vmatprep.subr.bf16.mxu0 0
        %2105 = vmatpush1.bf16.xpose.msra.mxu0 0
        %2106 = vmatprep.subr.bf16.mxu0 0
        %2107 = vmatpush1.bf16.xpose.msra.mxu0 0
        %2108 = vmatprep.subr.bf16.mxu0 0
        %2109 = vmatpush1.bf16.xpose.msra.mxu0 %v2092
        %2110 = vmatprep.subr.bf16.mxu0 0
        %2111 = vmatpush2.bf16.xpose.msra.mxu0 0
        %2112 = vmatprep.subr.bf16.mxu0 0
        %2113 = vmatpush2.bf16.xpose.msra.mxu0 0
        %2114 = vmatprep.subr.bf16.mxu0 0
        %2115 = vmatpush2.bf16.xpose.msra.mxu0 0
        %2116 = vmatprep.subr.bf16.mxu0 0
        %2117 = vmatpush2.bf16.xpose.msra.mxu0 0
        %2118 = vmatprep.subr.bf16.mxu0 0
        %2119 = vmatpush2.bf16.xpose.msra.mxu0 0
        %2120 = vmatprep.subr.bf16.mxu0 0
        %2121 = vmatpush2.bf16.xpose.msra.mxu0 0
        %2122 = vmatprep.subr.bf16.mxu0 0
        %2123 = vmatpush2.bf16.xpose.msra.mxu0 0
        %2124 = vmatprep.subr.bf16.mxu0 0
        %2125 = vmatpush2.bf16.xpose.msra.mxu0 0
        %2126 = vmatprep.mubr.bf16.mxu0 0
        %2127 = vmatmul.mubr.bf16.gmra.mxu0 %v2089
        %v2128 = vpop.f32.mrf.mxu0
        %v2129 = vadd.f32 0.0, %v2128
        %v2130 = vpop.f32.mrf.mxu0
        %v2131 = vpop.f32.mrf.mxu0
        %v2132 = vadd.f32 0.0, %v2131
        %v2133 = vpop.f32.mrf.mxu0
        %2134 = vdwg.mxu0
        %v2135 = vmul.f32 %v2129, 0.17677669
        %v2136 = vmul.f32 %v2132, 0.17677669
        %v2137 = vsel %vm1334, %v2135, -inf
        %2138 = vmax.xlane.f32.xlu0 %v2137
        %v2139 = vpop.xlane.xlu0 %2138
        %v2140 = vsel %vm1334, %v2136, -inf
        %2141 = vmax.xlane.f32.xlu0 %v2140
        %v2142 = vpop.xlane.xlu0 %2141
        %v2143 = vsub.f32 %v2135, %v2139
        %v2144 = vsub.f32 %v2136, %v2142
        %v2145 = vmul.f32 %v2143, 1.442695
        %v2146 = vpow.pop %v2145
        %v2147 = vmul.f32 %v2144, 1.442695
        %v2148 = vpow.pop %v2147
        %v2149 = vsel %vm1334, %v2146, 0.0
        %2150 = vadd.xlane.f32.xlu0 %v2149
        %v2151 = vpop.xlane.xlu0 %2150
        %v2152 = vsel %vm1334, %v2148, 0.0
        %2153 = vadd.xlane.f32.xlu0 %v2152
        %v2154 = vpop.xlane.xlu0 %2153
        %v2155 = vrcp.pop %v2151
        %v2156 = vrcp.pop %v2154
        %v2157 = vmul.f32 %v2146, %v2155
        %v2158 = vmul.f32 %v2148, %v2156
        %v2159 = vpack.c.bf16 %v2158, %v2157
        %2160 = vrot.lane.b32.xlu0 %v1450, 32
        %v2161 = vpop.permute.xlu0 %2160
        %v2164 = vsel %vm1334, %v2159, 0
        %2166 = vmatprep.subr.bf16.mxu0 0
        %2167 = vmatpush1.bf16.msra.mxu0 0
        %2168 = vmatprep.subr.bf16.mxu0 0
        %2169 = vmatpush1.bf16.msra.mxu0 0
        %2170 = vmatprep.subr.bf16.mxu0 0
        %2171 = vmatpush1.bf16.msra.mxu0 0
        %2172 = vmatprep.subr.bf16.mxu0 0
        %2173 = vmatpush1.bf16.msra.mxu0 0
        %2174 = vmatprep.subr.bf16.mxu0 0
        %2175 = vmatpush1.bf16.msra.mxu0 0
        %2176 = vmatprep.subr.bf16.mxu0 0
        %2177 = vmatpush1.bf16.msra.mxu0 0
        %2178 = vmatprep.subr.bf16.mxu0 0
        %2179 = vmatpush1.bf16.msra.mxu0 0
        %2180 = vmatprep.subr.bf16.mxu0 0
        %2181 = vmatpush1.bf16.msra.mxu0 %v2161
        %2182 = vmatprep.subr.bf16.mxu0 0
        %2183 = vmatpush2.bf16.msra.mxu0 0
        %2184 = vmatprep.subr.bf16.mxu0 0
        %2185 = vmatpush2.bf16.msra.mxu0 0
        %2186 = vmatprep.subr.bf16.mxu0 0
        %2187 = vmatpush2.bf16.msra.mxu0 0
        %2188 = vmatprep.subr.bf16.mxu0 0
        %2189 = vmatpush2.bf16.msra.mxu0 0
        %2190 = vmatprep.subr.bf16.mxu0 0
        %2191 = vmatpush2.bf16.msra.mxu0 0
        %2192 = vmatprep.subr.bf16.mxu0 0
        %2193 = vmatpush2.bf16.msra.mxu0 0
        %2194 = vmatprep.subr.bf16.mxu0 0
        %2195 = vmatpush2.bf16.msra.mxu0 0
        %2196 = vmatprep.subr.bf16.mxu0 0
        %2197 = vmatpush2.bf16.msra.mxu0 0
        %2198 = vmatprep.mubr.bf16.mxu0 0
        %2199 = vmatmul.mubr.bf16.gmra.mxu0 %v2164
        %v2200 = vpop.f32.mrf.mxu0
        %v2201 = vadd.f32 0.0, %v2200
        %v2202 = vpop.f32.mrf.mxu0
        %v2203 = vpop.f32.mrf.mxu0
        %v2204 = vadd.f32 0.0, %v2203
        %v2205 = vpop.f32.mrf.mxu0
        %2206 = vdwg.mxu0
        %2209 = vrot.lane.b32.xlu0 %v1727, 32
        %v2210 = vpop.permute.xlu0 %2209
        %2211 = vrot.lane.b32.xlu0 %v1730, 32
        %v2212 = vpop.permute.xlu0 %2211
        %2217 = vrot.lane.b32.xlu0 %v1964, 64
        %v2218 = vpop.permute.xlu0 %2217
        %2219 = vrot.lane.b32.xlu0 %v1967, 64
        %v2220 = vpop.permute.xlu0 %2219
        %2225 = vrot.lane.b32.xlu0 %v2201, 96
        %v2226 = vpop.permute.xlu0 %2225
        %2227 = vrot.lane.b32.xlu0 %v2204, 96
        %v2228 = vpop.permute.xlu0 %2227
        %v2231 = vsel %vm1377, %v1489, %v2210
        %v2232 = vsel %vm1377, %v1492, %v2212
        %vm2233 = vcmask 523264
        %v2234 = vsel %vm2233, %v2231, %v2218
        %v2235 = vsel %vm2233, %v2232, %v2220
        %vm2236 = vcmask 785408
        %v2237 = vsel %vm2236, %v2234, %v2226
        %v2238 = vsel %vm2236, %v2235, %v2228
        %v2239 = vpack.c.bf16 %v2238, %v2237
        %v2240 = vld [vmem:[%s8] sm:$0xf]
        %v2241 = vld [vmem:[%s8 + $0x4] sm:$0xf]
        %v2242 = vld [vmem:[%s8 + $0x8] sm:$0xf]
        %v2243 = vld [vmem:[%s8 + $0xc] sm:$0xf]
        %v2244 = vld [vmem:[%s8 + $0x10] sm:$0xf]
        %v2245 = vld [vmem:[%s8 + $0x14] sm:$0xf]
        %v2246 = vld [vmem:[%s8 + $0x18] sm:$0xf]
        %v2247 = vld [vmem:[%s8 + $0x1c] sm:$0xf]
        %v2248 = vld [vmem:[%s8 + $0x20] sm:$0xf]
        %v2249 = vld [vmem:[%s8 + $0x24] sm:$0xf]
        %v2250 = vld [vmem:[%s8 + $0x28] sm:$0xf]
        %v2251 = vld [vmem:[%s8 + $0x2c] sm:$0xf]
        %v2252 = vld [vmem:[%s8 + $0x30] sm:$0xf]
        %v2253 = vld [vmem:[%s8 + $0x34] sm:$0xf]
        %v2254 = vld [vmem:[%s8 + $0x38] sm:$0xf]
        %v2255 = vld [vmem:[%s8 + $0x3c] sm:$0xf]
        %v2272 = vunpack.c.l.b16 %v2240
        %v2273 = vunpack.c.l.b16 %v2241
        %v2274 = vunpack.c.l.b16 %v2242
        %v2275 = vunpack.c.l.b16 %v2243
        %v2276 = vunpack.c.l.b16 %v2244
        %v2277 = vunpack.c.l.b16 %v2245
        %v2278 = vunpack.c.l.b16 %v2246
        %v2279 = vunpack.c.l.b16 %v2247
        %v2280 = vunpack.c.l.b16 %v2248
        %v2281 = vunpack.c.l.b16 %v2249
        %v2282 = vunpack.c.l.b16 %v2250
        %v2283 = vunpack.c.l.b16 %v2251
        %v2284 = vunpack.c.l.b16 %v2252
        %v2285 = vunpack.c.l.b16 %v2253
        %v2286 = vunpack.c.l.b16 %v2254
        %v2287 = vunpack.c.l.b16 %v2255
        %v2288 = vpack.c.b16 %v2273, %v2272
        %v2289 = vpack.c.b16 %v2275, %v2274
        %v2290 = vpack.c.b16 %v2277, %v2276
        %v2291 = vpack.c.b16 %v2279, %v2278
        %v2292 = vpack.c.b16 %v2281, %v2280
        %v2293 = vpack.c.b16 %v2283, %v2282
        %v2294 = vpack.c.b16 %v2285, %v2284
        %v2295 = vpack.c.b16 %v2287, %v2286
        %2304 = vmatprep.subr.bf16.mxu0 0
        %2305 = vmatpush1.bf16.msra.mxu0 %v2295
        %2306 = vmatprep.subr.bf16.mxu0 0
        %2307 = vmatpush1.bf16.msra.mxu0 %v2294
        %2308 = vmatprep.subr.bf16.mxu0 0
        %2309 = vmatpush1.bf16.msra.mxu0 %v2293
        %2310 = vmatprep.subr.bf16.mxu0 0
        %2311 = vmatpush1.bf16.msra.mxu0 %v2292
        %2312 = vmatprep.subr.bf16.mxu0 0
        %2313 = vmatpush1.bf16.msra.mxu0 %v2291
        %2314 = vmatprep.subr.bf16.mxu0 0
        %2315 = vmatpush1.bf16.msra.mxu0 %v2290
        %2316 = vmatprep.subr.bf16.mxu0 0
        %2317 = vmatpush1.bf16.msra.mxu0 %v2289
        %2318 = vmatprep.subr.bf16.mxu0 0
        %2319 = vmatpush1.bf16.msra.mxu0 %v2288
        %2320 = vmatprep.subr.bf16.mxu0 0
        %2321 = vmatpush2.bf16.msra.mxu0 0
        %2322 = vmatprep.subr.bf16.mxu0 0
        %2323 = vmatpush2.bf16.msra.mxu0 0
        %2324 = vmatprep.subr.bf16.mxu0 0
        %2325 = vmatpush2.bf16.msra.mxu0 0
        %2326 = vmatprep.subr.bf16.mxu0 0
        %2327 = vmatpush2.bf16.msra.mxu0 0
        %2328 = vmatprep.subr.bf16.mxu0 0
        %2329 = vmatpush2.bf16.msra.mxu0 0
        %2330 = vmatprep.subr.bf16.mxu0 0
        %2331 = vmatpush2.bf16.msra.mxu0 0
        %2332 = vmatprep.subr.bf16.mxu0 0
        %2333 = vmatpush2.bf16.msra.mxu0 0
        %2334 = vmatprep.subr.bf16.mxu0 0
        %2335 = vmatpush2.bf16.msra.mxu0 0
        %2336 = vmatprep.mubr.bf16.mxu0 0
        %2337 = vmatmul.mubr.bf16.gmra.mxu0 %v2239
        %v2338 = vpop.f32.mrf.mxu0
        %v2339 = vadd.f32 0.0, %v2338
        %v2340 = vpop.f32.mrf.mxu0
        %v2341 = vpop.f32.mrf.mxu0
        %v2342 = vadd.f32 0.0, %v2341
        %v2343 = vpop.f32.mrf.mxu0
        %2344 = vdwg.mxu0
        %v2345 = vadd.f32 %v990, %v2339
        %v2346 = vadd.f32 %v993, %v2342
        %v2347 = vld [vmem:[#allocation4] sm:$0x1]
        %v2348 = vmul.f32 %v2345, %v2345
        %v2349 = vmul.f32 %v2346, %v2346
        %2350 = vadd.xlane.f32.xlu0 %v2348
        %v2351 = vpop.xlane.xlu0 %2350
        %2352 = vadd.xlane.f32.xlu0 %v2349
        %v2353 = vpop.xlane.xlu0 %2352
        %v2354 = vmul.f32 %v2351, %v1003
        %v2355 = vmul.f32 %v2353, %v1003
        %v2356 = vadd.f32 %v2354, 1e-05
        %v2357 = vadd.f32 %v2355, 1e-05
        %v2358 = vrsqrt.pop %v2356
        %v2359 = vrsqrt.pop %v2357
        %v2360 = vmul.f32 %v2345, %v2358
        %v2361 = vmul.f32 %v2346, %v2359
        %v2363 = vlaneseq
        %v2364 = vshrl.u32 %v2363, 7
        %v2365 = vsub.s32 0, %v2364
        %v2366 = vrot.slane %v2347, %v2365
        %v2368 = vmul.f32 %v2360, %v2366
        %v2369 = vmul.f32 %v2361, %v2366
        %v2370 = vpack.c.bf16 %v2369, %v2368
        %v2371 = vld [vmem:[%s10] sm:$0xff]
        %v2372 = vld [vmem:[%s10 + $0x8] sm:$0xf]
        %v2373 = vld [vmem:[%s10 + $0xc] sm:$0xff]
        %v2374 = vld [vmem:[%s10 + $0x14] sm:$0xf]
        %v2375 = vld [vmem:[%s10 + $0x18] sm:$0xff]
        %v2376 = vld [vmem:[%s10 + $0x20] sm:$0xf]
        %v2377 = vld [vmem:[%s10 + $0x24] sm:$0xff]
        %v2378 = vld [vmem:[%s10 + $0x2c] sm:$0xf]
        %v2379 = vld [vmem:[%s10 + $0x30] sm:$0xff]
        %v2380 = vld [vmem:[%s10 + $0x38] sm:$0xf]
        %v2381 = vld [vmem:[%s10 + $0x3c] sm:$0xff]
        %v2382 = vld [vmem:[%s10 + $0x44] sm:$0xf]
        %v2383 = vld [vmem:[%s10 + $0x48] sm:$0xff]
        %v2384 = vld [vmem:[%s10 + $0x50] sm:$0xf]
        %v2385 = vld [vmem:[%s10 + $0x54] sm:$0xff]
        %v2386 = vld [vmem:[%s10 + $0x5c] sm:$0xf]
        %v2387 = vld [vmem:[%s10 + $0x60] sm:$0xff]
        %v2388 = vld [vmem:[%s10 + $0x68] sm:$0xf]
        %v2389 = vld [vmem:[%s10 + $0x6c] sm:$0xff]
        %v2390 = vld [vmem:[%s10 + $0x74] sm:$0xf]
        %v2391 = vld [vmem:[%s10 + $0x78] sm:$0xff]
        %v2392 = vld [vmem:[%s10 + $0x80] sm:$0xf]
        %v2393 = vld [vmem:[%s10 + $0x84] sm:$0xff]
        %v2394 = vld [vmem:[%s10 + $0x8c] sm:$0xf]
        %v2395 = vld [vmem:[%s10 + $0x90] sm:$0xff]
        %v2396 = vld [vmem:[%s10 + $0x98] sm:$0xf]
        %v2397 = vld [vmem:[%s10 + $0x9c] sm:$0xff]
        %v2398 = vld [vmem:[%s10 + $0xa4] sm:$0xf]
        %v2399 = vld [vmem:[%s10 + $0xa8] sm:$0xff]
        %v2400 = vld [vmem:[%s10 + $0xb0] sm:$0xf]
        %v2401 = vld [vmem:[%s10 + $0xb4] sm:$0xff]
        %v2402 = vld [vmem:[%s10 + $0xbc] sm:$0xf]
        %v2435 = vunpack.c.l.b16 %v2371
        %v2436 = vunpack.c.h.b16 %v2371
        %v2437 = vunpack.c.l.b16 %v2372
        %v2438 = vunpack.c.l.b16 %v2373
        %v2439 = vunpack.c.h.b16 %v2373
        %v2440 = vunpack.c.l.b16 %v2374
        %v2441 = vunpack.c.l.b16 %v2375
        %v2442 = vunpack.c.h.b16 %v2375
        %v2443 = vunpack.c.l.b16 %v2376
        %v2444 = vunpack.c.l.b16 %v2377
        %v2445 = vunpack.c.h.b16 %v2377
        %v2446 = vunpack.c.l.b16 %v2378
        %v2447 = vunpack.c.l.b16 %v2379
        %v2448 = vunpack.c.h.b16 %v2379
        %v2449 = vunpack.c.l.b16 %v2380
        %v2450 = vunpack.c.l.b16 %v2381
        %v2451 = vunpack.c.h.b16 %v2381
        %v2452 = vunpack.c.l.b16 %v2382
        %v2453 = vunpack.c.l.b16 %v2383
        %v2454 = vunpack.c.h.b16 %v2383
        %v2455 = vunpack.c.l.b16 %v2384
        %v2456 = vunpack.c.l.b16 %v2385
        %v2457 = vunpack.c.h.b16 %v2385
        %v2458 = vunpack.c.l.b16 %v2386
        %v2459 = vunpack.c.l.b16 %v2387
        %v2460 = vunpack.c.h.b16 %v2387
        %v2461 = vunpack.c.l.b16 %v2388
        %v2462 = vunpack.c.l.b16 %v2389
        %v2463 = vunpack.c.h.b16 %v2389
        %v2464 = vunpack.c.l.b16 %v2390
        %v2465 = vunpack.c.l.b16 %v2391
        %v2466 = vunpack.c.h.b16 %v2391
        %v2467 = vunpack.c.l.b16 %v2392
        %v2468 = vunpack.c.l.b16 %v2393
        %v2469 = vunpack.c.h.b16 %v2393
        %v2470 = vunpack.c.l.b16 %v2394
        %v2471 = vunpack.c.l.b16 %v2395
        %v2472 = vunpack.c.h.b16 %v2395
        %v2473 = vunpack.c.l.b16 %v2396
        %v2474 = vunpack.c.l.b16 %v2397
        %v2475 = vunpack.c.h.b16 %v2397
        %v2476 = vunpack.c.l.b16 %v2398
        %v2477 = vunpack.c.l.b16 %v2399
        %v2478 = vunpack.c.h.b16 %v2399
        %v2479 = vunpack.c.l.b16 %v2400
        %v2480 = vunpack.c.l.b16 %v2401
        %v2481 = vunpack.c.h.b16 %v2401
        %v2482 = vunpack.c.l.b16 %v2402
        %v2483 = vpack.c.b16 %v2438, %v2435
        %v2484 = vpack.c.b16 %v2439, %v2436
        %v2485 = vpack.c.b16 %v2440, %v2437
        %v2486 = vpack.c.b16 %v2444, %v2441
        %v2487 = vpack.c.b16 %v2445, %v2442
        %v2488 = vpack.c.b16 %v2446, %v2443
        %v2489 = vpack.c.b16 %v2450, %v2447
        %v2490 = vpack.c.b16 %v2451, %v2448
        %v2491 = vpack.c.b16 %v2452, %v2449
        %v2492 = vpack.c.b16 %v2456, %v2453
        %v2493 = vpack.c.b16 %v2457, %v2454
        %v2494 = vpack.c.b16 %v2458, %v2455
        %v2495 = vpack.c.b16 %v2462, %v2459
        %v2496 = vpack.c.b16 %v2463, %v2460
        %v2497 = vpack.c.b16 %v2464, %v2461
        %v2498 = vpack.c.b16 %v2468, %v2465
        %v2499 = vpack.c.b16 %v2469, %v2466
        %v2500 = vpack.c.b16 %v2470, %v2467
        %v2501 = vpack.c.b16 %v2474, %v2471
        %v2502 = vpack.c.b16 %v2475, %v2472
        %v2503 = vpack.c.b16 %v2476, %v2473
        %v2504 = vpack.c.b16 %v2480, %v2477
        %v2505 = vpack.c.b16 %v2481, %v2478
        %v2506 = vpack.c.b16 %v2482, %v2479
        %2531 = vmatprep.subr.bf16.mxu0 %v2505
        %2532 = vmatpush1.bf16.msra.mxu0 %v2504
        %2533 = vmatprep.subr.bf16.mxu0 %v2502
        %2534 = vmatpush1.bf16.msra.mxu0 %v2501
        %2535 = vmatprep.subr.bf16.mxu0 %v2499
        %2536 = vmatpush1.bf16.msra.mxu0 %v2498
        %2537 = vmatprep.subr.bf16.mxu0 %v2496
        %2538 = vmatpush1.bf16.msra.mxu0 %v2495
        %2539 = vmatprep.subr.bf16.mxu0 %v2493
        %2540 = vmatpush1.bf16.msra.mxu0 %v2492
        %2541 = vmatprep.subr.bf16.mxu0 %v2490
        %2542 = vmatpush1.bf16.msra.mxu0 %v2489
        %2543 = vmatprep.subr.bf16.mxu0 %v2487
        %2544 = vmatpush1.bf16.msra.mxu0 %v2486
        %2545 = vmatprep.subr.bf16.mxu0 %v2484
        %2546 = vmatpush1.bf16.msra.mxu0 %v2483
        %2547 = vmatprep.subr.bf16.mxu0 0
        %2548 = vmatpush2.bf16.msra.mxu0 0
        %2549 = vmatprep.subr.bf16.mxu0 0
        %2550 = vmatpush2.bf16.msra.mxu0 0
        %2551 = vmatprep.subr.bf16.mxu0 0
        %2552 = vmatpush2.bf16.msra.mxu0 0
        %2553 = vmatprep.subr.bf16.mxu0 0
        %2554 = vmatpush2.bf16.msra.mxu0 0
        %2555 = vmatprep.subr.bf16.mxu0 0
        %2556 = vmatpush2.bf16.msra.mxu0 0
        %2557 = vmatprep.subr.bf16.mxu0 0
        %2558 = vmatpush2.bf16.msra.mxu0 0
        %2559 = vmatprep.subr.bf16.mxu0 0
        %2560 = vmatpush2.bf16.msra.mxu0 0
        %2561 = vmatprep.subr.bf16.mxu0 0
        %2562 = vmatpush2.bf16.msra.mxu0 0
        %2563 = vmatprep.mubr.bf16.mxu0 0
        %2564 = vmatmul.mubr.bf16.gmra.mxu0 %v2370
        %v2565 = vpop.f32.mrf.mxu0
        %v2566 = vadd.f32 0.0, %v2565
        %v2567 = vpop.f32.mrf.mxu0
        %v2568 = vadd.f32 0.0, %v2567
        %v2569 = vpop.f32.mrf.mxu0
        %v2570 = vadd.f32 0.0, %v2569
        %v2571 = vpop.f32.mrf.mxu0
        %v2572 = vadd.f32 0.0, %v2571
        %2573 = vdwg.mxu0
        %2574 = vmatprep.subr.bf16.mxu0 0
        %2575 = vmatpush1.bf16.msra.mxu0 %v2506
        %2576 = vmatprep.subr.bf16.mxu0 0
        %2577 = vmatpush1.bf16.msra.mxu0 %v2503
        %2578 = vmatprep.subr.bf16.mxu0 0
        %2579 = vmatpush1.bf16.msra.mxu0 %v2500
        %2580 = vmatprep.subr.bf16.mxu0 0
        %2581 = vmatpush1.bf16.msra.mxu0 %v2497
        %2582 = vmatprep.subr.bf16.mxu0 0
        %2583 = vmatpush1.bf16.msra.mxu0 %v2494
        %2584 = vmatprep.subr.bf16.mxu0 0
        %2585 = vmatpush1.bf16.msra.mxu0 %v2491
        %2586 = vmatprep.subr.bf16.mxu0 0
        %2587 = vmatpush1.bf16.msra.mxu0 %v2488
        %2588 = vmatprep.subr.bf16.mxu0 0
        %2589 = vmatpush1.bf16.msra.mxu0 %v2485
        %2590 = vmatprep.subr.bf16.mxu0 0
        %2591 = vmatpush2.bf16.msra.mxu0 0
        %2592 = vmatprep.subr.bf16.mxu0 0
        %2593 = vmatpush2.bf16.msra.mxu0 0
        %2594 = vmatprep.subr.bf16.mxu0 0
        %2595 = vmatpush2.bf16.msra.mxu0 0
        %2596 = vmatprep.subr.bf16.mxu0 0
        %2597 = vmatpush2.bf16.msra.mxu0 0
        %2598 = vmatprep.subr.bf16.mxu0 0
        %2599 = vmatpush2.bf16.msra.mxu0 0
        %2600 = vmatprep.subr.bf16.mxu0 0
        %2601 = vmatpush2.bf16.msra.mxu0 0
        %2602 = vmatprep.subr.bf16.mxu0 0
        %2603 = vmatpush2.bf16.msra.mxu0 0
        %2604 = vmatprep.subr.bf16.mxu0 0
        %2605 = vmatpush2.bf16.msra.mxu0 0
        %2606 = vmatprep.mubr.bf16.mxu0 0
        %2607 = vmatmul.mubr.bf16.gmra.mxu0 %v2370
        %v2608 = vpop.f32.mrf.mxu0
        %v2609 = vadd.f32 0.0, %v2608
        %v2610 = vpop.f32.mrf.mxu0
        %v2611 = vpop.f32.mrf.mxu0
        %v2612 = vadd.f32 0.0, %v2611
        %v2613 = vpop.f32.mrf.mxu0
        %2614 = vdwg.mxu0
        %v2615 = vld [vmem:[%s11] sm:$0xff]
        %v2616 = vld [vmem:[%s11 + $0x8] sm:$0xf]
        %v2617 = vld [vmem:[%s11 + $0xc] sm:$0xff]
        %v2618 = vld [vmem:[%s11 + $0x14] sm:$0xf]
        %v2619 = vld [vmem:[%s11 + $0x18] sm:$0xff]
        %v2620 = vld [vmem:[%s11 + $0x20] sm:$0xf]
        %v2621 = vld [vmem:[%s11 + $0x24] sm:$0xff]
        %v2622 = vld [vmem:[%s11 + $0x2c] sm:$0xf]
        %v2623 = vld [vmem:[%s11 + $0x30] sm:$0xff]
        %v2624 = vld [vmem:[%s11 + $0x38] sm:$0xf]
        %v2625 = vld [vmem:[%s11 + $0x3c] sm:$0xff]
        %v2626 = vld [vmem:[%s11 + $0x44] sm:$0xf]
        %v2627 = vld [vmem:[%s11 + $0x48] sm:$0xff]
        %v2628 = vld [vmem:[%s11 + $0x50] sm:$0xf]
        %v2629 = vld [vmem:[%s11 + $0x54] sm:$0xff]
        %v2630 = vld [vmem:[%s11 + $0x5c] sm:$0xf]
        %v2631 = vld [vmem:[%s11 + $0x60] sm:$0xff]
        %v2632 = vld [vmem:[%s11 + $0x68] sm:$0xf]
        %v2633 = vld [vmem:[%s11 + $0x6c] sm:$0xff]
        %v2634 = vld [vmem:[%s11 + $0x74] sm:$0xf]
        %v2635 = vld [vmem:[%s11 + $0x78] sm:$0xff]
        %v2636 = vld [vmem:[%s11 + $0x80] sm:$0xf]
        %v2637 = vld [vmem:[%s11 + $0x84] sm:$0xff]
        %v2638 = vld [vmem:[%s11 + $0x8c] sm:$0xf]
        %v2639 = vld [vmem:[%s11 + $0x90] sm:$0xff]
        %v2640 = vld [vmem:[%s11 + $0x98] sm:$0xf]
        %v2641 = vld [vmem:[%s11 + $0x9c] sm:$0xff]
        %v2642 = vld [vmem:[%s11 + $0xa4] sm:$0xf]
        %v2643 = vld [vmem:[%s11 + $0xa8] sm:$0xff]
        %v2644 = vld [vmem:[%s11 + $0xb0] sm:$0xf]
        %v2645 = vld [vmem:[%s11 + $0xb4] sm:$0xff]
        %v2646 = vld [vmem:[%s11 + $0xbc] sm:$0xf]
        %v2647 = vld [vmem:[%s12] sm:$0x7]
        %v2649 = vlaneseq
        %v2650 = vshrl.u32 %v2649, 7
        %v2651 = vsub.s32 0, %v2650
        %v2652 = vrot.slane %v2647, %v2651
        %v2653 = vlaneseq
        %v2654 = vshrl.u32 %v2653, 7
        %v2655 = vsub.s32 1, %v2654
        %v2656 = vrot.slane %v2647, %v2655
        %v2657 = vlaneseq
        %v2658 = vshrl.u32 %v2657, 7
        %v2659 = vsub.s32 2, %v2658
        %v2660 = vrot.slane %v2647, %v2659
        %v2696 = vunpack.c.l.b16 %v2615
        %v2697 = vunpack.c.h.b16 %v2615
        %v2698 = vunpack.c.l.b16 %v2616
        %v2699 = vunpack.c.l.b16 %v2617
        %v2700 = vunpack.c.h.b16 %v2617
        %v2701 = vunpack.c.l.b16 %v2618
        %v2702 = vunpack.c.l.b16 %v2619
        %v2703 = vunpack.c.h.b16 %v2619
        %v2704 = vunpack.c.l.b16 %v2620
        %v2705 = vunpack.c.l.b16 %v2621
        %v2706 = vunpack.c.h.b16 %v2621
        %v2707 = vunpack.c.l.b16 %v2622
        %v2708 = vunpack.c.l.b16 %v2623
        %v2709 = vunpack.c.h.b16 %v2623
        %v2710 = vunpack.c.l.b16 %v2624
        %v2711 = vunpack.c.l.b16 %v2625
        %v2712 = vunpack.c.h.b16 %v2625
        %v2713 = vunpack.c.l.b16 %v2626
        %v2714 = vunpack.c.l.b16 %v2627
        %v2715 = vunpack.c.h.b16 %v2627
        %v2716 = vunpack.c.l.b16 %v2628
        %v2717 = vunpack.c.l.b16 %v2629
        %v2718 = vunpack.c.h.b16 %v2629
        %v2719 = vunpack.c.l.b16 %v2630
        %v2720 = vunpack.c.l.b16 %v2631
        %v2721 = vunpack.c.h.b16 %v2631
        %v2722 = vunpack.c.l.b16 %v2632
        %v2723 = vunpack.c.l.b16 %v2633
        %v2724 = vunpack.c.h.b16 %v2633
        %v2725 = vunpack.c.l.b16 %v2634
        %v2726 = vunpack.c.l.b16 %v2635
        %v2727 = vunpack.c.h.b16 %v2635
        %v2728 = vunpack.c.l.b16 %v2636
        %v2729 = vunpack.c.l.b16 %v2637
        %v2730 = vunpack.c.h.b16 %v2637
        %v2731 = vunpack.c.l.b16 %v2638
        %v2732 = vunpack.c.l.b16 %v2639
        %v2733 = vunpack.c.h.b16 %v2639
        %v2734 = vunpack.c.l.b16 %v2640
        %v2735 = vunpack.c.l.b16 %v2641
        %v2736 = vunpack.c.h.b16 %v2641
        %v2737 = vunpack.c.l.b16 %v2642
        %v2738 = vunpack.c.l.b16 %v2643
        %v2739 = vunpack.c.h.b16 %v2643
        %v2740 = vunpack.c.l.b16 %v2644
        %v2741 = vunpack.c.l.b16 %v2645
        %v2742 = vunpack.c.h.b16 %v2645
        %v2743 = vunpack.c.l.b16 %v2646
        %v2744 = vpack.c.b16 %v2699, %v2696
        %v2745 = vpack.c.b16 %v2700, %v2697
        %v2746 = vpack.c.b16 %v2701, %v2698
        %v2747 = vpack.c.b16 %v2705, %v2702
        %v2748 = vpack.c.b16 %v2706, %v2703
        %v2749 = vpack.c.b16 %v2707, %v2704
        %v2750 = vpack.c.b16 %v2711, %v2708
        %v2751 = vpack.c.b16 %v2712, %v2709
        %v2752 = vpack.c.b16 %v2713, %v2710
        %v2753 = vpack.c.b16 %v2717, %v2714
        %v2754 = vpack.c.b16 %v2718, %v2715
        %v2755 = vpack.c.b16 %v2719, %v2716
        %v2756 = vpack.c.b16 %v2723, %v2720
        %v2757 = vpack.c.b16 %v2724, %v2721
        %v2758 = vpack.c.b16 %v2725, %v2722
        %v2759 = vpack.c.b16 %v2729, %v2726
        %v2760 = vpack.c.b16 %v2730, %v2727
        %v2761 = vpack.c.b16 %v2731, %v2728
        %v2762 = vpack.c.b16 %v2735, %v2732
        %v2763 = vpack.c.b16 %v2736, %v2733
        %v2764 = vpack.c.b16 %v2737, %v2734
        %v2765 = vpack.c.b16 %v2741, %v2738
        %v2766 = vpack.c.b16 %v2742, %v2739
        %v2767 = vpack.c.b16 %v2743, %v2740
        %2792 = vmatprep.subr.bf16.mxu0 %v2766
        %2793 = vmatpush1.bf16.msra.mxu0 %v2765
        %2794 = vmatprep.subr.bf16.mxu0 %v2763
        %2795 = vmatpush1.bf16.msra.mxu0 %v2762
        %2796 = vmatprep.subr.bf16.mxu0 %v2760
        %2797 = vmatpush1.bf16.msra.mxu0 %v2759
        %2798 = vmatprep.subr.bf16.mxu0 %v2757
        %2799 = vmatpush1.bf16.msra.mxu0 %v2756
        %2800 = vmatprep.subr.bf16.mxu0 %v2754
        %2801 = vmatpush1.bf16.msra.mxu0 %v2753
        %2802 = vmatprep.subr.bf16.mxu0 %v2751
        %2803 = vmatpush1.bf16.msra.mxu0 %v2750
        %2804 = vmatprep.subr.bf16.mxu0 %v2748
        %2805 = vmatpush1.bf16.msra.mxu0 %v2747
        %2806 = vmatprep.subr.bf16.mxu0 %v2745
        %2807 = vmatpush1.bf16.msra.mxu0 %v2744
        %2808 = vmatprep.subr.bf16.mxu0 0
        %2809 = vmatpush2.bf16.msra.mxu0 0
        %2810 = vmatprep.subr.bf16.mxu0 0
        %2811 = vmatpush2.bf16.msra.mxu0 0
        %2812 = vmatprep.subr.bf16.mxu0 0
        %2813 = vmatpush2.bf16.msra.mxu0 0
        %2814 = vmatprep.subr.bf16.mxu0 0
        %2815 = vmatpush2.bf16.msra.mxu0 0
        %2816 = vmatprep.subr.bf16.mxu0 0
        %2817 = vmatpush2.bf16.msra.mxu0 0
        %2818 = vmatprep.subr.bf16.mxu0 0
        %2819 = vmatpush2.bf16.msra.mxu0 0
        %2820 = vmatprep.subr.bf16.mxu0 0
        %2821 = vmatpush2.bf16.msra.mxu0 0
        %2822 = vmatprep.subr.bf16.mxu0 0
        %2823 = vmatpush2.bf16.msra.mxu0 0
        %2824 = vmatprep.mubr.bf16.mxu0 0
        %2825 = vmatmul.mubr.bf16.gmra.mxu0 %v2370
        %v2826 = vpop.f32.mrf.mxu0
        %v2827 = vadd.f32 %v2652, %v2826
        %v2828 = vpop.f32.mrf.mxu0
        %v2829 = vadd.f32 %v2656, %v2828
        %v2830 = vpop.f32.mrf.mxu0
        %v2831 = vadd.f32 %v2652, %v2830
        %v2832 = vpop.f32.mrf.mxu0
        %v2833 = vadd.f32 %v2656, %v2832
        %2834 = vdwg.mxu0
        %2835 = vmatprep.subr.bf16.mxu0 0
        %2836 = vmatpush1.bf16.msra.mxu0 %v2767
        %2837 = vmatprep.subr.bf16.mxu0 0
        %2838 = vmatpush1.bf16.msra.mxu0 %v2764
        %2839 = vmatprep.subr.bf16.mxu0 0
        %2840 = vmatpush1.bf16.msra.mxu0 %v2761
        %2841 = vmatprep.subr.bf16.mxu0 0
        %2842 = vmatpush1.bf16.msra.mxu0 %v2758
        %2843 = vmatprep.subr.bf16.mxu0 0
        %2844 = vmatpush1.bf16.msra.mxu0 %v2755
        %2845 = vmatprep.subr.bf16.mxu0 0
        %2846 = vmatpush1.bf16.msra.mxu0 %v2752
        %2847 = vmatprep.subr.bf16.mxu0 0
        %2848 = vmatpush1.bf16.msra.mxu0 %v2749
        %2849 = vmatprep.subr.bf16.mxu0 0
        %2850 = vmatpush1.bf16.msra.mxu0 %v2746
        %2851 = vmatprep.subr.bf16.mxu0 0
        %2852 = vmatpush2.bf16.msra.mxu0 0
        %2853 = vmatprep.subr.bf16.mxu0 0
        %2854 = vmatpush2.bf16.msra.mxu0 0
        %2855 = vmatprep.subr.bf16.mxu0 0
        %2856 = vmatpush2.bf16.msra.mxu0 0
        %2857 = vmatprep.subr.bf16.mxu0 0
        %2858 = vmatpush2.bf16.msra.mxu0 0
        %2859 = vmatprep.subr.bf16.mxu0 0
        %2860 = vmatpush2.bf16.msra.mxu0 0
        %2861 = vmatprep.subr.bf16.mxu0 0
        %2862 = vmatpush2.bf16.msra.mxu0 0
        %2863 = vmatprep.subr.bf16.mxu0 0
        %2864 = vmatpush2.bf16.msra.mxu0 0
        %2865 = vmatprep.subr.bf16.mxu0 0
        %2866 = vmatpush2.bf16.msra.mxu0 0
        %2867 = vmatprep.mubr.bf16.mxu0 0
        %2868 = vmatmul.mubr.bf16.gmra.mxu0 %v2370
        %v2869 = vpop.f32.mrf.mxu0
        %v2870 = vadd.f32 %v2660, %v2869
        %v2871 = vpop.f32.mrf.mxu0
        %v2872 = vpop.f32.mrf.mxu0
        %v2873 = vadd.f32 %v2660, %v2872
        %v2874 = vpop.f32.mrf.mxu0
        %2875 = vdwg.mxu0
        %v2876 = vxor.u32 %v2566, 2147483648
        %v2877 = vxor.u32 %v2568, 2147483648
        %v2878 = vxor.u32 %v2609, 2147483648
        %v2879 = vxor.u32 %v2570, 2147483648
        %v2880 = vxor.u32 %v2572, 2147483648
        %v2881 = vxor.u32 %v2612, 2147483648
        %v2882 = vmul.f32 %v2876, 1.442695
        %v2883 = vpow.pop %v2882
        %v2884 = vmul.f32 %v2877, 1.442695
        %v2885 = vpow.pop %v2884
        %v2886 = vmul.f32 %v2878, 1.442695
        %v2887 = vpow.pop %v2886
        %v2888 = vmul.f32 %v2879, 1.442695
        %v2889 = vpow.pop %v2888
        %v2890 = vmul.f32 %v2880, 1.442695
        %v2891 = vpow.pop %v2890
        %v2892 = vmul.f32 %v2881, 1.442695
        %v2893 = vpow.pop %v2892
        %v2894 = vadd.f32 %v2883, 1.0
        %v2895 = vadd.f32 %v2885, 1.0
        %v2896 = vadd.f32 %v2887, 1.0
        %v2897 = vadd.f32 %v2889, 1.0
        %v2898 = vadd.f32 %v2891, 1.0
        %v2899 = vadd.f32 %v2893, 1.0
        %v2900 = vrcp.pop %v2894
        %v2901 = vmul.f32 1.0, %v2900
        %v2902 = vrcp.pop %v2895
        %v2903 = vmul.f32 1.0, %v2902
        %v2904 = vrcp.pop %v2896
        %v2905 = vmul.f32 1.0, %v2904
        %v2906 = vrcp.pop %v2897
        %v2907 = vmul.f32 1.0, %v2906
        %v2908 = vrcp.pop %v2898
        %v2909 = vmul.f32 1.0, %v2908
        %v2910 = vrcp.pop %v2899
        %v2911 = vmul.f32 1.0, %v2910
        %v2912 = vmul.f32 %v2566, %v2901
        %v2913 = vmul.f32 %v2568, %v2903
        %v2914 = vmul.f32 %v2609, %v2905
        %v2915 = vmul.f32 %v2570, %v2907
        %v2916 = vmul.f32 %v2572, %v2909
        %v2917 = vmul.f32 %v2612, %v2911
        %v2918 = vmul.f32 %v2912, %v2827
        %v2919 = vmul.f32 %v2913, %v2829
        %v2920 = vmul.f32 %v2914, %v2870
        %v2921 = vmul.f32 %v2915, %v2831
        %v2922 = vmul.f32 %v2916, %v2833
        %v2923 = vmul.f32 %v2917, %v2873
        %v2924 = vpack.c.bf16 %v2921, %v2918
        %v2925 = vpack.c.bf16 %v2922, %v2919
        %v2926 = vpack.c.bf16 %v2923, %v2920
        %v2927 = vld [vmem:[%s13] sm:$0xf]
        %v2928 = vld [vmem:[%s13 + $0x4] sm:$0xf]
        %v2929 = vld [vmem:[%s13 + $0x8] sm:$0xf]
        %v2930 = vld [vmem:[%s13 + $0xc] sm:$0xf]
        %v2931 = vld [vmem:[%s13 + $0x10] sm:$0xf]
        %v2932 = vld [vmem:[%s13 + $0x14] sm:$0xf]
        %v2933 = vld [vmem:[%s13 + $0x18] sm:$0xf]
        %v2934 = vld [vmem:[%s13 + $0x1c] sm:$0xf]
        %v2935 = vld [vmem:[%s13 + $0x20] sm:$0xf]
        %v2936 = vld [vmem:[%s13 + $0x24] sm:$0xf]
        %v2937 = vld [vmem:[%s13 + $0x28] sm:$0xf]
        %v2938 = vld [vmem:[%s13 + $0x2c] sm:$0xf]
        %v2939 = vld [vmem:[%s13 + $0x30] sm:$0xf]
        %v2940 = vld [vmem:[%s13 + $0x34] sm:$0xf]
        %v2941 = vld [vmem:[%s13 + $0x38] sm:$0xf]
        %v2942 = vld [vmem:[%s13 + $0x3c] sm:$0xf]
        %v2943 = vld [vmem:[%s13 + $0x40] sm:$0xf]
        %v2944 = vld [vmem:[%s13 + $0x44] sm:$0xf]
        %v2945 = vld [vmem:[%s13 + $0x48] sm:$0xf]
        %v2946 = vld [vmem:[%s13 + $0x4c] sm:$0xf]
        %v2947 = vld [vmem:[%s13 + $0x50] sm:$0xf]
        %v2948 = vld [vmem:[%s13 + $0x54] sm:$0xf]
        %v2949 = vld [vmem:[%s13 + $0x58] sm:$0xf]
        %v2950 = vld [vmem:[%s13 + $0x5c] sm:$0xf]
        %v2951 = vld [vmem:[%s13 + $0x60] sm:$0xf]
        %v2952 = vld [vmem:[%s13 + $0x64] sm:$0xf]
        %v2953 = vld [vmem:[%s13 + $0x68] sm:$0xf]
        %v2954 = vld [vmem:[%s13 + $0x6c] sm:$0xf]
        %v2955 = vld [vmem:[%s13 + $0x70] sm:$0xf]
        %v2956 = vld [vmem:[%s13 + $0x74] sm:$0xf]
        %v2957 = vld [vmem:[%s13 + $0x78] sm:$0xf]
        %v2958 = vld [vmem:[%s13 + $0x7c] sm:$0xf]
        %v2959 = vld [vmem:[%s13 + $0x80] sm:$0xf]
        %v2960 = vld [vmem:[%s13 + $0x84] sm:$0xf]
        %v2961 = vld [vmem:[%s13 + $0x88] sm:$0xf]
        %v2962 = vld [vmem:[%s13 + $0x8c] sm:$0xf]
        %v2963 = vld [vmem:[%s13 + $0x90] sm:$0xf]
        %v2964 = vld [vmem:[%s13 + $0x94] sm:$0xf]
        %v2965 = vld [vmem:[%s13 + $0x98] sm:$0xf]
        %v2966 = vld [vmem:[%s13 + $0x9c] sm:$0xf]
        %v2967 = vld [vmem:[%s13 + $0xa0] sm:$0xf]
        %v2968 = vld [vmem:[%s13 + $0xa4] sm:$0xf]
        %v2969 = vld [vmem:[%s13 + $0xa8] sm:$0xf]
        %v2970 = vld [vmem:[%s13 + $0xac] sm:$0xf]
        %v3015 = vunpack.c.l.b16 %v2927
        %v3016 = vunpack.c.l.b16 %v2928
        %v3017 = vunpack.c.l.b16 %v2929
        %v3018 = vunpack.c.l.b16 %v2930
        %v3019 = vunpack.c.l.b16 %v2931
        %v3020 = vunpack.c.l.b16 %v2932
        %v3021 = vunpack.c.l.b16 %v2933
        %v3022 = vunpack.c.l.b16 %v2934
        %v3023 = vunpack.c.l.b16 %v2935
        %v3024 = vunpack.c.l.b16 %v2936
        %v3025 = vunpack.c.l.b16 %v2937
        %v3026 = vunpack.c.l.b16 %v2938
        %v3027 = vunpack.c.l.b16 %v2939
        %v3028 = vunpack.c.l.b16 %v2940
        %v3029 = vunpack.c.l.b16 %v2941
        %v3030 = vunpack.c.l.b16 %v2942
        %v3031 = vunpack.c.l.b16 %v2943
        %v3032 = vunpack.c.l.b16 %v2944
        %v3033 = vunpack.c.l.b16 %v2945
        %v3034 = vunpack.c.l.b16 %v2946
        %v3035 = vunpack.c.l.b16 %v2947
        %v3036 = vunpack.c.l.b16 %v2948
        %v3037 = vunpack.c.l.b16 %v2949
        %v3038 = vunpack.c.l.b16 %v2950
        %v3039 = vunpack.c.l.b16 %v2951
        %v3040 = vunpack.c.l.b16 %v2952
        %v3041 = vunpack.c.l.b16 %v2953
        %v3042 = vunpack.c.l.b16 %v2954
        %v3043 = vunpack.c.l.b16 %v2955
        %v3044 = vunpack.c.l.b16 %v2956
        %v3045 = vunpack.c.l.b16 %v2957
        %v3046 = vunpack.c.l.b16 %v2958
        %v3047 = vunpack.c.l.b16 %v2959
        %v3048 = vunpack.c.l.b16 %v2960
        %v3049 = vunpack.c.l.b16 %v2961
        %v3050 = vunpack.c.l.b16 %v2962
        %v3051 = vunpack.c.l.b16 %v2963
        %v3052 = vunpack.c.l.b16 %v2964
        %v3053 = vunpack.c.l.b16 %v2965
        %v3054 = vunpack.c.l.b16 %v2966
        %v3055 = vunpack.c.l.b16 %v2967
        %v3056 = vunpack.c.l.b16 %v2968
        %v3057 = vunpack.c.l.b16 %v2969
        %v3058 = vunpack.c.l.b16 %v2970
        %v3059 = vpack.c.b16 %v3016, %v3015
        %v3060 = vpack.c.b16 %v3018, %v3017
        %v3061 = vpack.c.b16 %v3020, %v3019
        %v3062 = vpack.c.b16 %v3022, %v3021
        %v3063 = vpack.c.b16 %v3024, %v3023
        %v3064 = vpack.c.b16 %v3026, %v3025
        %v3065 = vpack.c.b16 %v3028, %v3027
        %v3066 = vpack.c.b16 %v3030, %v3029
        %v3067 = vpack.c.b16 %v3032, %v3031
        %v3068 = vpack.c.b16 %v3034, %v3033
        %v3069 = vpack.c.b16 %v3036, %v3035
        %v3070 = vpack.c.b16 %v3038, %v3037
        %v3071 = vpack.c.b16 %v3040, %v3039
        %v3072 = vpack.c.b16 %v3042, %v3041
        %v3073 = vpack.c.b16 %v3044, %v3043
        %v3074 = vpack.c.b16 %v3046, %v3045
        %v3075 = vpack.c.b16 %v3048, %v3047
        %v3076 = vpack.c.b16 %v3050, %v3049
        %v3077 = vpack.c.b16 %v3052, %v3051
        %v3078 = vpack.c.b16 %v3054, %v3053
        %v3079 = vpack.c.b16 %v3056, %v3055
        %v3080 = vpack.c.b16 %v3058, %v3057
        %v3104 = vsel %vm2236, %v2926, 0
        %3106 = vmatprep.subr.bf16.mxu0 0
        %3107 = vmatpush1.bf16.msra.mxu0 %v3066
        %3108 = vmatprep.subr.bf16.mxu0 0
        %3109 = vmatpush1.bf16.msra.mxu0 %v3065
        %3110 = vmatprep.subr.bf16.mxu0 0
        %3111 = vmatpush1.bf16.msra.mxu0 %v3064
        %3112 = vmatprep.subr.bf16.mxu0 0
        %3113 = vmatpush1.bf16.msra.mxu0 %v3063
        %3114 = vmatprep.subr.bf16.mxu0 0
        %3115 = vmatpush1.bf16.msra.mxu0 %v3062
        %3116 = vmatprep.subr.bf16.mxu0 0
        %3117 = vmatpush1.bf16.msra.mxu0 %v3061
        %3118 = vmatprep.subr.bf16.mxu0 0
        %3119 = vmatpush1.bf16.msra.mxu0 %v3060
        %3120 = vmatprep.subr.bf16.mxu0 0
        %3121 = vmatpush1.bf16.msra.mxu0 %v3059
        %3122 = vmatprep.subr.bf16.mxu0 0
        %3123 = vmatpush2.bf16.msra.mxu0 %v3074
        %3124 = vmatprep.subr.bf16.mxu0 0
        %3125 = vmatpush2.bf16.msra.mxu0 %v3073
        %3126 = vmatprep.subr.bf16.mxu0 0
        %3127 = vmatpush2.bf16.msra.mxu0 %v3072
        %3128 = vmatprep.subr.bf16.mxu0 0
        %3129 = vmatpush2.bf16.msra.mxu0 %v3071
        %3130 = vmatprep.subr.bf16.mxu0 0
        %3131 = vmatpush2.bf16.msra.mxu0 %v3070
        %3132 = vmatprep.subr.bf16.mxu0 0
        %3133 = vmatpush2.bf16.msra.mxu0 %v3069
        %3134 = vmatprep.subr.bf16.mxu0 0
        %3135 = vmatpush2.bf16.msra.mxu0 %v3068
        %3136 = vmatprep.subr.bf16.mxu0 0
        %3137 = vmatpush2.bf16.msra.mxu0 %v3067
        %3138 = vmatprep.mubr.bf16.mxu0 %v2925
        %3139 = vmatmul.mubr.bf16.gmra.mxu0 %v2924
        %v3140 = vpop.f32.mrf.mxu0
        %v3141 = vadd.f32 0.0, %v3140
        %v3142 = vpop.f32.mrf.mxu0
        %v3143 = vpop.f32.mrf.mxu0
        %v3144 = vadd.f32 0.0, %v3143
        %v3145 = vpop.f32.mrf.mxu0
        %3146 = vdwg.mxu0
        %3147 = vmatprep.subr.bf16.mxu0 0
        %3148 = vmatpush1.bf16.msra.mxu0 0
        %3149 = vmatprep.subr.bf16.mxu0 0
        %3150 = vmatpush1.bf16.msra.mxu0 0
        %3151 = vmatprep.subr.bf16.mxu0 0
        %3152 = vmatpush1.bf16.msra.mxu0 %v3080
        %3153 = vmatprep.subr.bf16.mxu0 0
        %3154 = vmatpush1.bf16.msra.mxu0 %v3079
        %3155 = vmatprep.subr.bf16.mxu0 0
        %3156 = vmatpush1.bf16.msra.mxu0 %v3078
        %3157 = vmatprep.subr.bf16.mxu0 0
        %3158 = vmatpush1.bf16.msra.mxu0 %v3077
        %3159 = vmatprep.subr.bf16.mxu0 0
        %3160 = vmatpush1.bf16.msra.mxu0 %v3076
        %3161 = vmatprep.subr.bf16.mxu0 0
        %3162 = vmatpush1.bf16.msra.mxu0 %v3075
        %3163 = vmatprep.subr.bf16.mxu0 0
        %3164 = vmatpush2.bf16.msra.mxu0 0
        %3165 = vmatprep.subr.bf16.mxu0 0
        %3166 = vmatpush2.bf16.msra.mxu0 0
        %3167 = vmatprep.subr.bf16.mxu0 0
        %3168 = vmatpush2.bf16.msra.mxu0 0
        %3169 = vmatprep.subr.bf16.mxu0 0
        %3170 = vmatpush2.bf16.msra.mxu0 0
        %3171 = vmatprep.subr.bf16.mxu0 0
        %3172 = vmatpush2.bf16.msra.mxu0 0
        %3173 = vmatprep.subr.bf16.mxu0 0
        %3174 = vmatpush2.bf16.msra.mxu0 0
        %3175 = vmatprep.subr.bf16.mxu0 0
        %3176 = vmatpush2.bf16.msra.mxu0 0
        %3177 = vmatprep.subr.bf16.mxu0 0
        %3178 = vmatpush2.bf16.msra.mxu0 0
        %3179 = vmatprep.mubr.bf16.mxu0 0
        %3180 = vmatmul.mubr.bf16.gmra.mxu0 %v3104
        %v3181 = vpop.f32.mrf.mxu0
        %v3182 = vadd.f32 %v3141, %v3181
        %v3183 = vpop.f32.mrf.mxu0
        %v3184 = vpop.f32.mrf.mxu0
        %v3185 = vadd.f32 %v3144, %v3184
        %v3186 = vpop.f32.mrf.mxu0
        %3187 = vdwg.mxu0
        %v3188 = vadd.f32 %v2345, %v3182
        %v3189 = vadd.f32 %v2346, %v3185
        %v3190 = vld [vmem:[#allocation6] sm:$0x1]
        %v3192 = vlaneseq
        %v3193 = vshrl.u32 %v3192, 7
        %v3194 = vsub.s32 0, %v3193
        %v3195 = vrot.slane %v3190, %v3194
        %v3197 = vadd.f32 %v3188, %v3195
        %v3198 = vadd.f32 %v3189, %v3195
        %v3199 = vld [vmem:[#allocation7] sm:$0x1]
        %v3200 = vmul.f32 %v3197, %v3197
        %v3201 = vmul.f32 %v3198, %v3198
        %3202 = vadd.xlane.f32.xlu0 %v3200
        %v3203 = vpop.xlane.xlu0 %3202
        %3204 = vadd.xlane.f32.xlu0 %v3201
        %v3205 = vpop.xlane.xlu0 %3204
        %v3206 = vmul.f32 %v3203, %v1003
        %v3207 = vmul.f32 %v3205, %v1003
        %v3208 = vadd.f32 %v3206, 1e-05
        %v3209 = vadd.f32 %v3207, 1e-05
        %v3210 = vrsqrt.pop %v3208
        %v3211 = vrsqrt.pop %v3209
        %v3212 = vmul.f32 %v3197, %v3210
        %v3213 = vmul.f32 %v3198, %v3211
        %v3215 = vlaneseq
        %v3216 = vshrl.u32 %v3215, 7
        %v3217 = vsub.s32 0, %v3216
        %v3218 = vrot.slane %v3199, %v3217
        %v3220 = vmul.f32 %v3212, %v3218
        %v3221 = vmul.f32 %v3213, %v3218
        %v3222 = vpack.c.bf16 %v3221, %v3220
        %v3223 = vld [vmem:[%s16] sm:$0xff]
        %v3224 = vld [vmem:[%s16 + $0x8] sm:$0xf]
        %v3225 = vld [vmem:[%s16 + $0xc] sm:$0xff]
        %v3226 = vld [vmem:[%s16 + $0x14] sm:$0xf]
        %v3227 = vld [vmem:[%s16 + $0x18] sm:$0xff]
        %v3228 = vld [vmem:[%s16 + $0x20] sm:$0xf]
        %v3229 = vld [vmem:[%s16 + $0x24] sm:$0xff]
        %v3230 = vld [vmem:[%s16 + $0x2c] sm:$0xf]
        %v3231 = vld [vmem:[%s16 + $0x30] sm:$0xff]
        %v3232 = vld [vmem:[%s16 + $0x38] sm:$0xf]
        %v3233 = vld [vmem:[%s16 + $0x3c] sm:$0xff]
        %v3234 = vld [vmem:[%s16 + $0x44] sm:$0xf]
        %v3235 = vld [vmem:[%s16 + $0x48] sm:$0xff]
        %v3236 = vld [vmem:[%s16 + $0x50] sm:$0xf]
        %v3237 = vld [vmem:[%s16 + $0x54] sm:$0xff]
        %v3238 = vld [vmem:[%s16 + $0x5c] sm:$0xf]
        %v3239 = vld [vmem:[%s16 + $0x60] sm:$0xff]
        %v3240 = vld [vmem:[%s16 + $0x68] sm:$0xf]
        %v3241 = vld [vmem:[%s16 + $0x6c] sm:$0xff]
        %v3242 = vld [vmem:[%s16 + $0x74] sm:$0xf]
        %v3243 = vld [vmem:[%s16 + $0x78] sm:$0xff]
        %v3244 = vld [vmem:[%s16 + $0x80] sm:$0xf]
        %v3245 = vld [vmem:[%s16 + $0x84] sm:$0xff]
        %v3246 = vld [vmem:[%s16 + $0x8c] sm:$0xf]
        %v3247 = vld [vmem:[%s16 + $0x90] sm:$0xff]
        %v3248 = vld [vmem:[%s16 + $0x98] sm:$0xf]
        %v3249 = vld [vmem:[%s16 + $0x9c] sm:$0xff]
        %v3250 = vld [vmem:[%s16 + $0xa4] sm:$0xf]
        %v3251 = vld [vmem:[%s16 + $0xa8] sm:$0xff]
        %v3252 = vld [vmem:[%s16 + $0xb0] sm:$0xf]
        %v3253 = vld [vmem:[%s16 + $0xb4] sm:$0xff]
        %v3254 = vld [vmem:[%s16 + $0xbc] sm:$0xf]
        %v3255 = vld [vmem:[%s17] sm:$0x7]
        %v3257 = vlaneseq
        %v3258 = vshrl.u32 %v3257, 7
        %v3259 = vsub.s32 0, %v3258
        %v3260 = vrot.slane %v3255, %v3259
        %v3261 = vlaneseq
        %v3262 = vshrl.u32 %v3261, 7
        %v3263 = vsub.s32 1, %v3262
        %v3264 = vrot.slane %v3255, %v3263
        %v3265 = vlaneseq
        %v3266 = vshrl.u32 %v3265, 7
        %v3267 = vsub.s32 2, %v3266
        %v3268 = vrot.slane %v3255, %v3267
        %v3304 = vunpack.c.l.b16 %v3223
        %v3305 = vunpack.c.h.b16 %v3223
        %v3306 = vunpack.c.l.b16 %v3224
        %v3307 = vunpack.c.l.b16 %v3225
        %v3308 = vunpack.c.h.b16 %v3225
        %v3309 = vunpack.c.l.b16 %v3226
        %v3310 = vunpack.c.l.b16 %v3227
        %v3311 = vunpack.c.h.b16 %v3227
        %v3312 = vunpack.c.l.b16 %v3228
        %v3313 = vunpack.c.l.b16 %v3229
        %v3314 = vunpack.c.h.b16 %v3229
        %v3315 = vunpack.c.l.b16 %v3230
        %v3316 = vunpack.c.l.b16 %v3231
        %v3317 = vunpack.c.h.b16 %v3231
        %v3318 = vunpack.c.l.b16 %v3232
        %v3319 = vunpack.c.l.b16 %v3233
        %v3320 = vunpack.c.h.b16 %v3233
        %v3321 = vunpack.c.l.b16 %v3234
        %v3322 = vunpack.c.l.b16 %v3235
        %v3323 = vunpack.c.h.b16 %v3235
        %v3324 = vunpack.c.l.b16 %v3236
        %v3325 = vunpack.c.l.b16 %v3237
        %v3326 = vunpack.c.h.b16 %v3237
        %v3327 = vunpack.c.l.b16 %v3238
        %v3328 = vunpack.c.l.b16 %v3239
        %v3329 = vunpack.c.h.b16 %v3239
        %v3330 = vunpack.c.l.b16 %v3240
        %v3331 = vunpack.c.l.b16 %v3241
        %v3332 = vunpack.c.h.b16 %v3241
        %v3333 = vunpack.c.l.b16 %v3242
        %v3334 = vunpack.c.l.b16 %v3243
        %v3335 = vunpack.c.h.b16 %v3243
        %v3336 = vunpack.c.l.b16 %v3244
        %v3337 = vunpack.c.l.b16 %v3245
        %v3338 = vunpack.c.h.b16 %v3245
        %v3339 = vunpack.c.l.b16 %v3246
        %v3340 = vunpack.c.l.b16 %v3247
        %v3341 = vunpack.c.h.b16 %v3247
        %v3342 = vunpack.c.l.b16 %v3248
        %v3343 = vunpack.c.l.b16 %v3249
        %v3344 = vunpack.c.h.b16 %v3249
        %v3345 = vunpack.c.l.b16 %v3250
        %v3346 = vunpack.c.l.b16 %v3251
        %v3347 = vunpack.c.h.b16 %v3251
        %v3348 = vunpack.c.l.b16 %v3252
        %v3349 = vunpack.c.l.b16 %v3253
        %v3350 = vunpack.c.h.b16 %v3253
        %v3351 = vunpack.c.l.b16 %v3254
        %v3352 = vpack.c.b16 %v3307, %v3304
        %v3353 = vpack.c.b16 %v3308, %v3305
        %v3354 = vpack.c.b16 %v3309, %v3306
        %v3355 = vpack.c.b16 %v3313, %v3310
        %v3356 = vpack.c.b16 %v3314, %v3311
        %v3357 = vpack.c.b16 %v3315, %v3312
        %v3358 = vpack.c.b16 %v3319, %v3316
        %v3359 = vpack.c.b16 %v3320, %v3317
        %v3360 = vpack.c.b16 %v3321, %v3318
        %v3361 = vpack.c.b16 %v3325, %v3322
        %v3362 = vpack.c.b16 %v3326, %v3323
        %v3363 = vpack.c.b16 %v3327, %v3324
        %v3364 = vpack.c.b16 %v3331, %v3328
        %v3365 = vpack.c.b16 %v3332, %v3329
        %v3366 = vpack.c.b16 %v3333, %v3330
        %v3367 = vpack.c.b16 %v3337, %v3334
        %v3368 = vpack.c.b16 %v3338, %v3335
        %v3369 = vpack.c.b16 %v3339, %v3336
        %v3370 = vpack.c.b16 %v3343, %v3340
        %v3371 = vpack.c.b16 %v3344, %v3341
        %v3372 = vpack.c.b16 %v3345, %v3342
        %v3373 = vpack.c.b16 %v3349, %v3346
        %v3374 = vpack.c.b16 %v3350, %v3347
        %v3375 = vpack.c.b16 %v3351, %v3348
        %3400 = vmatprep.subr.bf16.mxu0 %v3374
        %3401 = vmatpush1.bf16.msra.mxu0 %v3373
        %3402 = vmatprep.subr.bf16.mxu0 %v3371
        %3403 = vmatpush1.bf16.msra.mxu0 %v3370
        %3404 = vmatprep.subr.bf16.mxu0 %v3368
        %3405 = vmatpush1.bf16.msra.mxu0 %v3367
        %3406 = vmatprep.subr.bf16.mxu0 %v3365
        %3407 = vmatpush1.bf16.msra.mxu0 %v3364
        %3408 = vmatprep.subr.bf16.mxu0 %v3362
        %3409 = vmatpush1.bf16.msra.mxu0 %v3361
        %3410 = vmatprep.subr.bf16.mxu0 %v3359
        %3411 = vmatpush1.bf16.msra.mxu0 %v3358
        %3412 = vmatprep.subr.bf16.mxu0 %v3356
        %3413 = vmatpush1.bf16.msra.mxu0 %v3355
        %3414 = vmatprep.subr.bf16.mxu0 %v3353
        %3415 = vmatpush1.bf16.msra.mxu0 %v3352
        %3416 = vmatprep.subr.bf16.mxu0 0
        %3417 = vmatpush2.bf16.msra.mxu0 0
        %3418 = vmatprep.subr.bf16.mxu0 0
        %3419 = vmatpush2.bf16.msra.mxu0 0
        %3420 = vmatprep.subr.bf16.mxu0 0
        %3421 = vmatpush2.bf16.msra.mxu0 0
        %3422 = vmatprep.subr.bf16.mxu0 0
        %3423 = vmatpush2.bf16.msra.mxu0 0
        %3424 = vmatprep.subr.bf16.mxu0 0
        %3425 = vmatpush2.bf16.msra.mxu0 0
        %3426 = vmatprep.subr.bf16.mxu0 0
        %3427 = vmatpush2.bf16.msra.mxu0 0
        %3428 = vmatprep.subr.bf16.mxu0 0
        %3429 = vmatpush2.bf16.msra.mxu0 0
        %3430 = vmatprep.subr.bf16.mxu0 0
        %3431 = vmatpush2.bf16.msra.mxu0 0
        %3432 = vmatprep.mubr.bf16.mxu0 0
        %3433 = vmatmul.mubr.bf16.gmra.mxu0 %v3222
        %v3434 = vpop.f32.mrf.mxu0
        %v3435 = vadd.f32 %v3260, %v3434
        %v3436 = vpop.f32.mrf.mxu0
        %v3437 = vadd.f32 %v3264, %v3436
        %v3438 = vpop.f32.mrf.mxu0
        %v3439 = vadd.f32 %v3260, %v3438
        %v3440 = vpop.f32.mrf.mxu0
        %v3441 = vadd.f32 %v3264, %v3440
        %3442 = vdwg.mxu0
        %3443 = vmatprep.subr.bf16.mxu0 0
        %3444 = vmatpush1.bf16.msra.mxu0 %v3375
        %3445 = vmatprep.subr.bf16.mxu0 0
        %3446 = vmatpush1.bf16.msra.mxu0 %v3372
        %3447 = vmatprep.subr.bf16.mxu0 0
        %3448 = vmatpush1.bf16.msra.mxu0 %v3369
        %3449 = vmatprep.subr.bf16.mxu0 0
        %3450 = vmatpush1.bf16.msra.mxu0 %v3366
        %3451 = vmatprep.subr.bf16.mxu0 0
        %3452 = vmatpush1.bf16.msra.mxu0 %v3363
        %3453 = vmatprep.subr.bf16.mxu0 0
        %3454 = vmatpush1.bf16.msra.mxu0 %v3360
        %3455 = vmatprep.subr.bf16.mxu0 0
        %3456 = vmatpush1.bf16.msra.mxu0 %v3357
        %3457 = vmatprep.subr.bf16.mxu0 0
        %3458 = vmatpush1.bf16.msra.mxu0 %v3354
        %3459 = vmatprep.subr.bf16.mxu0 0
        %3460 = vmatpush2.bf16.msra.mxu0 0
        %3461 = vmatprep.subr.bf16.mxu0 0
        %3462 = vmatpush2.bf16.msra.mxu0 0
        %3463 = vmatprep.subr.bf16.mxu0 0
        %3464 = vmatpush2.bf16.msra.mxu0 0
        %3465 = vmatprep.subr.bf16.mxu0 0
        %3466 = vmatpush2.bf16.msra.mxu0 0
        %3467 = vmatprep.subr.bf16.mxu0 0
        %3468 = vmatpush2.bf16.msra.mxu0 0
        %3469 = vmatprep.subr.bf16.mxu0 0
        %3470 = vmatpush2.bf16.msra.mxu0 0
        %3471 = vmatprep.subr.bf16.mxu0 0
        %3472 = vmatpush2.bf16.msra.mxu0 0
        %3473 = vmatprep.subr.bf16.mxu0 0
        %3474 = vmatpush2.bf16.msra.mxu0 0
        %3475 = vmatprep.mubr.bf16.mxu0 0
        %3476 = vmatmul.mubr.bf16.gmra.mxu0 %v3222
        %v3477 = vpop.f32.mrf.mxu0
        %v3478 = vadd.f32 %v3268, %v3477
        %v3479 = vpop.f32.mrf.mxu0
        %v3480 = vpop.f32.mrf.mxu0
        %v3481 = vadd.f32 %v3268, %v3480
        %v3482 = vpop.f32.mrf.mxu0
        %3483 = vdwg.mxu0
        %v3484 = vmul.f32 %v3435, %v858
        %v3485 = vmul.f32 %v3439, %v859
        %v3486 = vmul.f32 %v3435, %v1287
        %v3487 = vmul.f32 %v3439, %v1289
        %3490 = vrot.lane.b32.xlu0 %v3486, 112
        %v3491 = vpop.permute.xlu0 %3490
        %3492 = vrot.lane.b32.xlu0 %v3487, 112
        %v3493 = vpop.permute.xlu0 %3492
        %v3496 = vsub.f32 %v3484, %v3491
        %v3497 = vsub.f32 %v3485, %v3493
        %v3498 = vmul.f32 %v3435, %v860
        %v3499 = vmul.f32 %v3439, %v861
        %v3500 = vmul.f32 %v3435, %v1309
        %v3501 = vmul.f32 %v3439, %v1311
        %3504 = vrot.lane.b32.xlu0 %v3500, 112
        %v3505 = vpop.permute.xlu0 %3504
        %3506 = vrot.lane.b32.xlu0 %v3501, 112
        %v3507 = vpop.permute.xlu0 %3506
        %v3510 = vadd.f32 %v3498, %v3505
        %v3511 = vadd.f32 %v3499, %v3507
        %3514 = vrot.lane.b32.xlu0 %v3510, 16
        %v3515 = vpop.permute.xlu0 %3514
        %3516 = vrot.lane.b32.xlu0 %v3511, 16
        %v3517 = vpop.permute.xlu0 %3516
        %v3520 = vsel %vm1334, %v3496, %v3515
        %v3521 = vsel %vm1334, %v3497, %v3517
        %v3522 = vmul.f32 %v3437, %v858
        %v3523 = vmul.f32 %v3441, %v859
        %v3524 = vmul.f32 %v3437, %v1287
        %v3525 = vmul.f32 %v3441, %v1289
        %3528 = vrot.lane.b32.xlu0 %v3524, 112
        %v3529 = vpop.permute.xlu0 %3528
        %3530 = vrot.lane.b32.xlu0 %v3525, 112
        %v3531 = vpop.permute.xlu0 %3530
        %v3534 = vsub.f32 %v3522, %v3529
        %v3535 = vsub.f32 %v3523, %v3531
        %v3536 = vmul.f32 %v3437, %v860
        %v3537 = vmul.f32 %v3441, %v861
        %v3538 = vmul.f32 %v3437, %v1309
        %v3539 = vmul.f32 %v3441, %v1311
        %3542 = vrot.lane.b32.xlu0 %v3538, 112
        %v3543 = vpop.permute.xlu0 %3542
        %3544 = vrot.lane.b32.xlu0 %v3539, 112
        %v3545 = vpop.permute.xlu0 %3544
        %v3548 = vadd.f32 %v3536, %v3543
        %v3549 = vadd.f32 %v3537, %v3545
        %3552 = vrot.lane.b32.xlu0 %v3548, 16
        %v3553 = vpop.permute.xlu0 %3552
        %3554 = vrot.lane.b32.xlu0 %v3549, 16
        %v3555 = vpop.permute.xlu0 %3554
        %v3558 = vsel %vm1334, %v3534, %v3553
        %v3559 = vsel %vm1334, %v3535, %v3555
        %v3560 = vpack.c.bf16 %v3521, %v3520
        %v3561 = vpack.c.bf16 %v3559, %v3558
        %v3563 = vsel %vm1377, %v3560, 0
        %v3566 = vsel %vm1377, %v3561, 0
        %3568 = vmatprep.subr.bf16.mxu0 0
        %3569 = vmatpush1.bf16.xpose.msra.mxu0 0
        %3570 = vmatprep.subr.bf16.mxu0 0
        %3571 = vmatpush1.bf16.xpose.msra.mxu0 0
        %3572 = vmatprep.subr.bf16.mxu0 0
        %3573 = vmatpush1.bf16.xpose.msra.mxu0 0
        %3574 = vmatprep.subr.bf16.mxu0 0
        %3575 = vmatpush1.bf16.xpose.msra.mxu0 0
        %3576 = vmatprep.subr.bf16.mxu0 0
        %3577 = vmatpush1.bf16.xpose.msra.mxu0 0
        %3578 = vmatprep.subr.bf16.mxu0 0
        %3579 = vmatpush1.bf16.xpose.msra.mxu0 0
        %3580 = vmatprep.subr.bf16.mxu0 0
        %3581 = vmatpush1.bf16.xpose.msra.mxu0 0
        %3582 = vmatprep.subr.bf16.mxu0 0
        %3583 = vmatpush1.bf16.xpose.msra.mxu0 %v3566
        %3584 = vmatprep.subr.bf16.mxu0 0
        %3585 = vmatpush2.bf16.xpose.msra.mxu0 0
        %3586 = vmatprep.subr.bf16.mxu0 0
        %3587 = vmatpush2.bf16.xpose.msra.mxu0 0
        %3588 = vmatprep.subr.bf16.mxu0 0
        %3589 = vmatpush2.bf16.xpose.msra.mxu0 0
        %3590 = vmatprep.subr.bf16.mxu0 0
        %3591 = vmatpush2.bf16.xpose.msra.mxu0 0
        %3592 = vmatprep.subr.bf16.mxu0 0
        %3593 = vmatpush2.bf16.xpose.msra.mxu0 0
        %3594 = vmatprep.subr.bf16.mxu0 0
        %3595 = vmatpush2.bf16.xpose.msra.mxu0 0
        %3596 = vmatprep.subr.bf16.mxu0 0
        %3597 = vmatpush2.bf16.xpose.msra.mxu0 0
        %3598 = vmatprep.subr.bf16.mxu0 0
        %3599 = vmatpush2.bf16.xpose.msra.mxu0 0
        %3600 = vmatprep.mubr.bf16.mxu0 0
        %3601 = vmatmul.mubr.bf16.gmra.mxu0 %v3563
        %v3602 = vpop.f32.mrf.mxu0
        %v3603 = vadd.f32 0.0, %v3602
        %v3604 = vpop.f32.mrf.mxu0
        %v3605 = vpop.f32.mrf.mxu0
        %v3606 = vadd.f32 0.0, %v3605
        %v3607 = vpop.f32.mrf.mxu0
        %3608 = vdwg.mxu0
        %v3609 = vmul.f32 %v3603, 0.17677669
        %v3610 = vmul.f32 %v3606, 0.17677669
        %v3611 = vsel %vm1334, %v3609, -inf
        %3612 = vmax.xlane.f32.xlu0 %v3611
        %v3613 = vpop.xlane.xlu0 %3612
        %v3614 = vsel %vm1334, %v3610, -inf
        %3615 = vmax.xlane.f32.xlu0 %v3614
        %v3616 = vpop.xlane.xlu0 %3615
        %v3617 = vsub.f32 %v3609, %v3613
        %v3618 = vsub.f32 %v3610, %v3616
        %v3619 = vmul.f32 %v3617, 1.442695
        %v3620 = vpow.pop %v3619
        %v3621 = vmul.f32 %v3618, 1.442695
        %v3622 = vpow.pop %v3621
        %v3623 = vsel %vm1334, %v3620, 0.0
        %3624 = vadd.xlane.f32.xlu0 %v3623
        %v3625 = vpop.xlane.xlu0 %3624
        %v3626 = vsel %vm1334, %v3622, 0.0
        %3627 = vadd.xlane.f32.xlu0 %v3626
        %v3628 = vpop.xlane.xlu0 %3627
        %v3629 = vrcp.pop %v3625
        %v3630 = vrcp.pop %v3628
        %v3631 = vmul.f32 %v3620, %v3629
        %v3632 = vmul.f32 %v3622, %v3630
        %v3633 = vpack.c.bf16 %v3632, %v3631
        %v3634 = vpack.c.bf16 %v3481, %v3478
        %v3636 = vsel %vm1334, %v3633, 0
        %3638 = vmatprep.subr.bf16.mxu0 0
        %3639 = vmatpush1.bf16.msra.mxu0 0
        %3640 = vmatprep.subr.bf16.mxu0 0
        %3641 = vmatpush1.bf16.msra.mxu0 0
        %3642 = vmatprep.subr.bf16.mxu0 0
        %3643 = vmatpush1.bf16.msra.mxu0 0
        %3644 = vmatprep.subr.bf16.mxu0 0
        %3645 = vmatpush1.bf16.msra.mxu0 0
        %3646 = vmatprep.subr.bf16.mxu0 0
        %3647 = vmatpush1.bf16.msra.mxu0 0
        %3648 = vmatprep.subr.bf16.mxu0 0
        %3649 = vmatpush1.bf16.msra.mxu0 0
        %3650 = vmatprep.subr.bf16.mxu0 0
        %3651 = vmatpush1.bf16.msra.mxu0 0
        %3652 = vmatprep.subr.bf16.mxu0 0
        %3653 = vmatpush1.bf16.msra.mxu0 %v3634
        %3654 = vmatprep.subr.bf16.mxu0 0
        %3655 = vmatpush2.bf16.msra.mxu0 0
        %3656 = vmatprep.subr.bf16.mxu0 0
        %3657 = vmatpush2.bf16.msra.mxu0 0
        %3658 = vmatprep.subr.bf16.mxu0 0
        %3659 = vmatpush2.bf16.msra.mxu0 0
        %3660 = vmatprep.subr.bf16.mxu0 0
        %3661 = vmatpush2.bf16.msra.mxu0 0
        %3662 = vmatprep.subr.bf16.mxu0 0
        %3663 = vmatpush2.bf16.msra.mxu0 0
        %3664 = vmatprep.subr.bf16.mxu0 0
        %3665 = vmatpush2.bf16.msra.mxu0 0
        %3666 = vmatprep.subr.bf16.mxu0 0
        %3667 = vmatpush2.bf16.msra.mxu0 0
        %3668 = vmatprep.subr.bf16.mxu0 0
        %3669 = vmatpush2.bf16.msra.mxu0 0
        %3670 = vmatprep.mubr.bf16.mxu0 0
        %3671 = vmatmul.mubr.bf16.gmra.mxu0 %v3636
        %v3672 = vpop.f32.mrf.mxu0
        %v3673 = vadd.f32 0.0, %v3672
        %v3674 = vpop.f32.mrf.mxu0
        %v3675 = vpop.f32.mrf.mxu0
        %v3676 = vadd.f32 0.0, %v3675
        %v3677 = vpop.f32.mrf.mxu0
        %3678 = vdwg.mxu0
        %v3679 = vmul.f32 %v3435, %v1496
        %v3680 = vmul.f32 %v3439, %v1498
        %v3681 = vmul.f32 %v3435, %v1504
        %v3682 = vmul.f32 %v3439, %v1506
        %3685 = vrot.lane.b32.xlu0 %v3681, 112
        %v3686 = vpop.permute.xlu0 %3685
        %3687 = vrot.lane.b32.xlu0 %v3682, 112
        %v3688 = vpop.permute.xlu0 %3687
        %v3691 = vsub.f32 %v3679, %v3686
        %v3692 = vsub.f32 %v3680, %v3688
        %v3693 = vmul.f32 %v3435, %v1522
        %v3694 = vmul.f32 %v3439, %v1524
        %v3695 = vmul.f32 %v3435, %v1530
        %v3696 = vmul.f32 %v3439, %v1532
        %3699 = vrot.lane.b32.xlu0 %v3695, 112
        %v3700 = vpop.permute.xlu0 %3699
        %3701 = vrot.lane.b32.xlu0 %v3696, 112
        %v3702 = vpop.permute.xlu0 %3701
        %v3705 = vadd.f32 %v3693, %v3700
        %v3706 = vadd.f32 %v3694, %v3702
        %3709 = vrot.lane.b32.xlu0 %v3691, 96
        %v3710 = vpop.permute.xlu0 %3709
        %3711 = vrot.lane.b32.xlu0 %v3692, 96
        %v3712 = vpop.permute.xlu0 %3711
        %3717 = vrot.lane.b32.xlu0 %v3705, 112
        %v3718 = vpop.permute.xlu0 %3717
        %3719 = vrot.lane.b32.xlu0 %v3706, 112
        %v3720 = vpop.permute.xlu0 %3719
        %v3723 = vsel %vm1334, %v3710, %v3718
        %v3724 = vsel %vm1334, %v3712, %v3720
        %v3725 = vmul.f32 %v3437, %v1496
        %v3726 = vmul.f32 %v3441, %v1498
        %v3727 = vmul.f32 %v3437, %v1504
        %v3728 = vmul.f32 %v3441, %v1506
        %3731 = vrot.lane.b32.xlu0 %v3727, 112
        %v3732 = vpop.permute.xlu0 %3731
        %3733 = vrot.lane.b32.xlu0 %v3728, 112
        %v3734 = vpop.permute.xlu0 %3733
        %v3737 = vsub.f32 %v3725, %v3732
        %v3738 = vsub.f32 %v3726, %v3734
        %v3739 = vmul.f32 %v3437, %v1522
        %v3740 = vmul.f32 %v3441, %v1524
        %v3741 = vmul.f32 %v3437, %v1530
        %v3742 = vmul.f32 %v3441, %v1532
        %3745 = vrot.lane.b32.xlu0 %v3741, 112
        %v3746 = vpop.permute.xlu0 %3745
        %3747 = vrot.lane.b32.xlu0 %v3742, 112
        %v3748 = vpop.permute.xlu0 %3747
        %v3751 = vadd.f32 %v3739, %v3746
        %v3752 = vadd.f32 %v3740, %v3748
        %3755 = vrot.lane.b32.xlu0 %v3737, 96
        %v3756 = vpop.permute.xlu0 %3755
        %3757 = vrot.lane.b32.xlu0 %v3738, 96
        %v3758 = vpop.permute.xlu0 %3757
        %3763 = vrot.lane.b32.xlu0 %v3751, 112
        %v3764 = vpop.permute.xlu0 %3763
        %3765 = vrot.lane.b32.xlu0 %v3752, 112
        %v3766 = vpop.permute.xlu0 %3765
        %v3769 = vsel %vm1334, %v3756, %v3764
        %v3770 = vsel %vm1334, %v3758, %v3766
        %v3771 = vpack.c.bf16 %v3724, %v3723
        %v3772 = vpack.c.bf16 %v3770, %v3769
        %v3774 = vsel %vm1377, %v3771, 0
        %v3777 = vsel %vm1377, %v3772, 0
        %3779 = vmatprep.subr.bf16.mxu0 0
        %3780 = vmatpush1.bf16.xpose.msra.mxu0 0
        %3781 = vmatprep.subr.bf16.mxu0 0
        %3782 = vmatpush1.bf16.xpose.msra.mxu0 0
        %3783 = vmatprep.subr.bf16.mxu0 0
        %3784 = vmatpush1.bf16.xpose.msra.mxu0 0
        %3785 = vmatprep.subr.bf16.mxu0 0
        %3786 = vmatpush1.bf16.xpose.msra.mxu0 0
        %3787 = vmatprep.subr.bf16.mxu0 0
        %3788 = vmatpush1.bf16.xpose.msra.mxu0 0
        %3789 = vmatprep.subr.bf16.mxu0 0
        %3790 = vmatpush1.bf16.xpose.msra.mxu0 0
        %3791 = vmatprep.subr.bf16.mxu0 0
        %3792 = vmatpush1.bf16.xpose.msra.mxu0 0
        %3793 = vmatprep.subr.bf16.mxu0 0
        %3794 = vmatpush1.bf16.xpose.msra.mxu0 %v3777
        %3795 = vmatprep.subr.bf16.mxu0 0
        %3796 = vmatpush2.bf16.xpose.msra.mxu0 0
        %3797 = vmatprep.subr.bf16.mxu0 0
        %3798 = vmatpush2.bf16.xpose.msra.mxu0 0
        %3799 = vmatprep.subr.bf16.mxu0 0
        %3800 = vmatpush2.bf16.xpose.msra.mxu0 0
        %3801 = vmatprep.subr.bf16.mxu0 0
        %3802 = vmatpush2.bf16.xpose.msra.mxu0 0
        %3803 = vmatprep.subr.bf16.mxu0 0
        %3804 = vmatpush2.bf16.xpose.msra.mxu0 0
        %3805 = vmatprep.subr.bf16.mxu0 0
        %3806 = vmatpush2.bf16.xpose.msra.mxu0 0
        %3807 = vmatprep.subr.bf16.mxu0 0
        %3808 = vmatpush2.bf16.xpose.msra.mxu0 0
        %3809 = vmatprep.subr.bf16.mxu0 0
        %3810 = vmatpush2.bf16.xpose.msra.mxu0 0
        %3811 = vmatprep.mubr.bf16.mxu0 0
        %3812 = vmatmul.mubr.bf16.gmra.mxu0 %v3774
        %v3813 = vpop.f32.mrf.mxu0
        %v3814 = vadd.f32 0.0, %v3813
        %v3815 = vpop.f32.mrf.mxu0
        %v3816 = vpop.f32.mrf.mxu0
        %v3817 = vadd.f32 0.0, %v3816
        %v3818 = vpop.f32.mrf.mxu0
        %3819 = vdwg.mxu0
        %v3820 = vmul.f32 %v3814, 0.17677669
        %v3821 = vmul.f32 %v3817, 0.17677669
        %v3822 = vsel %vm1334, %v3820, -inf
        %3823 = vmax.xlane.f32.xlu0 %v3822
        %v3824 = vpop.xlane.xlu0 %3823
        %v3825 = vsel %vm1334, %v3821, -inf
        %3826 = vmax.xlane.f32.xlu0 %v3825
        %v3827 = vpop.xlane.xlu0 %3826
        %v3828 = vsub.f32 %v3820, %v3824
        %v3829 = vsub.f32 %v3821, %v3827
        %v3830 = vmul.f32 %v3828, 1.442695
        %v3831 = vpow.pop %v3830
        %v3832 = vmul.f32 %v3829, 1.442695
        %v3833 = vpow.pop %v3832
        %v3834 = vsel %vm1334, %v3831, 0.0
        %3835 = vadd.xlane.f32.xlu0 %v3834
        %v3836 = vpop.xlane.xlu0 %3835
        %v3837 = vsel %vm1334, %v3833, 0.0
        %3838 = vadd.xlane.f32.xlu0 %v3837
        %v3839 = vpop.xlane.xlu0 %3838
        %v3840 = vrcp.pop %v3836
        %v3841 = vrcp.pop %v3839
        %v3842 = vmul.f32 %v3831, %v3840
        %v3843 = vmul.f32 %v3833, %v3841
        %v3844 = vpack.c.bf16 %v3843, %v3842
        %3846 = vrot.lane.b32.xlu0 %v3634, 96
        %v3847 = vpop.permute.xlu0 %3846
        %v3850 = vsel %vm1334, %v3844, 0
        %3852 = vmatprep.subr.bf16.mxu0 0
        %3853 = vmatpush1.bf16.msra.mxu0 0
        %3854 = vmatprep.subr.bf16.mxu0 0
        %3855 = vmatpush1.bf16.msra.mxu0 0
        %3856 = vmatprep.subr.bf16.mxu0 0
        %3857 = vmatpush1.bf16.msra.mxu0 0
        %3858 = vmatprep.subr.bf16.mxu0 0
        %3859 = vmatpush1.bf16.msra.mxu0 0
        %3860 = vmatprep.subr.bf16.mxu0 0
        %3861 = vmatpush1.bf16.msra.mxu0 0
        %3862 = vmatprep.subr.bf16.mxu0 0
        %3863 = vmatpush1.bf16.msra.mxu0 0
        %3864 = vmatprep.subr.bf16.mxu0 0
        %3865 = vmatpush1.bf16.msra.mxu0 0
        %3866 = vmatprep.subr.bf16.mxu0 0
        %3867 = vmatpush1.bf16.msra.mxu0 %v3847
        %3868 = vmatprep.subr.bf16.mxu0 0
        %3869 = vmatpush2.bf16.msra.mxu0 0
        %3870 = vmatprep.subr.bf16.mxu0 0
        %3871 = vmatpush2.bf16.msra.mxu0 0
        %3872 = vmatprep.subr.bf16.mxu0 0
        %3873 = vmatpush2.bf16.msra.mxu0 0
        %3874 = vmatprep.subr.bf16.mxu0 0
        %3875 = vmatpush2.bf16.msra.mxu0 0
        %3876 = vmatprep.subr.bf16.mxu0 0
        %3877 = vmatpush2.bf16.msra.mxu0 0
        %3878 = vmatprep.subr.bf16.mxu0 0
        %3879 = vmatpush2.bf16.msra.mxu0 0
        %3880 = vmatprep.subr.bf16.mxu0 0
        %3881 = vmatpush2.bf16.msra.mxu0 0
        %3882 = vmatprep.subr.bf16.mxu0 0
        %3883 = vmatpush2.bf16.msra.mxu0 0
        %3884 = vmatprep.mubr.bf16.mxu0 0
        %3885 = vmatmul.mubr.bf16.gmra.mxu0 %v3850
        %v3886 = vpop.f32.mrf.mxu0
        %v3887 = vadd.f32 0.0, %v3886
        %v3888 = vpop.f32.mrf.mxu0
        %v3889 = vpop.f32.mrf.mxu0
        %v3890 = vadd.f32 0.0, %v3889
        %v3891 = vpop.f32.mrf.mxu0
        %3892 = vdwg.mxu0
        %v3893 = vmul.f32 %v3435, %v1734
        %v3894 = vmul.f32 %v3439, %v1736
        %v3895 = vmul.f32 %v3435, %v1742
        %v3896 = vmul.f32 %v3439, %v1744
        %3899 = vrot.lane.b32.xlu0 %v3895, 112
        %v3900 = vpop.permute.xlu0 %3899
        %3901 = vrot.lane.b32.xlu0 %v3896, 112
        %v3902 = vpop.permute.xlu0 %3901
        %v3905 = vsub.f32 %v3893, %v3900
        %v3906 = vsub.f32 %v3894, %v3902
        %v3907 = vmul.f32 %v3435, %v1760
        %v3908 = vmul.f32 %v3439, %v1762
        %v3909 = vmul.f32 %v3435, %v1768
        %v3910 = vmul.f32 %v3439, %v1770
        %3913 = vrot.lane.b32.xlu0 %v3909, 112
        %v3914 = vpop.permute.xlu0 %3913
        %3915 = vrot.lane.b32.xlu0 %v3910, 112
        %v3916 = vpop.permute.xlu0 %3915
        %v3919 = vadd.f32 %v3907, %v3914
        %v3920 = vadd.f32 %v3908, %v3916
        %3923 = vrot.lane.b32.xlu0 %v3905, 64
        %v3924 = vpop.permute.xlu0 %3923
        %3925 = vrot.lane.b32.xlu0 %v3906, 64
        %v3926 = vpop.permute.xlu0 %3925
        %3931 = vrot.lane.b32.xlu0 %v3919, 80
        %v3932 = vpop.permute.xlu0 %3931
        %3933 = vrot.lane.b32.xlu0 %v3920, 80
        %v3934 = vpop.permute.xlu0 %3933
        %v3937 = vsel %vm1334, %v3924, %v3932
        %v3938 = vsel %vm1334, %v3926, %v3934
        %v3939 = vmul.f32 %v3437, %v1734
        %v3940 = vmul.f32 %v3441, %v1736
        %v3941 = vmul.f32 %v3437, %v1742
        %v3942 = vmul.f32 %v3441, %v1744
        %3945 = vrot.lane.b32.xlu0 %v3941, 112
        %v3946 = vpop.permute.xlu0 %3945
        %3947 = vrot.lane.b32.xlu0 %v3942, 112
        %v3948 = vpop.permute.xlu0 %3947
        %v3951 = vsub.f32 %v3939, %v3946
        %v3952 = vsub.f32 %v3940, %v3948
        %v3953 = vmul.f32 %v3437, %v1760
        %v3954 = vmul.f32 %v3441, %v1762
        %v3955 = vmul.f32 %v3437, %v1768
        %v3956 = vmul.f32 %v3441, %v1770
        %3959 = vrot.lane.b32.xlu0 %v3955, 112
        %v3960 = vpop.permute.xlu0 %3959
        %3961 = vrot.lane.b32.xlu0 %v3956, 112
        %v3962 = vpop.permute.xlu0 %3961
        %v3965 = vadd.f32 %v3953, %v3960
        %v3966 = vadd.f32 %v3954, %v3962
        %3969 = vrot.lane.b32.xlu0 %v3951, 64
        %v3970 = vpop.permute.xlu0 %3969
        %3971 = vrot.lane.b32.xlu0 %v3952, 64
        %v3972 = vpop.permute.xlu0 %3971
        %3977 = vrot.lane.b32.xlu0 %v3965, 80
        %v3978 = vpop.permute.xlu0 %3977
        %3979 = vrot.lane.b32.xlu0 %v3966, 80
        %v3980 = vpop.permute.xlu0 %3979
        %v3983 = vsel %vm1334, %v3970, %v3978
        %v3984 = vsel %vm1334, %v3972, %v3980
        %v3985 = vpack.c.bf16 %v3938, %v3937
        %v3986 = vpack.c.bf16 %v3984, %v3983
        %v3988 = vsel %vm1377, %v3985, 0
        %v3991 = vsel %vm1377, %v3986, 0
        %3993 = vmatprep.subr.bf16.mxu0 0
        %3994 = vmatpush1.bf16.xpose.msra.mxu0 0
        %3995 = vmatprep.subr.bf16.mxu0 0
        %3996 = vmatpush1.bf16.xpose.msra.mxu0 0
        %3997 = vmatprep.subr.bf16.mxu0 0
        %3998 = vmatpush1.bf16.xpose.msra.mxu0 0
        %3999 = vmatprep.subr.bf16.mxu0 0
        %4000 = vmatpush1.bf16.xpose.msra.mxu0 0
        %4001 = vmatprep.subr.bf16.mxu0 0
        %4002 = vmatpush1.bf16.xpose.msra.mxu0 0
        %4003 = vmatprep.subr.bf16.mxu0 0
        %4004 = vmatpush1.bf16.xpose.msra.mxu0 0
        %4005 = vmatprep.subr.bf16.mxu0 0
        %4006 = vmatpush1.bf16.xpose.msra.mxu0 0
        %4007 = vmatprep.subr.bf16.mxu0 0
        %4008 = vmatpush1.bf16.xpose.msra.mxu0 %v3991
        %4009 = vmatprep.subr.bf16.mxu0 0
        %4010 = vmatpush2.bf16.xpose.msra.mxu0 0
        %4011 = vmatprep.subr.bf16.mxu0 0
        %4012 = vmatpush2.bf16.xpose.msra.mxu0 0
        %4013 = vmatprep.subr.bf16.mxu0 0
        %4014 = vmatpush2.bf16.xpose.msra.mxu0 0
        %4015 = vmatprep.subr.bf16.mxu0 0
        %4016 = vmatpush2.bf16.xpose.msra.mxu0 0
        %4017 = vmatprep.subr.bf16.mxu0 0
        %4018 = vmatpush2.bf16.xpose.msra.mxu0 0
        %4019 = vmatprep.subr.bf16.mxu0 0
        %4020 = vmatpush2.bf16.xpose.msra.mxu0 0
        %4021 = vmatprep.subr.bf16.mxu0 0
        %4022 = vmatpush2.bf16.xpose.msra.mxu0 0
        %4023 = vmatprep.subr.bf16.mxu0 0
        %4024 = vmatpush2.bf16.xpose.msra.mxu0 0
        %4025 = vmatprep.mubr.bf16.mxu0 0
        %4026 = vmatmul.mubr.bf16.gmra.mxu0 %v3988
        %v4027 = vpop.f32.mrf.mxu0
        %v4028 = vadd.f32 0.0, %v4027
        %v4029 = vpop.f32.mrf.mxu0
        %v4030 = vpop.f32.mrf.mxu0
        %v4031 = vadd.f32 0.0, %v4030
        %v4032 = vpop.f32.mrf.mxu0
        %4033 = vdwg.mxu0
        %v4034 = vmul.f32 %v4028, 0.17677669
        %v4035 = vmul.f32 %v4031, 0.17677669
        %v4036 = vsel %vm1334, %v4034, -inf
        %4037 = vmax.xlane.f32.xlu0 %v4036
        %v4038 = vpop.xlane.xlu0 %4037
        %v4039 = vsel %vm1334, %v4035, -inf
        %4040 = vmax.xlane.f32.xlu0 %v4039
        %v4041 = vpop.xlane.xlu0 %4040
        %v4042 = vsub.f32 %v4034, %v4038
        %v4043 = vsub.f32 %v4035, %v4041
        %v4044 = vmul.f32 %v4042, 1.442695
        %v4045 = vpow.pop %v4044
        %v4046 = vmul.f32 %v4043, 1.442695
        %v4047 = vpow.pop %v4046
        %v4048 = vsel %vm1334, %v4045, 0.0
        %4049 = vadd.xlane.f32.xlu0 %v4048
        %v4050 = vpop.xlane.xlu0 %4049
        %v4051 = vsel %vm1334, %v4047, 0.0
        %4052 = vadd.xlane.f32.xlu0 %v4051
        %v4053 = vpop.xlane.xlu0 %4052
        %v4054 = vrcp.pop %v4050
        %v4055 = vrcp.pop %v4053
        %v4056 = vmul.f32 %v4045, %v4054
        %v4057 = vmul.f32 %v4047, %v4055
        %v4058 = vpack.c.bf16 %v4057, %v4056
        %4059 = vrot.lane.b32.xlu0 %v3634, 64
        %v4060 = vpop.permute.xlu0 %4059
        %v4063 = vsel %vm1334, %v4058, 0
        %4065 = vmatprep.subr.bf16.mxu0 0
        %4066 = vmatpush1.bf16.msra.mxu0 0
        %4067 = vmatprep.subr.bf16.mxu0 0
        %4068 = vmatpush1.bf16.msra.mxu0 0
        %4069 = vmatprep.subr.bf16.mxu0 0
        %4070 = vmatpush1.bf16.msra.mxu0 0
        %4071 = vmatprep.subr.bf16.mxu0 0
        %4072 = vmatpush1.bf16.msra.mxu0 0
        %4073 = vmatprep.subr.bf16.mxu0 0
        %4074 = vmatpush1.bf16.msra.mxu0 0
        %4075 = vmatprep.subr.bf16.mxu0 0
        %4076 = vmatpush1.bf16.msra.mxu0 0
        %4077 = vmatprep.subr.bf16.mxu0 0
        %4078 = vmatpush1.bf16.msra.mxu0 0
        %4079 = vmatprep.subr.bf16.mxu0 0
        %4080 = vmatpush1.bf16.msra.mxu0 %v4060
        %4081 = vmatprep.subr.bf16.mxu0 0
        %4082 = vmatpush2.bf16.msra.mxu0 0
        %4083 = vmatprep.subr.bf16.mxu0 0
        %4084 = vmatpush2.bf16.msra.mxu0 0
        %4085 = vmatprep.subr.bf16.mxu0 0
        %4086 = vmatpush2.bf16.msra.mxu0 0
        %4087 = vmatprep.subr.bf16.mxu0 0
        %4088 = vmatpush2.bf16.msra.mxu0 0
        %4089 = vmatprep.subr.bf16.mxu0 0
        %4090 = vmatpush2.bf16.msra.mxu0 0
        %4091 = vmatprep.subr.bf16.mxu0 0
        %4092 = vmatpush2.bf16.msra.mxu0 0
        %4093 = vmatprep.subr.bf16.mxu0 0
        %4094 = vmatpush2.bf16.msra.mxu0 0
        %4095 = vmatprep.subr.bf16.mxu0 0
        %4096 = vmatpush2.bf16.msra.mxu0 0
        %4097 = vmatprep.mubr.bf16.mxu0 0
        %4098 = vmatmul.mubr.bf16.gmra.mxu0 %v4063
        %v4099 = vpop.f32.mrf.mxu0
        %v4100 = vadd.f32 0.0, %v4099
        %v4101 = vpop.f32.mrf.mxu0
        %v4102 = vpop.f32.mrf.mxu0
        %v4103 = vadd.f32 0.0, %v4102
        %v4104 = vpop.f32.mrf.mxu0
        %4105 = vdwg.mxu0
        %v4106 = vmul.f32 %v3435, %v1971
        %v4107 = vmul.f32 %v3439, %v1973
        %v4108 = vmul.f32 %v3435, %v1979
        %v4109 = vmul.f32 %v3439, %v1981
        %4112 = vrot.lane.b32.xlu0 %v4108, 112
        %v4113 = vpop.permute.xlu0 %4112
        %4114 = vrot.lane.b32.xlu0 %v4109, 112
        %v4115 = vpop.permute.xlu0 %4114
        %v4118 = vsub.f32 %v4106, %v4113
        %v4119 = vsub.f32 %v4107, %v4115
        %v4120 = vmul.f32 %v3435, %v1997
        %v4121 = vmul.f32 %v3439, %v1999
        %v4122 = vmul.f32 %v3435, %v2005
        %v4123 = vmul.f32 %v3439, %v2007
        %4126 = vrot.lane.b32.xlu0 %v4122, 112
        %v4127 = vpop.permute.xlu0 %4126
        %4128 = vrot.lane.b32.xlu0 %v4123, 112
        %v4129 = vpop.permute.xlu0 %4128
        %v4132 = vadd.f32 %v4120, %v4127
        %v4133 = vadd.f32 %v4121, %v4129
        %4136 = vrot.lane.b32.xlu0 %v4118, 32
        %v4137 = vpop.permute.xlu0 %4136
        %4138 = vrot.lane.b32.xlu0 %v4119, 32
        %v4139 = vpop.permute.xlu0 %4138
        %4144 = vrot.lane.b32.xlu0 %v4132, 48
        %v4145 = vpop.permute.xlu0 %4144
        %4146 = vrot.lane.b32.xlu0 %v4133, 48
        %v4147 = vpop.permute.xlu0 %4146
        %v4150 = vsel %vm1334, %v4137, %v4145
        %v4151 = vsel %vm1334, %v4139, %v4147
        %v4152 = vmul.f32 %v3437, %v1971
        %v4153 = vmul.f32 %v3441, %v1973
        %v4154 = vmul.f32 %v3437, %v1979
        %v4155 = vmul.f32 %v3441, %v1981
        %4158 = vrot.lane.b32.xlu0 %v4154, 112
        %v4159 = vpop.permute.xlu0 %4158
        %4160 = vrot.lane.b32.xlu0 %v4155, 112
        %v4161 = vpop.permute.xlu0 %4160
        %v4164 = vsub.f32 %v4152, %v4159
        %v4165 = vsub.f32 %v4153, %v4161
        %v4166 = vmul.f32 %v3437, %v1997
        %v4167 = vmul.f32 %v3441, %v1999
        %v4168 = vmul.f32 %v3437, %v2005
        %v4169 = vmul.f32 %v3441, %v2007
        %4172 = vrot.lane.b32.xlu0 %v4168, 112
        %v4173 = vpop.permute.xlu0 %4172
        %4174 = vrot.lane.b32.xlu0 %v4169, 112
        %v4175 = vpop.permute.xlu0 %4174
        %v4178 = vadd.f32 %v4166, %v4173
        %v4179 = vadd.f32 %v4167, %v4175
        %4182 = vrot.lane.b32.xlu0 %v4164, 32
        %v4183 = vpop.permute.xlu0 %4182
        %4184 = vrot.lane.b32.xlu0 %v4165, 32
        %v4185 = vpop.permute.xlu0 %4184
        %4190 = vrot.lane.b32.xlu0 %v4178, 48
        %v4191 = vpop.permute.xlu0 %4190
        %4192 = vrot.lane.b32.xlu0 %v4179, 48
        %v4193 = vpop.permute.xlu0 %4192
        %v4196 = vsel %vm1334, %v4183, %v4191
        %v4197 = vsel %vm1334, %v4185, %v4193
        %v4198 = vpack.c.bf16 %v4151, %v4150
        %v4199 = vpack.c.bf16 %v4197, %v4196
        %v4201 = vsel %vm1377, %v4198, 0
        %v4204 = vsel %vm1377, %v4199, 0
        %4206 = vmatprep.subr.bf16.mxu0 0
        %4207 = vmatpush1.bf16.xpose.msra.mxu0 0
        %4208 = vmatprep.subr.bf16.mxu0 0
        %4209 = vmatpush1.bf16.xpose.msra.mxu0 0
        %4210 = vmatprep.subr.bf16.mxu0 0
        %4211 = vmatpush1.bf16.xpose.msra.mxu0 0
        %4212 = vmatprep.subr.bf16.mxu0 0
        %4213 = vmatpush1.bf16.xpose.msra.mxu0 0
        %4214 = vmatprep.subr.bf16.mxu0 0
        %4215 = vmatpush1.bf16.xpose.msra.mxu0 0
        %4216 = vmatprep.subr.bf16.mxu0 0
        %4217 = vmatpush1.bf16.xpose.msra.mxu0 0
        %4218 = vmatprep.subr.bf16.mxu0 0
        %4219 = vmatpush1.bf16.xpose.msra.mxu0 0
        %4220 = vmatprep.subr.bf16.mxu0 0
        %4221 = vmatpush1.bf16.xpose.msra.mxu0 %v4204
        %4222 = vmatprep.subr.bf16.mxu0 0
        %4223 = vmatpush2.bf16.xpose.msra.mxu0 0
        %4224 = vmatprep.subr.bf16.mxu0 0
        %4225 = vmatpush2.bf16.xpose.msra.mxu0 0
        %4226 = vmatprep.subr.bf16.mxu0 0
        %4227 = vmatpush2.bf16.xpose.msra.mxu0 0
        %4228 = vmatprep.subr.bf16.mxu0 0
        %4229 = vmatpush2.bf16.xpose.msra.mxu0 0
        %4230 = vmatprep.subr.bf16.mxu0 0
        %4231 = vmatpush2.bf16.xpose.msra.mxu0 0
        %4232 = vmatprep.subr.bf16.mxu0 0
        %4233 = vmatpush2.bf16.xpose.msra.mxu0 0
        %4234 = vmatprep.subr.bf16.mxu0 0
        %4235 = vmatpush2.bf16.xpose.msra.mxu0 0
        %4236 = vmatprep.subr.bf16.mxu0 0
        %4237 = vmatpush2.bf16.xpose.msra.mxu0 0
        %4238 = vmatprep.mubr.bf16.mxu0 0
        %4239 = vmatmul.mubr.bf16.gmra.mxu0 %v4201
        %v4240 = vpop.f32.mrf.mxu0
        %v4241 = vadd.f32 0.0, %v4240
        %v4242 = vpop.f32.mrf.mxu0
        %v4243 = vpop.f32.mrf.mxu0
        %v4244 = vadd.f32 0.0, %v4243
        %v4245 = vpop.f32.mrf.mxu0
        %4246 = vdwg.mxu0
        %v4247 = vmul.f32 %v4241, 0.17677669
        %v4248 = vmul.f32 %v4244, 0.17677669
        %v4249 = vsel %vm1334, %v4247, -inf
        %4250 = vmax.xlane.f32.xlu0 %v4249
        %v4251 = vpop.xlane.xlu0 %4250
        %v4252 = vsel %vm1334, %v4248, -inf
        %4253 = vmax.xlane.f32.xlu0 %v4252
        %v4254 = vpop.xlane.xlu0 %4253
        %v4255 = vsub.f32 %v4247, %v4251
        %v4256 = vsub.f32 %v4248, %v4254
        %v4257 = vmul.f32 %v4255, 1.442695
        %v4258 = vpow.pop %v4257
        %v4259 = vmul.f32 %v4256, 1.442695
        %v4260 = vpow.pop %v4259
        %v4261 = vsel %vm1334, %v4258, 0.0
        %4262 = vadd.xlane.f32.xlu0 %v4261
        %v4263 = vpop.xlane.xlu0 %4262
        %v4264 = vsel %vm1334, %v4260, 0.0
        %4265 = vadd.xlane.f32.xlu0 %v4264
        %v4266 = vpop.xlane.xlu0 %4265
        %v4267 = vrcp.pop %v4263
        %v4268 = vrcp.pop %v4266
        %v4269 = vmul.f32 %v4258, %v4267
        %v4270 = vmul.f32 %v4260, %v4268
        %v4271 = vpack.c.bf16 %v4270, %v4269
        %4272 = vrot.lane.b32.xlu0 %v3634, 32
        %v4273 = vpop.permute.xlu0 %4272
        %v4276 = vsel %vm1334, %v4271, 0
        %4278 = vmatprep.subr.bf16.mxu0 0
        %4279 = vmatpush1.bf16.msra.mxu0 0
        %4280 = vmatprep.subr.bf16.mxu0 0
        %4281 = vmatpush1.bf16.msra.mxu0 0
        %4282 = vmatprep.subr.bf16.mxu0 0
        %4283 = vmatpush1.bf16.msra.mxu0 0
        %4284 = vmatprep.subr.bf16.mxu0 0
        %4285 = vmatpush1.bf16.msra.mxu0 0
        %4286 = vmatprep.subr.bf16.mxu0 0
        %4287 = vmatpush1.bf16.msra.mxu0 0
        %4288 = vmatprep.subr.bf16.mxu0 0
        %4289 = vmatpush1.bf16.msra.mxu0 0
        %4290 = vmatprep.subr.bf16.mxu0 0
        %4291 = vmatpush1.bf16.msra.mxu0 0
        %4292 = vmatprep.subr.bf16.mxu0 0
        %4293 = vmatpush1.bf16.msra.mxu0 %v4273
        %4294 = vmatprep.subr.bf16.mxu0 0
        %4295 = vmatpush2.bf16.msra.mxu0 0
        %4296 = vmatprep.subr.bf16.mxu0 0
        %4297 = vmatpush2.bf16.msra.mxu0 0
        %4298 = vmatprep.subr.bf16.mxu0 0
        %4299 = vmatpush2.bf16.msra.mxu0 0
        %4300 = vmatprep.subr.bf16.mxu0 0
        %4301 = vmatpush2.bf16.msra.mxu0 0
        %4302 = vmatprep.subr.bf16.mxu0 0
        %4303 = vmatpush2.bf16.msra.mxu0 0
        %4304 = vmatprep.subr.bf16.mxu0 0
        %4305 = vmatpush2.bf16.msra.mxu0 0
        %4306 = vmatprep.subr.bf16.mxu0 0
        %4307 = vmatpush2.bf16.msra.mxu0 0
        %4308 = vmatprep.subr.bf16.mxu0 0
        %4309 = vmatpush2.bf16.msra.mxu0 0
        %4310 = vmatprep.mubr.bf16.mxu0 0
        %4311 = vmatmul.mubr.bf16.gmra.mxu0 %v4276
        %v4312 = vpop.f32.mrf.mxu0
        %v4313 = vadd.f32 0.0, %v4312
        %v4314 = vpop.f32.mrf.mxu0
        %v4315 = vpop.f32.mrf.mxu0
        %v4316 = vadd.f32 0.0, %v4315
        %v4317 = vpop.f32.mrf.mxu0
        %4318 = vdwg.mxu0
        %4321 = vrot.lane.b32.xlu0 %v3887, 32
        %v4322 = vpop.permute.xlu0 %4321
        %4323 = vrot.lane.b32.xlu0 %v3890, 32
        %v4324 = vpop.permute.xlu0 %4323
        %4329 = vrot.lane.b32.xlu0 %v4100, 64
        %v4330 = vpop.permute.xlu0 %4329
        %4331 = vrot.lane.b32.xlu0 %v4103, 64
        %v4332 = vpop.permute.xlu0 %4331
        %4337 = vrot.lane.b32.xlu0 %v4313, 96
        %v4338 = vpop.permute.xlu0 %4337
        %4339 = vrot.lane.b32.xlu0 %v4316, 96
        %v4340 = vpop.permute.xlu0 %4339
        %v4343 = vsel %vm1377, %v3673, %v4322
        %v4344 = vsel %vm1377, %v3676, %v4324
        %v4345 = vsel %vm2233, %v4343, %v4330
        %v4346 = vsel %vm2233, %v4344, %v4332
        %v4347 = vsel %vm2236, %v4345, %v4338
        %v4348 = vsel %vm2236, %v4346, %v4340
        %v4349 = vpack.c.bf16 %v4348, %v4347
        %v4350 = vld [vmem:[%s18] sm:$0xf]
        %v4351 = vld [vmem:[%s18 + $0x4] sm:$0xf]
        %v4352 = vld [vmem:[%s18 + $0x8] sm:$0xf]
        %v4353 = vld [vmem:[%s18 + $0xc] sm:$0xf]
        %v4354 = vld [vmem:[%s18 + $0x10] sm:$0xf]
        %v4355 = vld [vmem:[%s18 + $0x14] sm:$0xf]
        %v4356 = vld [vmem:[%s18 + $0x18] sm:$0xf]
        %v4357 = vld [vmem:[%s18 + $0x1c] sm:$0xf]
        %v4358 = vld [vmem:[%s18 + $0x20] sm:$0xf]
        %v4359 = vld [vmem:[%s18 + $0x24] sm:$0xf]
        %v4360 = vld [vmem:[%s18 + $0x28] sm:$0xf]
        %v4361 = vld [vmem:[%s18 + $0x2c] sm:$0xf]
        %v4362 = vld [vmem:[%s18 + $0x30] sm:$0xf]
        %v4363 = vld [vmem:[%s18 + $0x34] sm:$0xf]
        %v4364 = vld [vmem:[%s18 + $0x38] sm:$0xf]
        %v4365 = vld [vmem:[%s18 + $0x3c] sm:$0xf]
        %v4382 = vunpack.c.l.b16 %v4350
        %v4383 = vunpack.c.l.b16 %v4351
        %v4384 = vunpack.c.l.b16 %v4352
        %v4385 = vunpack.c.l.b16 %v4353
        %v4386 = vunpack.c.l.b16 %v4354
        %v4387 = vunpack.c.l.b16 %v4355
        %v4388 = vunpack.c.l.b16 %v4356
        %v4389 = vunpack.c.l.b16 %v4357
        %v4390 = vunpack.c.l.b16 %v4358
        %v4391 = vunpack.c.l.b16 %v4359
        %v4392 = vunpack.c.l.b16 %v4360
        %v4393 = vunpack.c.l.b16 %v4361
        %v4394 = vunpack.c.l.b16 %v4362
        %v4395 = vunpack.c.l.b16 %v4363
        %v4396 = vunpack.c.l.b16 %v4364
        %v4397 = vunpack.c.l.b16 %v4365
        %v4398 = vpack.c.b16 %v4383, %v4382
        %v4399 = vpack.c.b16 %v4385, %v4384
        %v4400 = vpack.c.b16 %v4387, %v4386
        %v4401 = vpack.c.b16 %v4389, %v4388
        %v4402 = vpack.c.b16 %v4391, %v4390
        %v4403 = vpack.c.b16 %v4393, %v4392
        %v4404 = vpack.c.b16 %v4395, %v4394
        %v4405 = vpack.c.b16 %v4397, %v4396
        %4414 = vmatprep.subr.bf16.mxu0 0
        %4415 = vmatpush1.bf16.msra.mxu0 %v4405
        %4416 = vmatprep.subr.bf16.mxu0 0
        %4417 = vmatpush1.bf16.msra.mxu0 %v4404
        %4418 = vmatprep.subr.bf16.mxu0 0
        %4419 = vmatpush1.bf16.msra.mxu0 %v4403
        %4420 = vmatprep.subr.bf16.mxu0 0
        %4421 = vmatpush1.bf16.msra.mxu0 %v4402
        %4422 = vmatprep.subr.bf16.mxu0 0
        %4423 = vmatpush1.bf16.msra.mxu0 %v4401
        %4424 = vmatprep.subr.bf16.mxu0 0
        %4425 = vmatpush1.bf16.msra.mxu0 %v4400
        %4426 = vmatprep.subr.bf16.mxu0 0
        %4427 = vmatpush1.bf16.msra.mxu0 %v4399
        %4428 = vmatprep.subr.bf16.mxu0 0
        %4429 = vmatpush1.bf16.msra.mxu0 %v4398
        %4430 = vmatprep.subr.bf16.mxu0 0
        %4431 = vmatpush2.bf16.msra.mxu0 0
        %4432 = vmatprep.subr.bf16.mxu0 0
        %4433 = vmatpush2.bf16.msra.mxu0 0
        %4434 = vmatprep.subr.bf16.mxu0 0
        %4435 = vmatpush2.bf16.msra.mxu0 0
        %4436 = vmatprep.subr.bf16.mxu0 0
        %4437 = vmatpush2.bf16.msra.mxu0 0
        %4438 = vmatprep.subr.bf16.mxu0 0
        %4439 = vmatpush2.bf16.msra.mxu0 0
        %4440 = vmatprep.subr.bf16.mxu0 0
        %4441 = vmatpush2.bf16.msra.mxu0 0
        %4442 = vmatprep.subr.bf16.mxu0 0
        %4443 = vmatpush2.bf16.msra.mxu0 0
        %4444 = vmatprep.subr.bf16.mxu0 0
        %4445 = vmatpush2.bf16.msra.mxu0 0
        %4446 = vmatprep.mubr.bf16.mxu0 0
        %4447 = vmatmul.mubr.bf16.gmra.mxu0 %v4349
        %v4448 = vpop.f32.mrf.mxu0
        %v4449 = vadd.f32 0.0, %v4448
        %v4450 = vpop.f32.mrf.mxu0
        %v4451 = vpop.f32.mrf.mxu0
        %v4452 = vadd.f32 0.0, %v4451
        %v4453 = vpop.f32.mrf.mxu0
        %4454 = vdwg.mxu0
        %v4455 = vadd.f32 %v3197, %v4449
        %v4456 = vadd.f32 %v3198, %v4452
        %v4457 = vld [vmem:[#allocation9] sm:$0x1]
        %v4458 = vmul.f32 %v4455, %v4455
        %v4459 = vmul.f32 %v4456, %v4456
        %4460 = vadd.xlane.f32.xlu0 %v4458
        %v4461 = vpop.xlane.xlu0 %4460
        %4462 = vadd.xlane.f32.xlu0 %v4459
        %v4463 = vpop.xlane.xlu0 %4462
        %v4464 = vmul.f32 %v4461, %v1003
        %v4465 = vmul.f32 %v4463, %v1003
        %v4466 = vadd.f32 %v4464, 1e-05
        %v4467 = vadd.f32 %v4465, 1e-05
        %v4468 = vrsqrt.pop %v4466
        %v4469 = vrsqrt.pop %v4467
        %v4470 = vmul.f32 %v4455, %v4468
        %v4471 = vmul.f32 %v4456, %v4469
        %v4473 = vlaneseq
        %v4474 = vshrl.u32 %v4473, 7
        %v4475 = vsub.s32 0, %v4474
        %v4476 = vrot.slane %v4457, %v4475
        %v4478 = vmul.f32 %v4470, %v4476
        %v4479 = vmul.f32 %v4471, %v4476
        %v4480 = vpack.c.bf16 %v4479, %v4478
        %v4481 = vld [vmem:[%s20] sm:$0xff]
        %v4482 = vld [vmem:[%s20 + $0x8] sm:$0xf]
        %v4483 = vld [vmem:[%s20 + $0xc] sm:$0xff]
        %v4484 = vld [vmem:[%s20 + $0x14] sm:$0xf]
        %v4485 = vld [vmem:[%s20 + $0x18] sm:$0xff]
        %v4486 = vld [vmem:[%s20 + $0x20] sm:$0xf]
        %v4487 = vld [vmem:[%s20 + $0x24] sm:$0xff]
        %v4488 = vld [vmem:[%s20 + $0x2c] sm:$0xf]
        %v4489 = vld [vmem:[%s20 + $0x30] sm:$0xff]
        %v4490 = vld [vmem:[%s20 + $0x38] sm:$0xf]
        %v4491 = vld [vmem:[%s20 + $0x3c] sm:$0xff]
        %v4492 = vld [vmem:[%s20 + $0x44] sm:$0xf]
        %v4493 = vld [vmem:[%s20 + $0x48] sm:$0xff]
        %v4494 = vld [vmem:[%s20 + $0x50] sm:$0xf]
        %v4495 = vld [vmem:[%s20 + $0x54] sm:$0xff]
        %v4496 = vld [vmem:[%s20 + $0x5c] sm:$0xf]
        %v4497 = vld [vmem:[%s20 + $0x60] sm:$0xff]
        %v4498 = vld [vmem:[%s20 + $0x68] sm:$0xf]
        %v4499 = vld [vmem:[%s20 + $0x6c] sm:$0xff]
        %v4500 = vld [vmem:[%s20 + $0x74] sm:$0xf]
        %v4501 = vld [vmem:[%s20 + $0x78] sm:$0xff]
        %v4502 = vld [vmem:[%s20 + $0x80] sm:$0xf]
        %v4503 = vld [vmem:[%s20 + $0x84] sm:$0xff]
        %v4504 = vld [vmem:[%s20 + $0x8c] sm:$0xf]
        %v4505 = vld [vmem:[%s20 + $0x90] sm:$0xff]
        %v4506 = vld [vmem:[%s20 + $0x98] sm:$0xf]
        %v4507 = vld [vmem:[%s20 + $0x9c] sm:$0xff]
        %v4508 = vld [vmem:[%s20 + $0xa4] sm:$0xf]
        %v4509 = vld [vmem:[%s20 + $0xa8] sm:$0xff]
        %v4510 = vld [vmem:[%s20 + $0xb0] sm:$0xf]
        %v4511 = vld [vmem:[%s20 + $0xb4] sm:$0xff]
        %v4512 = vld [vmem:[%s20 + $0xbc] sm:$0xf]
        %v4545 = vunpack.c.l.b16 %v4481
        %v4546 = vunpack.c.h.b16 %v4481
        %v4547 = vunpack.c.l.b16 %v4482
        %v4548 = vunpack.c.l.b16 %v4483
        %v4549 = vunpack.c.h.b16 %v4483
        %v4550 = vunpack.c.l.b16 %v4484
        %v4551 = vunpack.c.l.b16 %v4485
        %v4552 = vunpack.c.h.b16 %v4485
        %v4553 = vunpack.c.l.b16 %v4486
        %v4554 = vunpack.c.l.b16 %v4487
        %v4555 = vunpack.c.h.b16 %v4487
        %v4556 = vunpack.c.l.b16 %v4488
        %v4557 = vunpack.c.l.b16 %v4489
        %v4558 = vunpack.c.h.b16 %v4489
        %v4559 = vunpack.c.l.b16 %v4490
        %v4560 = vunpack.c.l.b16 %v4491
        %v4561 = vunpack.c.h.b16 %v4491
        %v4562 = vunpack.c.l.b16 %v4492
        %v4563 = vunpack.c.l.b16 %v4493
        %v4564 = vunpack.c.h.b16 %v4493
        %v4565 = vunpack.c.l.b16 %v4494
        %v4566 = vunpack.c.l.b16 %v4495
        %v4567 = vunpack.c.h.b16 %v4495
        %v4568 = vunpack.c.l.b16 %v4496
        %v4569 = vunpack.c.l.b16 %v4497
        %v4570 = vunpack.c.h.b16 %v4497
        %v4571 = vunpack.c.l.b16 %v4498
        %v4572 = vunpack.c.l.b16 %v4499
        %v4573 = vunpack.c.h.b16 %v4499
        %v4574 = vunpack.c.l.b16 %v4500
        %v4575 = vunpack.c.l.b16 %v4501
        %v4576 = vunpack.c.h.b16 %v4501
        %v4577 = vunpack.c.l.b16 %v4502
        %v4578 = vunpack.c.l.b16 %v4503
        %v4579 = vunpack.c.h.b16 %v4503
        %v4580 = vunpack.c.l.b16 %v4504
        %v4581 = vunpack.c.l.b16 %v4505
        %v4582 = vunpack.c.h.b16 %v4505
        %v4583 = vunpack.c.l.b16 %v4506
        %v4584 = vunpack.c.l.b16 %v4507
        %v4585 = vunpack.c.h.b16 %v4507
        %v4586 = vunpack.c.l.b16 %v4508
        %v4587 = vunpack.c.l.b16 %v4509
        %v4588 = vunpack.c.h.b16 %v4509
        %v4589 = vunpack.c.l.b16 %v4510
        %v4590 = vunpack.c.l.b16 %v4511
        %v4591 = vunpack.c.h.b16 %v4511
        %v4592 = vunpack.c.l.b16 %v4512
        %v4593 = vpack.c.b16 %v4548, %v4545
        %v4594 = vpack.c.b16 %v4549, %v4546
        %v4595 = vpack.c.b16 %v4550, %v4547
        %v4596 = vpack.c.b16 %v4554, %v4551
        %v4597 = vpack.c.b16 %v4555, %v4552
        %v4598 = vpack.c.b16 %v4556, %v4553
        %v4599 = vpack.c.b16 %v4560, %v4557
        %v4600 = vpack.c.b16 %v4561, %v4558
        %v4601 = vpack.c.b16 %v4562, %v4559
        %v4602 = vpack.c.b16 %v4566, %v4563
        %v4603 = vpack.c.b16 %v4567, %v4564
        %v4604 = vpack.c.b16 %v4568, %v4565
        %v4605 = vpack.c.b16 %v4572, %v4569
        %v4606 = vpack.c.b16 %v4573, %v4570
        %v4607 = vpack.c.b16 %v4574, %v4571
        %v4608 = vpack.c.b16 %v4578, %v4575
        %v4609 = vpack.c.b16 %v4579, %v4576
        %v4610 = vpack.c.b16 %v4580, %v4577
        %v4611 = vpack.c.b16 %v4584, %v4581
        %v4612 = vpack.c.b16 %v4585, %v4582
        %v4613 = vpack.c.b16 %v4586, %v4583
        %v4614 = vpack.c.b16 %v4590, %v4587
        %v4615 = vpack.c.b16 %v4591, %v4588
        %v4616 = vpack.c.b16 %v4592, %v4589
        %4641 = vmatprep.subr.bf16.mxu0 %v4615
        %4642 = vmatpush1.bf16.msra.mxu0 %v4614
        %4643 = vmatprep.subr.bf16.mxu0 %v4612
        %4644 = vmatpush1.bf16.msra.mxu0 %v4611
        %4645 = vmatprep.subr.bf16.mxu0 %v4609
        %4646 = vmatpush1.bf16.msra.mxu0 %v4608
        %4647 = vmatprep.subr.bf16.mxu0 %v4606
        %4648 = vmatpush1.bf16.msra.mxu0 %v4605
        %4649 = vmatprep.subr.bf16.mxu0 %v4603
        %4650 = vmatpush1.bf16.msra.mxu0 %v4602
        %4651 = vmatprep.subr.bf16.mxu0 %v4600
        %4652 = vmatpush1.bf16.msra.mxu0 %v4599
        %4653 = vmatprep.subr.bf16.mxu0 %v4597
        %4654 = vmatpush1.bf16.msra.mxu0 %v4596
        %4655 = vmatprep.subr.bf16.mxu0 %v4594
        %4656 = vmatpush1.bf16.msra.mxu0 %v4593
        %4657 = vmatprep.subr.bf16.mxu0 0
        %4658 = vmatpush2.bf16.msra.mxu0 0
        %4659 = vmatprep.subr.bf16.mxu0 0
        %4660 = vmatpush2.bf16.msra.mxu0 0
        %4661 = vmatprep.subr.bf16.mxu0 0
        %4662 = vmatpush2.bf16.msra.mxu0 0
        %4663 = vmatprep.subr.bf16.mxu0 0
        %4664 = vmatpush2.bf16.msra.mxu0 0
        %4665 = vmatprep.subr.bf16.mxu0 0
        %4666 = vmatpush2.bf16.msra.mxu0 0
        %4667 = vmatprep.subr.bf16.mxu0 0
        %4668 = vmatpush2.bf16.msra.mxu0 0
        %4669 = vmatprep.subr.bf16.mxu0 0
        %4670 = vmatpush2.bf16.msra.mxu0 0
        %4671 = vmatprep.subr.bf16.mxu0 0
        %4672 = vmatpush2.bf16.msra.mxu0 0
        %4673 = vmatprep.mubr.bf16.mxu0 0
        %4674 = vmatmul.mubr.bf16.gmra.mxu0 %v4480
        %v4675 = vpop.f32.mrf.mxu0
        %v4676 = vadd.f32 0.0, %v4675
        %v4677 = vpop.f32.mrf.mxu0
        %v4678 = vadd.f32 0.0, %v4677
        %v4679 = vpop.f32.mrf.mxu0
        %v4680 = vadd.f32 0.0, %v4679
        %v4681 = vpop.f32.mrf.mxu0
        %v4682 = vadd.f32 0.0, %v4681
        %4683 = vdwg.mxu0
        %4684 = vmatprep.subr.bf16.mxu0 0
        %4685 = vmatpush1.bf16.msra.mxu0 %v4616
        %4686 = vmatprep.subr.bf16.mxu0 0
        %4687 = vmatpush1.bf16.msra.mxu0 %v4613
        %4688 = vmatprep.subr.bf16.mxu0 0
        %4689 = vmatpush1.bf16.msra.mxu0 %v4610
        %4690 = vmatprep.subr.bf16.mxu0 0
        %4691 = vmatpush1.bf16.msra.mxu0 %v4607
        %4692 = vmatprep.subr.bf16.mxu0 0
        %4693 = vmatpush1.bf16.msra.mxu0 %v4604
        %4694 = vmatprep.subr.bf16.mxu0 0
        %4695 = vmatpush1.bf16.msra.mxu0 %v4601
        %4696 = vmatprep.subr.bf16.mxu0 0
        %4697 = vmatpush1.bf16.msra.mxu0 %v4598
        %4698 = vmatprep.subr.bf16.mxu0 0
        %4699 = vmatpush1.bf16.msra.mxu0 %v4595
        %4700 = vmatprep.subr.bf16.mxu0 0
        %4701 = vmatpush2.bf16.msra.mxu0 0
        %4702 = vmatprep.subr.bf16.mxu0 0
        %4703 = vmatpush2.bf16.msra.mxu0 0
        %4704 = vmatprep.subr.bf16.mxu0 0
        %4705 = vmatpush2.bf16.msra.mxu0 0
        %4706 = vmatprep.subr.bf16.mxu0 0
        %4707 = vmatpush2.bf16.msra.mxu0 0
        %4708 = vmatprep.subr.bf16.mxu0 0
        %4709 = vmatpush2.bf16.msra.mxu0 0
        %4710 = vmatprep.subr.bf16.mxu0 0
        %4711 = vmatpush2.bf16.msra.mxu0 0
        %4712 = vmatprep.subr.bf16.mxu0 0
        %4713 = vmatpush2.bf16.msra.mxu0 0
        %4714 = vmatprep.subr.bf16.mxu0 0
        %4715 = vmatpush2.bf16.msra.mxu0 0
        %4716 = vmatprep.mubr.bf16.mxu0 0
        %4717 = vmatmul.mubr.bf16.gmra.mxu0 %v4480
        %v4718 = vpop.f32.mrf.mxu0
        %v4719 = vadd.f32 0.0, %v4718
        %v4720 = vpop.f32.mrf.mxu0
        %v4721 = vpop.f32.mrf.mxu0
        %v4722 = vadd.f32 0.0, %v4721
        %v4723 = vpop.f32.mrf.mxu0
        %4724 = vdwg.mxu0
        %v4725 = vld [vmem:[%s21] sm:$0xff]
        %v4726 = vld [vmem:[%s21 + $0x8] sm:$0xf]
        %v4727 = vld [vmem:[%s21 + $0xc] sm:$0xff]
        %v4728 = vld [vmem:[%s21 + $0x14] sm:$0xf]
        %v4729 = vld [vmem:[%s21 + $0x18] sm:$0xff]
        %v4730 = vld [vmem:[%s21 + $0x20] sm:$0xf]
        %v4731 = vld [vmem:[%s21 + $0x24] sm:$0xff]
        %v4732 = vld [vmem:[%s21 + $0x2c] sm:$0xf]
        %v4733 = vld [vmem:[%s21 + $0x30] sm:$0xff]
        %v4734 = vld [vmem:[%s21 + $0x38] sm:$0xf]
        %v4735 = vld [vmem:[%s21 + $0x3c] sm:$0xff]
        %v4736 = vld [vmem:[%s21 + $0x44] sm:$0xf]
        %v4737 = vld [vmem:[%s21 + $0x48] sm:$0xff]
        %v4738 = vld [vmem:[%s21 + $0x50] sm:$0xf]
        %v4739 = vld [vmem:[%s21 + $0x54] sm:$0xff]
        %v4740 = vld [vmem:[%s21 + $0x5c] sm:$0xf]
        %v4741 = vld [vmem:[%s21 + $0x60] sm:$0xff]
        %v4742 = vld [vmem:[%s21 + $0x68] sm:$0xf]
        %v4743 = vld [vmem:[%s21 + $0x6c] sm:$0xff]
        %v4744 = vld [vmem:[%s21 + $0x74] sm:$0xf]
        %v4745 = vld [vmem:[%s21 + $0x78] sm:$0xff]
        %v4746 = vld [vmem:[%s21 + $0x80] sm:$0xf]
        %v4747 = vld [vmem:[%s21 + $0x84] sm:$0xff]
        %v4748 = vld [vmem:[%s21 + $0x8c] sm:$0xf]
        %v4749 = vld [vmem:[%s21 + $0x90] sm:$0xff]
        %v4750 = vld [vmem:[%s21 + $0x98] sm:$0xf]
        %v4751 = vld [vmem:[%s21 + $0x9c] sm:$0xff]
        %v4752 = vld [vmem:[%s21 + $0xa4] sm:$0xf]
        %v4753 = vld [vmem:[%s21 + $0xa8] sm:$0xff]
        %v4754 = vld [vmem:[%s21 + $0xb0] sm:$0xf]
        %v4755 = vld [vmem:[%s21 + $0xb4] sm:$0xff]
        %v4756 = vld [vmem:[%s21 + $0xbc] sm:$0xf]
        %v4757 = vld [vmem:[#allocation10] sm:$0x7]
        %v4759 = vlaneseq
        %v4760 = vshrl.u32 %v4759, 7
        %v4761 = vsub.s32 0, %v4760
        %v4762 = vrot.slane %v4757, %v4761
        %v4763 = vlaneseq
        %v4764 = vshrl.u32 %v4763, 7
        %v4765 = vsub.s32 1, %v4764
        %v4766 = vrot.slane %v4757, %v4765
        %v4767 = vlaneseq
        %v4768 = vshrl.u32 %v4767, 7
        %v4769 = vsub.s32 2, %v4768
        %v4770 = vrot.slane %v4757, %v4769
        %v4806 = vunpack.c.l.b16 %v4725
        %v4807 = vunpack.c.h.b16 %v4725
        %v4808 = vunpack.c.l.b16 %v4726
        %v4809 = vunpack.c.l.b16 %v4727
        %v4810 = vunpack.c.h.b16 %v4727
        %v4811 = vunpack.c.l.b16 %v4728
        %v4812 = vunpack.c.l.b16 %v4729
        %v4813 = vunpack.c.h.b16 %v4729
        %v4814 = vunpack.c.l.b16 %v4730
        %v4815 = vunpack.c.l.b16 %v4731
        %v4816 = vunpack.c.h.b16 %v4731
        %v4817 = vunpack.c.l.b16 %v4732
        %v4818 = vunpack.c.l.b16 %v4733
        %v4819 = vunpack.c.h.b16 %v4733
        %v4820 = vunpack.c.l.b16 %v4734
        %v4821 = vunpack.c.l.b16 %v4735
        %v4822 = vunpack.c.h.b16 %v4735
        %v4823 = vunpack.c.l.b16 %v4736
        %v4824 = vunpack.c.l.b16 %v4737
        %v4825 = vunpack.c.h.b16 %v4737
        %v4826 = vunpack.c.l.b16 %v4738
        %v4827 = vunpack.c.l.b16 %v4739
        %v4828 = vunpack.c.h.b16 %v4739
        %v4829 = vunpack.c.l.b16 %v4740
        %v4830 = vunpack.c.l.b16 %v4741
        %v4831 = vunpack.c.h.b16 %v4741
        %v4832 = vunpack.c.l.b16 %v4742
        %v4833 = vunpack.c.l.b16 %v4743
        %v4834 = vunpack.c.h.b16 %v4743
        %v4835 = vunpack.c.l.b16 %v4744
        %v4836 = vunpack.c.l.b16 %v4745
        %v4837 = vunpack.c.h.b16 %v4745
        %v4838 = vunpack.c.l.b16 %v4746
        %v4839 = vunpack.c.l.b16 %v4747
        %v4840 = vunpack.c.h.b16 %v4747
        %v4841 = vunpack.c.l.b16 %v4748
        %v4842 = vunpack.c.l.b16 %v4749
        %v4843 = vunpack.c.h.b16 %v4749
        %v4844 = vunpack.c.l.b16 %v4750
        %v4845 = vunpack.c.l.b16 %v4751
        %v4846 = vunpack.c.h.b16 %v4751
        %v4847 = vunpack.c.l.b16 %v4752
        %v4848 = vunpack.c.l.b16 %v4753
        %v4849 = vunpack.c.h.b16 %v4753
        %v4850 = vunpack.c.l.b16 %v4754
        %v4851 = vunpack.c.l.b16 %v4755
        %v4852 = vunpack.c.h.b16 %v4755
        %v4853 = vunpack.c.l.b16 %v4756
        %v4854 = vpack.c.b16 %v4809, %v4806
        %v4855 = vpack.c.b16 %v4810, %v4807
        %v4856 = vpack.c.b16 %v4811, %v4808
        %v4857 = vpack.c.b16 %v4815, %v4812
        %v4858 = vpack.c.b16 %v4816, %v4813
        %v4859 = vpack.c.b16 %v4817, %v4814
        %v4860 = vpack.c.b16 %v4821, %v4818
        %v4861 = vpack.c.b16 %v4822, %v4819
        %v4862 = vpack.c.b16 %v4823, %v4820
        %v4863 = vpack.c.b16 %v4827, %v4824
        %v4864 = vpack.c.b16 %v4828, %v4825
        %v4865 = vpack.c.b16 %v4829, %v4826
        %v4866 = vpack.c.b16 %v4833, %v4830
        %v4867 = vpack.c.b16 %v4834, %v4831
        %v4868 = vpack.c.b16 %v4835, %v4832
        %v4869 = vpack.c.b16 %v4839, %v4836
        %v4870 = vpack.c.b16 %v4840, %v4837
        %v4871 = vpack.c.b16 %v4841, %v4838
        %v4872 = vpack.c.b16 %v4845, %v4842
        %v4873 = vpack.c.b16 %v4846, %v4843
        %v4874 = vpack.c.b16 %v4847, %v4844
        %v4875 = vpack.c.b16 %v4851, %v4848
        %v4876 = vpack.c.b16 %v4852, %v4849
        %v4877 = vpack.c.b16 %v4853, %v4850
        %4902 = vmatprep.subr.bf16.mxu0 %v4876
        %4903 = vmatpush1.bf16.msra.mxu0 %v4875
        %4904 = vmatprep.subr.bf16.mxu0 %v4873
        %4905 = vmatpush1.bf16.msra.mxu0 %v4872
        %4906 = vmatprep.subr.bf16.mxu0 %v4870
        %4907 = vmatpush1.bf16.msra.mxu0 %v4869
        %4908 = vmatprep.subr.bf16.mxu0 %v4867
        %4909 = vmatpush1.bf16.msra.mxu0 %v4866
        %4910 = vmatprep.subr.bf16.mxu0 %v4864
        %4911 = vmatpush1.bf16.msra.mxu0 %v4863
        %4912 = vmatprep.subr.bf16.mxu0 %v4861
        %4913 = vmatpush1.bf16.msra.mxu0 %v4860
        %4914 = vmatprep.subr.bf16.mxu0 %v4858
        %4915 = vmatpush1.bf16.msra.mxu0 %v4857
        %4916 = vmatprep.subr.bf16.mxu0 %v4855
        %4917 = vmatpush1.bf16.msra.mxu0 %v4854
        %4918 = vmatprep.subr.bf16.mxu0 0
        %4919 = vmatpush2.bf16.msra.mxu0 0
        %4920 = vmatprep.subr.bf16.mxu0 0
        %4921 = vmatpush2.bf16.msra.mxu0 0
        %4922 = vmatprep.subr.bf16.mxu0 0
        %4923 = vmatpush2.bf16.msra.mxu0 0
        %4924 = vmatprep.subr.bf16.mxu0 0
        %4925 = vmatpush2.bf16.msra.mxu0 0
        %4926 = vmatprep.subr.bf16.mxu0 0
        %4927 = vmatpush2.bf16.msra.mxu0 0
        %4928 = vmatprep.subr.bf16.mxu0 0
        %4929 = vmatpush2.bf16.msra.mxu0 0
        %4930 = vmatprep.subr.bf16.mxu0 0
        %4931 = vmatpush2.bf16.msra.mxu0 0
        %4932 = vmatprep.subr.bf16.mxu0 0
        %4933 = vmatpush2.bf16.msra.mxu0 0
        %4934 = vmatprep.mubr.bf16.mxu0 0
        %4935 = vmatmul.mubr.bf16.gmra.mxu0 %v4480
        %v4936 = vpop.f32.mrf.mxu0
        %v4937 = vadd.f32 %v4762, %v4936
        %v4938 = vpop.f32.mrf.mxu0
        %v4939 = vadd.f32 %v4766, %v4938
        %v4940 = vpop.f32.mrf.mxu0
        %v4941 = vadd.f32 %v4762, %v4940
        %v4942 = vpop.f32.mrf.mxu0
        %v4943 = vadd.f32 %v4766, %v4942
        %4944 = vdwg.mxu0
        %4945 = vmatprep.subr.bf16.mxu0 0
        %4946 = vmatpush1.bf16.msra.mxu0 %v4877
        %4947 = vmatprep.subr.bf16.mxu0 0
        %4948 = vmatpush1.bf16.msra.mxu0 %v4874
        %4949 = vmatprep.subr.bf16.mxu0 0
        %4950 = vmatpush1.bf16.msra.mxu0 %v4871
        %4951 = vmatprep.subr.bf16.mxu0 0
        %4952 = vmatpush1.bf16.msra.mxu0 %v4868
        %4953 = vmatprep.subr.bf16.mxu0 0
        %4954 = vmatpush1.bf16.msra.mxu0 %v4865
        %4955 = vmatprep.subr.bf16.mxu0 0
        %4956 = vmatpush1.bf16.msra.mxu0 %v4862
        %4957 = vmatprep.subr.bf16.mxu0 0
        %4958 = vmatpush1.bf16.msra.mxu0 %v4859
        %4959 = vmatprep.subr.bf16.mxu0 0
        %4960 = vmatpush1.bf16.msra.mxu0 %v4856
        %4961 = vmatprep.subr.bf16.mxu0 0
        %4962 = vmatpush2.bf16.msra.mxu0 0
        %4963 = vmatprep.subr.bf16.mxu0 0
        %4964 = vmatpush2.bf16.msra.mxu0 0
        %4965 = vmatprep.subr.bf16.mxu0 0
        %4966 = vmatpush2.bf16.msra.mxu0 0
        %4967 = vmatprep.subr.bf16.mxu0 0
        %4968 = vmatpush2.bf16.msra.mxu0 0
        %4969 = vmatprep.subr.bf16.mxu0 0
        %4970 = vmatpush2.bf16.msra.mxu0 0
        %4971 = vmatprep.subr.bf16.mxu0 0
        %4972 = vmatpush2.bf16.msra.mxu0 0
        %4973 = vmatprep.subr.bf16.mxu0 0
        %4974 = vmatpush2.bf16.msra.mxu0 0
        %4975 = vmatprep.subr.bf16.mxu0 0
        %4976 = vmatpush2.bf16.msra.mxu0 0
        %4977 = vmatprep.mubr.bf16.mxu0 0
        %4978 = vmatmul.mubr.bf16.gmra.mxu0 %v4480
        %v4979 = vpop.f32.mrf.mxu0
        %v4980 = vadd.f32 %v4770, %v4979
        %v4981 = vpop.f32.mrf.mxu0
        %v4982 = vpop.f32.mrf.mxu0
        %v4983 = vadd.f32 %v4770, %v4982
        %v4984 = vpop.f32.mrf.mxu0
        %4985 = vdwg.mxu0
        %v4986 = vxor.u32 %v4676, 2147483648
        %v4987 = vxor.u32 %v4678, 2147483648
        %v4988 = vxor.u32 %v4719, 2147483648
        %v4989 = vxor.u32 %v4680, 2147483648
        %v4990 = vxor.u32 %v4682, 2147483648
        %v4991 = vxor.u32 %v4722, 2147483648
        %v4992 = vmul.f32 %v4986, 1.442695
        %v4993 = vpow.pop %v4992
        %v4994 = vmul.f32 %v4987, 1.442695
        %v4995 = vpow.pop %v4994
        %v4996 = vmul.f32 %v4988, 1.442695
        %v4997 = vpow.pop %v4996
        %v4998 = vmul.f32 %v4989, 1.442695
        %v4999 = vpow.pop %v4998
        %v5000 = vmul.f32 %v4990, 1.442695
        %v5001 = vpow.pop %v5000
        %v5002 = vmul.f32 %v4991, 1.442695
        %v5003 = vpow.pop %v5002
        %v5004 = vadd.f32 %v4993, 1.0
        %v5005 = vadd.f32 %v4995, 1.0
        %v5006 = vadd.f32 %v4997, 1.0
        %v5007 = vadd.f32 %v4999, 1.0
        %v5008 = vadd.f32 %v5001, 1.0
        %v5009 = vadd.f32 %v5003, 1.0
        %v5010 = vrcp.pop %v5004
        %v5011 = vmul.f32 1.0, %v5010
        %v5012 = vrcp.pop %v5005
        %v5013 = vmul.f32 1.0, %v5012
        %v5014 = vrcp.pop %v5006
        %v5015 = vmul.f32 1.0, %v5014
        %v5016 = vrcp.pop %v5007
        %v5017 = vmul.f32 1.0, %v5016
        %v5018 = vrcp.pop %v5008
        %v5019 = vmul.f32 1.0, %v5018
        %v5020 = vrcp.pop %v5009
        %v5021 = vmul.f32 1.0, %v5020
        %v5022 = vmul.f32 %v4676, %v5011
        %v5023 = vmul.f32 %v4678, %v5013
        %v5024 = vmul.f32 %v4719, %v5015
        %v5025 = vmul.f32 %v4680, %v5017
        %v5026 = vmul.f32 %v4682, %v5019
        %v5027 = vmul.f32 %v4722, %v5021
        %v5028 = vmul.f32 %v5022, %v4937
        %v5029 = vmul.f32 %v5023, %v4939
        %v5030 = vmul.f32 %v5024, %v4980
        %v5031 = vmul.f32 %v5025, %v4941
        %v5032 = vmul.f32 %v5026, %v4943
        %v5033 = vmul.f32 %v5027, %v4983
        %v5034 = vpack.c.bf16 %v5031, %v5028
        %v5035 = vpack.c.bf16 %v5032, %v5029
        %v5036 = vpack.c.bf16 %v5033, %v5030
        %v5037 = vld [vmem:[%s23] sm:$0xf]
        %v5038 = vld [vmem:[%s23 + $0x4] sm:$0xf]
        %v5039 = vld [vmem:[%s23 + $0x8] sm:$0xf]
        %v5040 = vld [vmem:[%s23 + $0xc] sm:$0xf]
        %v5041 = vld [vmem:[%s23 + $0x10] sm:$0xf]
        %v5042 = vld [vmem:[%s23 + $0x14] sm:$0xf]
        %v5043 = vld [vmem:[%s23 + $0x18] sm:$0xf]
        %v5044 = vld [vmem:[%s23 + $0x1c] sm:$0xf]
        %v5045 = vld [vmem:[%s23 + $0x20] sm:$0xf]
        %v5046 = vld [vmem:[%s23 + $0x24] sm:$0xf]
        %v5047 = vld [vmem:[%s23 + $0x28] sm:$0xf]
        %v5048 = vld [vmem:[%s23 + $0x2c] sm:$0xf]
        %v5049 = vld [vmem:[%s23 + $0x30] sm:$0xf]
        %v5050 = vld [vmem:[%s23 + $0x34] sm:$0xf]
        %v5051 = vld [vmem:[%s23 + $0x38] sm:$0xf]
        %v5052 = vld [vmem:[%s23 + $0x3c] sm:$0xf]
        %v5053 = vld [vmem:[%s23 + $0x40] sm:$0xf]
        %v5054 = vld [vmem:[%s23 + $0x44] sm:$0xf]
        %v5055 = vld [vmem:[%s23 + $0x48] sm:$0xf]
        %v5056 = vld [vmem:[%s23 + $0x4c] sm:$0xf]
        %v5057 = vld [vmem:[%s23 + $0x50] sm:$0xf]
        %v5058 = vld [vmem:[%s23 + $0x54] sm:$0xf]
        %v5059 = vld [vmem:[%s23 + $0x58] sm:$0xf]
        %v5060 = vld [vmem:[%s23 + $0x5c] sm:$0xf]
        %v5061 = vld [vmem:[%s23 + $0x60] sm:$0xf]
        %v5062 = vld [vmem:[%s23 + $0x64] sm:$0xf]
        %v5063 = vld [vmem:[%s23 + $0x68] sm:$0xf]
        %v5064 = vld [vmem:[%s23 + $0x6c] sm:$0xf]
        %v5065 = vld [vmem:[%s23 + $0x70] sm:$0xf]
        %v5066 = vld [vmem:[%s23 + $0x74] sm:$0xf]
        %v5067 = vld [vmem:[%s23 + $0x78] sm:$0xf]
        %v5068 = vld [vmem:[%s23 + $0x7c] sm:$0xf]
        %v5069 = vld [vmem:[%s23 + $0x80] sm:$0xf]
        %v5070 = vld [vmem:[%s23 + $0x84] sm:$0xf]
        %v5071 = vld [vmem:[%s23 + $0x88] sm:$0xf]
        %v5072 = vld [vmem:[%s23 + $0x8c] sm:$0xf]
        %v5073 = vld [vmem:[%s23 + $0x90] sm:$0xf]
        %v5074 = vld [vmem:[%s23 + $0x94] sm:$0xf]
        %v5075 = vld [vmem:[%s23 + $0x98] sm:$0xf]
        %v5076 = vld [vmem:[%s23 + $0x9c] sm:$0xf]
        %v5077 = vld [vmem:[%s23 + $0xa0] sm:$0xf]
        %v5078 = vld [vmem:[%s23 + $0xa4] sm:$0xf]
        %v5079 = vld [vmem:[%s23 + $0xa8] sm:$0xf]
        %v5080 = vld [vmem:[%s23 + $0xac] sm:$0xf]
        %v5125 = vunpack.c.l.b16 %v5037
        %v5126 = vunpack.c.l.b16 %v5038
        %v5127 = vunpack.c.l.b16 %v5039
        %v5128 = vunpack.c.l.b16 %v5040
        %v5129 = vunpack.c.l.b16 %v5041
        %v5130 = vunpack.c.l.b16 %v5042
        %v5131 = vunpack.c.l.b16 %v5043
        %v5132 = vunpack.c.l.b16 %v5044
        %v5133 = vunpack.c.l.b16 %v5045
        %v5134 = vunpack.c.l.b16 %v5046
        %v5135 = vunpack.c.l.b16 %v5047
        %v5136 = vunpack.c.l.b16 %v5048
        %v5137 = vunpack.c.l.b16 %v5049
        %v5138 = vunpack.c.l.b16 %v5050
        %v5139 = vunpack.c.l.b16 %v5051
        %v5140 = vunpack.c.l.b16 %v5052
        %v5141 = vunpack.c.l.b16 %v5053
        %v5142 = vunpack.c.l.b16 %v5054
        %v5143 = vunpack.c.l.b16 %v5055
        %v5144 = vunpack.c.l.b16 %v5056
        %v5145 = vunpack.c.l.b16 %v5057
        %v5146 = vunpack.c.l.b16 %v5058
        %v5147 = vunpack.c.l.b16 %v5059
        %v5148 = vunpack.c.l.b16 %v5060
        %v5149 = vunpack.c.l.b16 %v5061
        %v5150 = vunpack.c.l.b16 %v5062
        %v5151 = vunpack.c.l.b16 %v5063
        %v5152 = vunpack.c.l.b16 %v5064
        %v5153 = vunpack.c.l.b16 %v5065
        %v5154 = vunpack.c.l.b16 %v5066
        %v5155 = vunpack.c.l.b16 %v5067
        %v5156 = vunpack.c.l.b16 %v5068
        %v5157 = vunpack.c.l.b16 %v5069
        %v5158 = vunpack.c.l.b16 %v5070
        %v5159 = vunpack.c.l.b16 %v5071
        %v5160 = vunpack.c.l.b16 %v5072
        %v5161 = vunpack.c.l.b16 %v5073
        %v5162 = vunpack.c.l.b16 %v5074
        %v5163 = vunpack.c.l.b16 %v5075
        %v5164 = vunpack.c.l.b16 %v5076
        %v5165 = vunpack.c.l.b16 %v5077
        %v5166 = vunpack.c.l.b16 %v5078
        %v5167 = vunpack.c.l.b16 %v5079
        %v5168 = vunpack.c.l.b16 %v5080
        %v5169 = vpack.c.b16 %v5126, %v5125
        %v5170 = vpack.c.b16 %v5128, %v5127
        %v5171 = vpack.c.b16 %v5130, %v5129
        %v5172 = vpack.c.b16 %v5132, %v5131
        %v5173 = vpack.c.b16 %v5134, %v5133
        %v5174 = vpack.c.b16 %v5136, %v5135
        %v5175 = vpack.c.b16 %v5138, %v5137
        %v5176 = vpack.c.b16 %v5140, %v5139
        %v5177 = vpack.c.b16 %v5142, %v5141
        %v5178 = vpack.c.b16 %v5144, %v5143
        %v5179 = vpack.c.b16 %v5146, %v5145
        %v5180 = vpack.c.b16 %v5148, %v5147
        %v5181 = vpack.c.b16 %v5150, %v5149
        %v5182 = vpack.c.b16 %v5152, %v5151
        %v5183 = vpack.c.b16 %v5154, %v5153
        %v5184 = vpack.c.b16 %v5156, %v5155
        %v5185 = vpack.c.b16 %v5158, %v5157
        %v5186 = vpack.c.b16 %v5160, %v5159
        %v5187 = vpack.c.b16 %v5162, %v5161
        %v5188 = vpack.c.b16 %v5164, %v5163
        %v5189 = vpack.c.b16 %v5166, %v5165
        %v5190 = vpack.c.b16 %v5168, %v5167
        %v5214 = vsel %vm2236, %v5036, 0
        %5216 = vmatprep.subr.bf16.mxu0 0
        %5217 = vmatpush1.bf16.msra.mxu0 %v5176
        %5218 = vmatprep.subr.bf16.mxu0 0
        %5219 = vmatpush1.bf16.msra.mxu0 %v5175
        %5220 = vmatprep.subr.bf16.mxu0 0
        %5221 = vmatpush1.bf16.msra.mxu0 %v5174
        %5222 = vmatprep.subr.bf16.mxu0 0
        %5223 = vmatpush1.bf16.msra.mxu0 %v5173
        %5224 = vmatprep.subr.bf16.mxu0 0
        %5225 = vmatpush1.bf16.msra.mxu0 %v5172
        %5226 = vmatprep.subr.bf16.mxu0 0
        %5227 = vmatpush1.bf16.msra.mxu0 %v5171
        %5228 = vmatprep.subr.bf16.mxu0 0
        %5229 = vmatpush1.bf16.msra.mxu0 %v5170
        %5230 = vmatprep.subr.bf16.mxu0 0
        %5231 = vmatpush1.bf16.msra.mxu0 %v5169
        %5232 = vmatprep.subr.bf16.mxu0 0
        %5233 = vmatpush2.bf16.msra.mxu0 %v5184
        %5234 = vmatprep.subr.bf16.mxu0 0
        %5235 = vmatpush2.bf16.msra.mxu0 %v5183
        %5236 = vmatprep.subr.bf16.mxu0 0
        %5237 = vmatpush2.bf16.msra.mxu0 %v5182
        %5238 = vmatprep.subr.bf16.mxu0 0
        %5239 = vmatpush2.bf16.msra.mxu0 %v5181
        %5240 = vmatprep.subr.bf16.mxu0 0
        %5241 = vmatpush2.bf16.msra.mxu0 %v5180
        %5242 = vmatprep.subr.bf16.mxu0 0
        %5243 = vmatpush2.bf16.msra.mxu0 %v5179
        %5244 = vmatprep.subr.bf16.mxu0 0
        %5245 = vmatpush2.bf16.msra.mxu0 %v5178
        %5246 = vmatprep.subr.bf16.mxu0 0
        %5247 = vmatpush2.bf16.msra.mxu0 %v5177
        %5248 = vmatprep.mubr.bf16.mxu0 %v5035
        %5249 = vmatmul.mubr.bf16.gmra.mxu0 %v5034
        %v5250 = vpop.f32.mrf.mxu0
        %v5251 = vadd.f32 0.0, %v5250
        %v5252 = vpop.f32.mrf.mxu0
        %v5253 = vpop.f32.mrf.mxu0
        %v5254 = vadd.f32 0.0, %v5253
        %v5255 = vpop.f32.mrf.mxu0
        %5256 = vdwg.mxu0
        %5257 = vmatprep.subr.bf16.mxu0 0
        %5258 = vmatpush1.bf16.msra.mxu0 0
        %5259 = vmatprep.subr.bf16.mxu0 0
        %5260 = vmatpush1.bf16.msra.mxu0 0
        %5261 = vmatprep.subr.bf16.mxu0 0
        %5262 = vmatpush1.bf16.msra.mxu0 %v5190
        %5263 = vmatprep.subr.bf16.mxu0 0
        %5264 = vmatpush1.bf16.msra.mxu0 %v5189
        %5265 = vmatprep.subr.bf16.mxu0 0
        %5266 = vmatpush1.bf16.msra.mxu0 %v5188
        %5267 = vmatprep.subr.bf16.mxu0 0
        %5268 = vmatpush1.bf16.msra.mxu0 %v5187
        %5269 = vmatprep.subr.bf16.mxu0 0
        %5270 = vmatpush1.bf16.msra.mxu0 %v5186
        %5271 = vmatprep.subr.bf16.mxu0 0
        %5272 = vmatpush1.bf16.msra.mxu0 %v5185
        %5273 = vmatprep.subr.bf16.mxu0 0
        %5274 = vmatpush2.bf16.msra.mxu0 0
        %5275 = vmatprep.subr.bf16.mxu0 0
        %5276 = vmatpush2.bf16.msra.mxu0 0
        %5277 = vmatprep.subr.bf16.mxu0 0
        %5278 = vmatpush2.bf16.msra.mxu0 0
        %5279 = vmatprep.subr.bf16.mxu0 0
        %5280 = vmatpush2.bf16.msra.mxu0 0
        %5281 = vmatprep.subr.bf16.mxu0 0
        %5282 = vmatpush2.bf16.msra.mxu0 0
        %5283 = vmatprep.subr.bf16.mxu0 0
        %5284 = vmatpush2.bf16.msra.mxu0 0
        %5285 = vmatprep.subr.bf16.mxu0 0
        %5286 = vmatpush2.bf16.msra.mxu0 0
        %5287 = vmatprep.subr.bf16.mxu0 0
        %5288 = vmatpush2.bf16.msra.mxu0 0
        %5289 = vmatprep.mubr.bf16.mxu0 0
        %5290 = vmatmul.mubr.bf16.gmra.mxu0 %v5214
        %v5291 = vpop.f32.mrf.mxu0
        %v5292 = vadd.f32 %v5251, %v5291
        %v5293 = vpop.f32.mrf.mxu0
        %v5294 = vpop.f32.mrf.mxu0
        %v5295 = vadd.f32 %v5254, %v5294
        %v5296 = vpop.f32.mrf.mxu0
        %5297 = vdwg.mxu0
        %v5298 = vadd.f32 %v4455, %v5292
        %v5299 = vadd.f32 %v4456, %v5295
        %v5300 = vld [vmem:[#allocation12] sm:$0x1]
        %v5302 = vlaneseq
        %v5303 = vshrl.u32 %v5302, 7
        %v5304 = vsub.s32 0, %v5303
        %v5305 = vrot.slane %v5300, %v5304
        %v5307 = vadd.f32 %v5298, %v5305
        %v5308 = vadd.f32 %v5299, %v5305
        %5309 = vst [vmem:[%s852] sm:$0xff] %v5307
        %5310 = vst [vmem:[%s852 + $0x8] sm:$0xff] %v5308
        %p5311 = scmp.lt.s32.totalorder %s40, 1
        %s5312 = scalar_select %p5311, %s40, 1
        %s5313 = smul.addr %s5312, 2
        %s5314 = smul.addr %s5313, 8
        %s5315 = scalar_lea.vmem %s25, %s5314
        // Predicated region
        $region149: #{transformer_forward.1} parent=119 // pred_check
          %p5316 = pneg %p588
        $region150: #{transformer_forward.1} parent=119 // pred_check_branch
          %5318 = sbr.rel (%p5316) target = $region152
        $region151: #{transformer_forward.1} parent=119 // pred_region
          _
        $region152: #{transformer_forward.1} parent=119 // pred_fallthru
          _
      $region120: #{transformer_forward.1} parent=5 // pred_fallthru
        _
      %p5319 = scmp.le.s32.totalorder 2, %s35
      // Predicated region
      $region153: #{transformer_forward.1} parent=5 // pred_check
        %p5320 = pneg %p5319
      $region154: #{transformer_forward.1} parent=5 // pred_check_branch
        %5322 = sbr.rel (%p5320) target = $region156
      $region155: #{transformer_forward.1} parent=5 // pred_region
        %s5323 = ssub.s32 %s35, 2
        // Predicated region
        $region157: #{transformer_forward.1} parent=155 // pred_check
          %p5324 = pneg %p594
        $region158: #{transformer_forward.1} parent=155 // pred_check_branch
          %5326 = sbr.rel (%p5324) target = $region160
        $region159: #{transformer_forward.1} parent=155 // pred_region
          %p5327 = scmp.lt.s32.totalorder %s41, 1
          %s5328 = scalar_select %p5327, %s41, 1
          %s5329 = smul.addr %s5328, 2
          %s5330 = smul.addr %s5329, 8
          %s5331 = scalar_lea.vmem %s25, %s5330
        $region160: #{transformer_forward.1} parent=155 // pred_fallthru
          _
      $region156: #{transformer_forward.1} parent=5 // pred_fallthru
        _
    $region6: #{transformer_forward.1} parent=1 // loop_footer
      %s39 = sadd.s32 1, %s35
    $region7: #{transformer_forward.1} parent=1 // loop_footer_branch
      %34 = sbr.rel target = $region3
    $region8: #{transformer_forward.1} parent=1 // loop_exit
      _
    %5332 = vsyncpa [#allocation3], 1
    %s5333 = scalar_lea.sflag [#allocation3], 1
    %5334 = vsyncpa %s5333, 1
    %5335 = vsyncpa [#allocation5], 1
    %5336 = vsyncpa [#allocation8], 1
    %5337 = vsyncpa [#allocation11], 1

</llo_original>
